<compile_context>
chip_gen: v7x
topology: tpu7x:2x2x1
jax: 0.10.0
libtpu: 0.0.40
codegen_flags: <defaults>
</compile_context>

<pallas_src>
import functools

import jax
import jax.numpy as jnp
from jax import lax
from jax.experimental import pallas as pl
from jax.experimental.pallas import tpu as pltpu


# ----------------------------------------------------------------------------
# Pallas kernel: fused bidirectional LSTM recurrence over a block of TS steps.
# Grid = (T_pad // TS,), iterated sequentially ("arbitrary"); the fused
# (Bp, 2H) hidden/cell state lives in VMEM scratch across grid steps.
# ----------------------------------------------------------------------------
def _bilstm_rec_kernel(g_ref, m_ref, whh_ref, h0_ref, c0_ref,
                       y_ref, hn_ref, cn_ref, h_scr, c_scr,
                       *, hidden, steps):
    tb = pl.program_id(0)

    @pl.when(tb == 0)
    def _():
        h_scr[...] = h0_ref[...]
        c_scr[...] = c0_ref[...]

    H2 = 2 * hidden
    w = whh_ref[...]                       # (2H, 8H) bf16, block-diagonal

    def step(s, carry):
        h = h_scr[...]                     # (Bp, 2H) f32  [h_fw || h_bw]
        c = c_scr[...]
        # One MXU dot drives both directions; input projection + bias were
        # precomputed (hoisted) into g_ref.
        gates = g_ref[s] + jnp.dot(h.astype(jnp.bfloat16), w,
                                   preferred_element_type=jnp.float32)
        i_g = jax.nn.sigmoid(gates[:, 0 * H2:1 * H2])
        f_g = jax.nn.sigmoid(gates[:, 1 * H2:2 * H2])
        g_g = jnp.tanh(gates[:, 2 * H2:3 * H2])
        o_g = jax.nn.sigmoid(gates[:, 3 * H2:4 * H2])
        c_new = f_g * c + i_g * g_g
        h_new = o_g * jnp.tanh(c_new)
        valid = m_ref[s] > 0.5             # (Bp, 2H); fw/bw halves differ
        h_scr[...] = jnp.where(valid, h_new, h)
        c_scr[...] = jnp.where(valid, c_new, c)
        y_ref[s] = jnp.where(valid, h_new, 0.0)   # padded positions -> 0
        return carry

    lax.fori_loop(0, steps, step, 0, unroll=True)

    @pl.when(tb == pl.num_programs(0) - 1)
    def _():
        hn_ref[...] = h_scr[...]
        cn_ref[...] = c_scr[...]


# ----------------------------------------------------------------------------
# Wrapper-side weight / gate / mask preparation (hoisted, one-time work).
# ----------------------------------------------------------------------------
def _combine_whh(w_hh_fw, w_hh_bw):
    """Block-diagonal recurrent weight (2H, 8H); columns gate-major and
    direction-adjacent: [i_f, i_b, f_f, f_b, g_f, g_b, o_f, o_b]."""
    H = w_hh_fw.shape[0]
    wf = w_hh_fw.reshape(H, 4, H)
    wb = w_hh_bw.reshape(H, 4, H)
    comb = jnp.zeros((2 * H, 4, 2, H), jnp.float32)
    comb = comb.at[:H, :, 0, :].set(wf)
    comb = comb.at[H:, :, 1, :].set(wb)
    return comb.reshape(2 * H, 8 * H)


def _input_gates(x, params, hidden):
    """Hoisted input projection for both directions: (T, B, 8H) f32, columns
    matching _combine_whh.  The backward half is already time-reversed so the
    kernel only sweeps time forward."""
    T, B, _ = x.shape
    w_ih_f, _, b_f = params["fw"]
    w_ih_b, _, b_b = params["bw"]
    xb = x.astype(jnp.bfloat16)
    pf = jnp.einsum("tbd,dk->tbk", xb, w_ih_f.astype(jnp.bfloat16),
                    preferred_element_type=jnp.float32) + b_f
    pb = jnp.einsum("tbd,dk->tbk", xb[::-1], w_ih_b.astype(jnp.bfloat16),
                    preferred_element_type=jnp.float32) + b_b
    g = jnp.concatenate([pf.reshape(T, B, 4, 1, hidden),
                         pb.reshape(T, B, 4, 1, hidden)],
                        axis=3).reshape(T, B, 8 * hidden)
    return g


def _valid_masks(lengths, T, T_pad, B, hidden):
    """(T_pad, B, 2H) validity mask; fw half masks t < len, bw half masks the
    time-reversed index (T-1-t) < len.  Padded time steps / batch rows -> 0."""
    t = jnp.arange(T_pad)[:, None]                  # (T_pad, 1)
    lens = lengths.astype(jnp.int32)[None, :]       # (1, B)
    v_fw = (t < T) & (t < lens)
    t_bw = T - 1 - t
    v_bw = (t_bw >= 0) & (t_bw < lens)
    m = jnp.concatenate(
        [jnp.broadcast_to(v_fw[..., None], (T_pad, B, hidden)),
         jnp.broadcast_to(v_bw[..., None], (T_pad, B, hidden))], axis=-1)
    return m.astype(jnp.float32)


def bilstm(x, lengths, params, h0, c0, *, time_block=8):
    """Fused bidirectional LSTM.  x:(T,B,D); h0/c0:(2,B,H) (PyTorch direction
    order).  Returns y:(T,B,2H), hn:(2,B,H), cn:(2,B,H)."""
    T, B, _ = x.shape
    H = h0.shape[-1]

    # Pad batch to a multiple of 8 sublanes (padded rows have length 0).
    Bp = -(-B // 8) * 8
    if Bp != B:
        x = jnp.pad(x, ((0, 0), (0, Bp - B), (0, 0)))
        lengths = jnp.pad(lengths, (0, Bp - B))
        h0 = jnp.pad(h0, ((0, 0), (0, Bp - B), (0, 0)))
        c0 = jnp.pad(c0, ((0, 0), (0, Bp - B), (0, 0)))

    # Pad time to a multiple of the per-grid-step block (padded steps masked).
    TS = time_block
    T_pad = -(-T // TS) * TS

    g = _input_gates(x, params, H)                       # (T, Bp, 8H)
    if T_pad != T:
        g = jnp.pad(g, ((0, T_pad - T), (0, 0), (0, 0)))
    m = _valid_masks(lengths, T, T_pad, Bp, H)           # (T_pad, Bp, 2H)
    w_hh = _combine_whh(params["fw"][1], params["bw"][1]).astype(jnp.bfloat16)
    h0c = jnp.concatenate([h0[0], h0[1]], axis=-1).astype(jnp.float32)
    c0c = jnp.concatenate([c0[0], c0[1]], axis=-1).astype(jnp.float32)

    kernel = functools.partial(_bilstm_rec_kernel, hidden=H, steps=TS)
    y, hn, cn = pl.pallas_call(
        kernel,
        out_shape=(
            jax.ShapeDtypeStruct((T_pad, Bp, 2 * H), jnp.float32),
            jax.ShapeDtypeStruct((Bp, 2 * H), jnp.float32),
            jax.ShapeDtypeStruct((Bp, 2 * H), jnp.float32),
        ),
        grid_spec=pltpu.PrefetchScalarGridSpec(
            num_scalar_prefetch=0,
            grid=(T_pad // TS,),
            in_specs=[
                pl.BlockSpec((TS, Bp, 8 * H), lambda t: (t, 0, 0)),  # gates
                pl.BlockSpec((TS, Bp, 2 * H), lambda t: (t, 0, 0)),  # mask
                pl.BlockSpec((2 * H, 8 * H), lambda t: (0, 0)),      # W_hh
                pl.BlockSpec((Bp, 2 * H), lambda t: (0, 0)),         # h0
                pl.BlockSpec((Bp, 2 * H), lambda t: (0, 0)),         # c0
            ],
            out_specs=[
                pl.BlockSpec((TS, Bp, 2 * H), lambda t: (t, 0, 0)),  # y
                pl.BlockSpec((Bp, 2 * H), lambda t: (0, 0)),         # h_n
                pl.BlockSpec((Bp, 2 * H), lambda t: (0, 0)),         # c_n
            ],
            scratch_shapes=[
                pltpu.VMEM((Bp, 2 * H), jnp.float32),
                pltpu.VMEM((Bp, 2 * H), jnp.float32),
            ],
        ),
        compiler_params=pltpu.CompilerParams(
            dimension_semantics=("arbitrary",)),
    )(g, m, w_hh, h0c, c0c)

    # Un-fuse directions and drop padding.
    y_fw = y[:T, :B, :H]
    y_bw = y[:T, :B, H:][::-1]            # bw half was computed time-reversed
    out = jnp.concatenate([y_fw, y_bw], axis=-1)
    hn2 = jnp.stack([hn[:B, :H], hn[:B, H:]], axis=0)
    cn2 = jnp.stack([cn[:B, :H], cn[:B, H:]], axis=0)
    return out, hn2, cn2


def bicond_lstm_forward(txt_e, top_e, top_l, txt_l, params, hidden_dim):
    """Mirrors BiCondLSTMLayer.forward."""
    B = top_e.shape[1]
    h0 = jnp.zeros((2, B, hidden_dim), jnp.float32)
    c0 = jnp.zeros((2, B, hidden_dim), jnp.float32)

    padded_topic_output, last_top_hn, last_top_cn = bilstm(
        top_e, top_l, params["topic"], h0, c0)

    padded_output, txt_last_hn, _ = bilstm(
        txt_e, txt_l, params["text"], last_top_hn, last_top_cn)

    txt_fw_bw_hn = jnp.transpose(txt_last_hn, (1, 0, 2)).reshape(
        B, 2 * hidden_dim)

    return padded_output, txt_fw_bw_hn, last_top_hn, padded_topic_output


# ----------------------------------------------------------------------------
# Pure-JAX reference (lax.scan) with the same bf16-matmul / f32-state recipe,
# for correctness checking of the kernel logic.
# ----------------------------------------------------------------------------
def _lstm_dir_ref(x, lengths, w_ih, w_hh, b, h0, c0, reverse):
    T, B, _ = x.shape
    H = h0.shape[-1]
    ts = jnp.arange(T)
    if reverse:
        ts = ts[::-1]
    w_ih_b = w_ih.astype(jnp.bfloat16)
    w_hh_b = w_hh.astype(jnp.bfloat16)

    def step(carry, time):
        h, c = carry
        gates = (jnp.dot(x[time].astype(jnp.bfloat16), w_ih_b,
                         preferred_element_type=jnp.float32)
                 + jnp.dot(h.astype(jnp.bfloat16), w_hh_b,
                           preferred_element_type=jnp.float32)
                 + b[None, :])
        i_g = jax.nn.sigmoid(gates[:, 0 * H:1 * H])
        f_g = jax.nn.sigmoid(gates[:, 1 * H:2 * H])
        g_g = jnp.tanh(gates[:, 2 * H:3 * H])
        o_g = jax.nn.sigmoid(gates[:, 3 * H:4 * H])
        c_new = f_g * c + i_g * g_g
        h_new = o_g * jnp.tanh(c_new)
        valid = (time < lengths)[:, None]
        h = jnp.where(valid, h_new, h)
        c = jnp.where(valid, c_new, c)
        y = jnp.where(valid, h_new, 0.0)
        return (h, c), y

    (hn, cn), ys = lax.scan(step, (h0, c0), ts)
    y = ys[::-1] if reverse else ys
    return y, hn, cn


def _bicond_ref(txt_e, top_e, top_l, txt_l, params, hidden_dim):
    B = top_e.shape[1]
    z = jnp.zeros((B, hidden_dim), jnp.float32)

    def bi(x, lens, p, h0, c0):
        yf, hf, cf = _lstm_dir_ref(x, lens, *p["fw"], h0[0], c0[0], False)
        yb, hb, cb = _lstm_dir_ref(x, lens, *p["bw"], h0[1], c0[1], True)
        return (jnp.concatenate([yf, yb], -1),
                jnp.stack([hf, hb]), jnp.stack([cf, cb]))

    top_y, top_hn, top_cn = bi(top_e, top_l, params["topic"],
                               jnp.stack([z, z]), jnp.stack([z, z]))
    txt_y, txt_hn, _ = bi(txt_e, txt_l, params["text"], top_hn, top_cn)
    fwbw = jnp.transpose(txt_hn, (1, 0, 2)).reshape(B, 2 * hidden_dim)
    return txt_y, fwbw, top_hn, top_y


# ----------------------------------------------------------------------------
# Deterministic parameter init (PyTorch LSTM: U(-1/sqrt(H), 1/sqrt(H))).
# ----------------------------------------------------------------------------
def init_lstm_params(key, in_dim, hidden):
    k = 1.0 / jnp.sqrt(jnp.float32(hidden))
    keys = jax.random.split(key, 8)

    def u(kk, shape):
        return jax.random.uniform(kk, shape, jnp.float32, -k, k)

    def direction(ks):
        w_ih = u(ks[0], (in_dim, 4 * hidden))
        w_hh = u(ks[1], (hidden, 4 * hidden))
        b = u(ks[2], (4 * hidden,)) + u(ks[3], (4 * hidden,))  # b_ih + b_hh
        return (w_ih, w_hh, b)

    return {"fw": direction(keys[:4]), "bw": direction(keys[4:])}


if __name__ == "__main__":
    B = 2
    hidden_dim = 32
    embed_dim = 16    # text embedding dim
    input_dim = 16    # topic embedding dim
    T_txt = 8
    T_top = 6

    key = jax.random.PRNGKey(0)
    k_txt, k_top, k_ptop, k_ptxt = jax.random.split(key, 4)

    # Inputs: time-major (T, B, D), like torch.nn.LSTM default.
    txt_e = jax.random.normal(k_txt, (T_txt, B, embed_dim), jnp.float32)
    top_e = jax.random.normal(k_top, (T_top, B, input_dim), jnp.float32)
    txt_l = jnp.array([T_txt, 5], dtype=jnp.int32)   # variable lengths
    top_l = jnp.array([T_top, 4], dtype=jnp.int32)

    params = {
        "topic": init_lstm_params(k_ptop, input_dim, hidden_dim),
        "text": init_lstm_params(k_ptxt, embed_dim, hidden_dim),
    }

    fwd = jax.jit(functools.partial(bicond_lstm_forward,
                                    hidden_dim=hidden_dim))
    outs = fwd(txt_e, top_e, top_l, txt_l, params)
    outs = jax.block_until_ready(outs)
    padded_output, txt_fw_bw_hn, last_top_hn, padded_topic_output = outs

    # Shape checks (match PyTorch module's return contract).
    assert padded_output.shape == (T_txt, B, 2 * hidden_dim)
    assert txt_fw_bw_hn.shape == (B, 2 * hidden_dim)
    assert last_top_hn.shape == (2, B, hidden_dim)
    assert padded_topic_output.shape == (T_top, B, 2 * hidden_dim)

    # Numerical check against pure-JAX reference (same bf16/f32 recipe).
    ref = _bicond_ref(txt_e, top_e, top_l, txt_l, params, hidden_dim)
    for got, want in zip(outs, ref):
        assert jnp.allclose(got, want, atol=2e-3, rtol=2e-3), "mismatch vs ref"

    print("KERNEL_OK")
</pallas_src>

<mosaic_0001>
module attributes {stable_mosaic.version = 11 : i64} {
  func.func @_bilstm_rec_kernel(%arg0: i32, %arg1: memref<8x8x256xf32, #tpu.memory_space<vmem>>, %arg2: memref<8x8x64xf32, #tpu.memory_space<vmem>>, %arg3: memref<64x256xbf16, #tpu.memory_space<vmem>>, %arg4: memref<8x64xf32, #tpu.memory_space<vmem>>, %arg5: memref<8x64xf32, #tpu.memory_space<vmem>>, %arg6: memref<8x8x64xf32, #tpu.memory_space<vmem>>, %arg7: memref<8x64xf32, #tpu.memory_space<vmem>>, %arg8: memref<8x64xf32, #tpu.memory_space<vmem>>, %arg9: memref<8x64xf32, #tpu.memory_space<vmem>>, %arg10: memref<8x64xf32, #tpu.memory_space<vmem>>) attributes {dimension_semantics = [#tpu.dimension_semantics<arbitrary>], iteration_bounds = array<i64: 1>, scalar_prefetch = 0 : i64, scratch_operands = 2 : i64, tpu.core_type = #tpu.core_type<tc>, window_params = [{transform_indices = @transform_0, window_bounds = array<i64: 8, 8, 256>}, {transform_indices = @transform_1, window_bounds = array<i64: 8, 8, 64>}, {pipeline_mode = #tpu.pipeline_mode<synchronous>, transform_indices = @transform_2, window_bounds = array<i64: 64, 256>}, {pipeline_mode = #tpu.pipeline_mode<synchronous>, transform_indices = @transform_3, window_bounds = array<i64: 8, 64>}, {pipeline_mode = #tpu.pipeline_mode<synchronous>, transform_indices = @transform_4, window_bounds = array<i64: 8, 64>}, {transform_indices = @transform_5, window_bounds = array<i64: 8, 8, 64>}, {pipeline_mode = #tpu.pipeline_mode<synchronous>, transform_indices = @transform_6, window_bounds = array<i64: 8, 64>}, {pipeline_mode = #tpu.pipeline_mode<synchronous>, transform_indices = @transform_7, window_bounds = array<i64: 8, 64>}]} {
    %c0_i32 = arith.constant 0 : i32
    %0 = arith.cmpi eq, %arg0, %c0_i32 : i32
    %1 = arith.extui %0 : i1 to i32
    %c0_i32_0 = arith.constant 0 : i32
    %2 = arith.cmpi ne, %1, %c0_i32_0 : i32
    scf.if %2 {
      %c0_164 = arith.constant 0 : index
      %c0_165 = arith.constant 0 : index
      %391 = vector.load %arg4[%c0_164, %c0_165] : memref<8x64xf32, #tpu.memory_space<vmem>>, vector<8x64xf32>
      %c0_166 = arith.constant 0 : index
      %c0_167 = arith.constant 0 : index
      %392 = vector.load %arg9[%c0_166, %c0_167] : memref<8x64xf32, #tpu.memory_space<vmem>>, vector<8x64xf32>
      tpu.vector_store %arg9[%c0_166, %c0_167], %391 {strides = array<i32>} : memref<8x64xf32, #tpu.memory_space<vmem>>, vector<8x64xf32>,
      %c0_168 = arith.constant 0 : index
      %c0_169 = arith.constant 0 : index
      %393 = vector.load %arg5[%c0_168, %c0_169] : memref<8x64xf32, #tpu.memory_space<vmem>>, vector<8x64xf32>
      %c0_170 = arith.constant 0 : index
      %c0_171 = arith.constant 0 : index
      %394 = vector.load %arg10[%c0_170, %c0_171] : memref<8x64xf32, #tpu.memory_space<vmem>>, vector<8x64xf32>
      tpu.vector_store %arg10[%c0_170, %c0_171], %393 {strides = array<i32>} : memref<8x64xf32, #tpu.memory_space<vmem>>, vector<8x64xf32>,
    } else {
    }
    %c0 = arith.constant 0 : index
    %c0_1 = arith.constant 0 : index
    %3 = vector.load %arg3[%c0, %c0_1] : memref<64x256xbf16, #tpu.memory_space<vmem>>, vector<64x256xbf16>
    %c0_i32_2 = arith.constant 0 : i32
    %c0_3 = arith.constant 0 : index
    %c0_4 = arith.constant 0 : index
    %4 = vector.load %arg9[%c0_3, %c0_4] : memref<8x64xf32, #tpu.memory_space<vmem>>, vector<8x64xf32>
    %c0_5 = arith.constant 0 : index
    %c0_6 = arith.constant 0 : index
    %5 = vector.load %arg10[%c0_5, %c0_6] : memref<8x64xf32, #tpu.memory_space<vmem>>, vector<8x64xf32>
    %6 = arith.index_cast %c0_i32_2 : i32 to index
    %c0_7 = arith.constant 0 : index
    %c0_8 = arith.constant 0 : index
    %7 = vector.load %arg1[%6, %c0_7, %c0_8] : memref<8x8x256xf32, #tpu.memory_space<vmem>>, vector<1x8x256xf32>
    %8 = vector.shape_cast %7 : vector<1x8x256xf32> to vector<8x256xf32>
    %9 = arith.truncf %4 : vector<8x64xf32> to vector<8x64xbf16>
    %cst = arith.constant dense<0.000000e+00> : vector<8x256xf32>
    %10 = tpu.matmul %9, %3, %cst {dimension_numbers = #tpu.dot_dimension_numbers<[1], [0], [0], [1], [0, 0, 1, 1], [], []>} : vector<8x64xbf16>, vector<64x256xbf16>, vector<8x256xf32> -> vector<8x256xf32>
    %11 = arith.addf %8, %10 : vector<8x256xf32>
    %12 = vector.extract_strided_slice %11 {offsets = [0, 0], sizes = [8, 64], strides = [1, 1]} : vector<8x256xf32> to vector<8x64xf32>
    %13 = arith.negf %12 : vector<8x64xf32>
    %14 = math.exp %13 : vector<8x64xf32>
    %cst_9 = arith.constant 1.000000e+00 : f32
    %15 = vector.broadcast %cst_9 : f32 to vector<8x64xf32>
    %16 = arith.addf %15, %14 : vector<8x64xf32>
    %17 = arith.divf %15, %16 : vector<8x64xf32>
    %18 = vector.extract_strided_slice %11 {offsets = [0, 64], sizes = [8, 64], strides = [1, 1]} : vector<8x256xf32> to vector<8x64xf32>
    %19 = arith.negf %18 : vector<8x64xf32>
    %20 = math.exp %19 : vector<8x64xf32>
    %cst_10 = arith.constant 1.000000e+00 : f32
    %21 = vector.broadcast %cst_10 : f32 to vector<8x64xf32>
    %22 = arith.addf %21, %20 : vector<8x64xf32>
    %23 = arith.divf %21, %22 : vector<8x64xf32>
    %24 = vector.extract_strided_slice %11 {offsets = [0, 128], sizes = [8, 64], strides = [1, 1]} : vector<8x256xf32> to vector<8x64xf32>
    %25 = math.tanh %24 : vector<8x64xf32>
    %26 = vector.extract_strided_slice %11 {offsets = [0, 192], sizes = [8, 64], strides = [1, 1]} : vector<8x256xf32> to vector<8x64xf32>
    %27 = arith.negf %26 : vector<8x64xf32>
    %28 = math.exp %27 : vector<8x64xf32>
    %cst_11 = arith.constant 1.000000e+00 : f32
    %29 = vector.broadcast %cst_11 : f32 to vector<8x64xf32>
    %30 = arith.addf %29, %28 : vector<8x64xf32>
    %31 = arith.divf %29, %30 : vector<8x64xf32>
    %32 = arith.mulf %23, %5 : vector<8x64xf32>
    %33 = arith.mulf %17, %25 : vector<8x64xf32>
    %34 = arith.addf %32, %33 : vector<8x64xf32>
    %35 = math.tanh %34 : vector<8x64xf32>
    %36 = arith.mulf %31, %35 : vector<8x64xf32>
    %37 = arith.index_cast %c0_i32_2 : i32 to index
    %c0_12 = arith.constant 0 : index
    %c0_13 = arith.constant 0 : index
    %38 = vector.load %arg2[%37, %c0_12, %c0_13] : memref<8x8x64xf32, #tpu.memory_space<vmem>>, vector<1x8x64xf32>
    %39 = vector.shape_cast %38 : vector<1x8x64xf32> to vector<8x64xf32>
    %cst_14 = arith.constant 5.000000e-01 : f32
    %40 = vector.broadcast %cst_14 : f32 to vector<8x64xf32>
    %41 = arith.cmpf ogt, %39, %40 : vector<8x64xf32>
    %42 = arith.select %41, %36, %4 : vector<8x64xi1>, vector<8x64xf32>
    %c0_15 = arith.constant 0 : index
    %c0_16 = arith.constant 0 : index
    %43 = vector.load %arg9[%c0_15, %c0_16] : memref<8x64xf32, #tpu.memory_space<vmem>>, vector<8x64xf32>
    tpu.vector_store %arg9[%c0_15, %c0_16], %42 {strides = array<i32>} : memref<8x64xf32, #tpu.memory_space<vmem>>, vector<8x64xf32>,
    %44 = arith.select %41, %34, %5 : vector<8x64xi1>, vector<8x64xf32>
    %c0_17 = arith.constant 0 : index
    %c0_18 = arith.constant 0 : index
    %45 = vector.load %arg10[%c0_17, %c0_18] : memref<8x64xf32, #tpu.memory_space<vmem>>, vector<8x64xf32>
    tpu.vector_store %arg10[%c0_17, %c0_18], %44 {strides = array<i32>} : memref<8x64xf32, #tpu.memory_space<vmem>>, vector<8x64xf32>,
    %cst_19 = arith.constant 0.000000e+00 : f32
    %46 = vector.broadcast %cst_19 : f32 to vector<8x64xf32>
    %47 = arith.select %41, %36, %46 : vector<8x64xi1>, vector<8x64xf32>
    %48 = arith.index_cast %c0_i32_2 : i32 to index
    %c0_20 = arith.constant 0 : index
    %c0_21 = arith.constant 0 : index
    %49 = vector.load %arg6[%48, %c0_20, %c0_21] : memref<8x8x64xf32, #tpu.memory_space<vmem>>, vector<1x8x64xf32>
    %50 = vector.shape_cast %49 : vector<1x8x64xf32> to vector<8x64xf32>
    %51 = vector.shape_cast %47 : vector<8x64xf32> to vector<1x8x64xf32>
    tpu.vector_store %arg6[%48, %c0_20, %c0_21], %51 {strides = array<i32>} : memref<8x8x64xf32, #tpu.memory_space<vmem>>, vector<1x8x64xf32>,
    %c1_i32 = arith.constant 1 : i32
    %c0_22 = arith.constant 0 : index
    %c0_23 = arith.constant 0 : index
    %52 = vector.load %arg9[%c0_22, %c0_23] : memref<8x64xf32, #tpu.memory_space<vmem>>, vector<8x64xf32>
    %c0_24 = arith.constant 0 : index
    %c0_25 = arith.constant 0 : index
    %53 = vector.load %arg10[%c0_24, %c0_25] : memref<8x64xf32, #tpu.memory_space<vmem>>, vector<8x64xf32>
    %54 = arith.index_cast %c1_i32 : i32 to index
    %c0_26 = arith.constant 0 : index
    %c0_27 = arith.constant 0 : index
    %55 = vector.load %arg1[%54, %c0_26, %c0_27] : memref<8x8x256xf32, #tpu.memory_space<vmem>>, vector<1x8x256xf32>
    %56 = vector.shape_cast %55 : vector<1x8x256xf32> to vector<8x256xf32>
    %57 = arith.truncf %52 : vector<8x64xf32> to vector<8x64xbf16>
    %cst_28 = arith.constant dense<0.000000e+00> : vector<8x256xf32>
    %58 = tpu.matmul %57, %3, %cst_28 {dimension_numbers = #tpu.dot_dimension_numbers<[1], [0], [0], [1], [0, 0, 1, 1], [], []>} : vector<8x64xbf16>, vector<64x256xbf16>, vector<8x256xf32> -> vector<8x256xf32>
    %59 = arith.addf %56, %58 : vector<8x256xf32>
    %60 = vector.extract_strided_slice %59 {offsets = [0, 0], sizes = [8, 64], strides = [1, 1]} : vector<8x256xf32> to vector<8x64xf32>
    %61 = arith.negf %60 : vector<8x64xf32>
    %62 = math.exp %61 : vector<8x64xf32>
    %cst_29 = arith.constant 1.000000e+00 : f32
    %63 = vector.broadcast %cst_29 : f32 to vector<8x64xf32>
    %64 = arith.addf %63, %62 : vector<8x64xf32>
    %65 = arith.divf %63, %64 : vector<8x64xf32>
    %66 = vector.extract_strided_slice %59 {offsets = [0, 64], sizes = [8, 64], strides = [1, 1]} : vector<8x256xf32> to vector<8x64xf32>
    %67 = arith.negf %66 : vector<8x64xf32>
    %68 = math.exp %67 : vector<8x64xf32>
    %cst_30 = arith.constant 1.000000e+00 : f32
    %69 = vector.broadcast %cst_30 : f32 to vector<8x64xf32>
    %70 = arith.addf %69, %68 : vector<8x64xf32>
    %71 = arith.divf %69, %70 : vector<8x64xf32>
    %72 = vector.extract_strided_slice %59 {offsets = [0, 128], sizes = [8, 64], strides = [1, 1]} : vector<8x256xf32> to vector<8x64xf32>
    %73 = math.tanh %72 : vector<8x64xf32>
    %74 = vector.extract_strided_slice %59 {offsets = [0, 192], sizes = [8, 64], strides = [1, 1]} : vector<8x256xf32> to vector<8x64xf32>
    %75 = arith.negf %74 : vector<8x64xf32>
    %76 = math.exp %75 : vector<8x64xf32>
    %cst_31 = arith.constant 1.000000e+00 : f32
    %77 = vector.broadcast %cst_31 : f32 to vector<8x64xf32>
    %78 = arith.addf %77, %76 : vector<8x64xf32>
    %79 = arith.divf %77, %78 : vector<8x64xf32>
    %80 = arith.mulf %71, %53 : vector<8x64xf32>
    %81 = arith.mulf %65, %73 : vector<8x64xf32>
    %82 = arith.addf %80, %81 : vector<8x64xf32>
    %83 = math.tanh %82 : vector<8x64xf32>
    %84 = arith.mulf %79, %83 : vector<8x64xf32>
    %85 = arith.index_cast %c1_i32 : i32 to index
    %c0_32 = arith.constant 0 : index
    %c0_33 = arith.constant 0 : index
    %86 = vector.load %arg2[%85, %c0_32, %c0_33] : memref<8x8x64xf32, #tpu.memory_space<vmem>>, vector<1x8x64xf32>
    %87 = vector.shape_cast %86 : vector<1x8x64xf32> to vector<8x64xf32>
    %cst_34 = arith.constant 5.000000e-01 : f32
    %88 = vector.broadcast %cst_34 : f32 to vector<8x64xf32>
    %89 = arith.cmpf ogt, %87, %88 : vector<8x64xf32>
    %90 = arith.select %89, %84, %52 : vector<8x64xi1>, vector<8x64xf32>
    %c0_35 = arith.constant 0 : index
    %c0_36 = arith.constant 0 : index
    %91 = vector.load %arg9[%c0_35, %c0_36] : memref<8x64xf32, #tpu.memory_space<vmem>>, vector<8x64xf32>
    tpu.vector_store %arg9[%c0_35, %c0_36], %90 {strides = array<i32>} : memref<8x64xf32, #tpu.memory_space<vmem>>, vector<8x64xf32>,
    %92 = arith.select %89, %82, %53 : vector<8x64xi1>, vector<8x64xf32>
    %c0_37 = arith.constant 0 : index
    %c0_38 = arith.constant 0 : index
    %93 = vector.load %arg10[%c0_37, %c0_38] : memref<8x64xf32, #tpu.memory_space<vmem>>, vector<8x64xf32>
    tpu.vector_store %arg10[%c0_37, %c0_38], %92 {strides = array<i32>} : memref<8x64xf32, #tpu.memory_space<vmem>>, vector<8x64xf32>,
    %cst_39 = arith.constant 0.000000e+00 : f32
    %94 = vector.broadcast %cst_39 : f32 to vector<8x64xf32>
    %95 = arith.select %89, %84, %94 : vector<8x64xi1>, vector<8x64xf32>
    %96 = arith.index_cast %c1_i32 : i32 to index
    %c0_40 = arith.constant 0 : index
    %c0_41 = arith.constant 0 : index
    %97 = vector.load %arg6[%96, %c0_40, %c0_41] : memref<8x8x64xf32, #tpu.memory_space<vmem>>, vector<1x8x64xf32>
    %98 = vector.shape_cast %97 : vector<1x8x64xf32> to vector<8x64xf32>
    %99 = vector.shape_cast %95 : vector<8x64xf32> to vector<1x8x64xf32>
    tpu.vector_store %arg6[%96, %c0_40, %c0_41], %99 {strides = array<i32>} : memref<8x8x64xf32, #tpu.memory_space<vmem>>, vector<1x8x64xf32>,
    %c2_i32 = arith.constant 2 : i32
    %c0_42 = arith.constant 0 : index
    %c0_43 = arith.constant 0 : index
    %100 = vector.load %arg9[%c0_42, %c0_43] : memref<8x64xf32, #tpu.memory_space<vmem>>, vector<8x64xf32>
    %c0_44 = arith.constant 0 : index
    %c0_45 = arith.constant 0 : index
    %101 = vector.load %arg10[%c0_44, %c0_45] : memref<8x64xf32, #tpu.memory_space<vmem>>, vector<8x64xf32>
    %102 = arith.index_cast %c2_i32 : i32 to index
    %c0_46 = arith.constant 0 : index
    %c0_47 = arith.constant 0 : index
    %103 = vector.load %arg1[%102, %c0_46, %c0_47] : memref<8x8x256xf32, #tpu.memory_space<vmem>>, vector<1x8x256xf32>
    %104 = vector.shape_cast %103 : vector<1x8x256xf32> to vector<8x256xf32>
    %105 = arith.truncf %100 : vector<8x64xf32> to vector<8x64xbf16>
    %cst_48 = arith.constant dense<0.000000e+00> : vector<8x256xf32>
    %106 = tpu.matmul %105, %3, %cst_48 {dimension_numbers = #tpu.dot_dimension_numbers<[1], [0], [0], [1], [0, 0, 1, 1], [], []>} : vector<8x64xbf16>, vector<64x256xbf16>, vector<8x256xf32> -> vector<8x256xf32>
    %107 = arith.addf %104, %106 : vector<8x256xf32>
    %108 = vector.extract_strided_slice %107 {offsets = [0, 0], sizes = [8, 64], strides = [1, 1]} : vector<8x256xf32> to vector<8x64xf32>
    %109 = arith.negf %108 : vector<8x64xf32>
    %110 = math.exp %109 : vector<8x64xf32>
    %cst_49 = arith.constant 1.000000e+00 : f32
    %111 = vector.broadcast %cst_49 : f32 to vector<8x64xf32>
    %112 = arith.addf %111, %110 : vector<8x64xf32>
    %113 = arith.divf %111, %112 : vector<8x64xf32>
    %114 = vector.extract_strided_slice %107 {offsets = [0, 64], sizes = [8, 64], strides = [1, 1]} : vector<8x256xf32> to vector<8x64xf32>
    %115 = arith.negf %114 : vector<8x64xf32>
    %116 = math.exp %115 : vector<8x64xf32>
    %cst_50 = arith.constant 1.000000e+00 : f32
    %117 = vector.broadcast %cst_50 : f32 to vector<8x64xf32>
    %118 = arith.addf %117, %116 : vector<8x64xf32>
    %119 = arith.divf %117, %118 : vector<8x64xf32>
    %120 = vector.extract_strided_slice %107 {offsets = [0, 128], sizes = [8, 64], strides = [1, 1]} : vector<8x256xf32> to vector<8x64xf32>
    %121 = math.tanh %120 : vector<8x64xf32>
    %122 = vector.extract_strided_slice %107 {offsets = [0, 192], sizes = [8, 64], strides = [1, 1]} : vector<8x256xf32> to vector<8x64xf32>
    %123 = arith.negf %122 : vector<8x64xf32>
    %124 = math.exp %123 : vector<8x64xf32>
    %cst_51 = arith.constant 1.000000e+00 : f32
    %125 = vector.broadcast %cst_51 : f32 to vector<8x64xf32>
    %126 = arith.addf %125, %124 : vector<8x64xf32>
    %127 = arith.divf %125, %126 : vector<8x64xf32>
    %128 = arith.mulf %119, %101 : vector<8x64xf32>
    %129 = arith.mulf %113, %121 : vector<8x64xf32>
    %130 = arith.addf %128, %129 : vector<8x64xf32>
    %131 = math.tanh %130 : vector<8x64xf32>
    %132 = arith.mulf %127, %131 : vector<8x64xf32>
    %133 = arith.index_cast %c2_i32 : i32 to index
    %c0_52 = arith.constant 0 : index
    %c0_53 = arith.constant 0 : index
    %134 = vector.load %arg2[%133, %c0_52, %c0_53] : memref<8x8x64xf32, #tpu.memory_space<vmem>>, vector<1x8x64xf32>
    %135 = vector.shape_cast %134 : vector<1x8x64xf32> to vector<8x64xf32>
    %cst_54 = arith.constant 5.000000e-01 : f32
    %136 = vector.broadcast %cst_54 : f32 to vector<8x64xf32>
    %137 = arith.cmpf ogt, %135, %136 : vector<8x64xf32>
    %138 = arith.select %137, %132, %100 : vector<8x64xi1>, vector<8x64xf32>
    %c0_55 = arith.constant 0 : index
    %c0_56 = arith.constant 0 : index
    %139 = vector.load %arg9[%c0_55, %c0_56] : memref<8x64xf32, #tpu.memory_space<vmem>>, vector<8x64xf32>
    tpu.vector_store %arg9[%c0_55, %c0_56], %138 {strides = array<i32>} : memref<8x64xf32, #tpu.memory_space<vmem>>, vector<8x64xf32>,
    %140 = arith.select %137, %130, %101 : vector<8x64xi1>, vector<8x64xf32>
    %c0_57 = arith.constant 0 : index
    %c0_58 = arith.constant 0 : index
    %141 = vector.load %arg10[%c0_57, %c0_58] : memref<8x64xf32, #tpu.memory_space<vmem>>, vector<8x64xf32>
    tpu.vector_store %arg10[%c0_57, %c0_58], %140 {strides = array<i32>} : memref<8x64xf32, #tpu.memory_space<vmem>>, vector<8x64xf32>,
    %cst_59 = arith.constant 0.000000e+00 : f32
    %142 = vector.broadcast %cst_59 : f32 to vector<8x64xf32>
    %143 = arith.select %137, %132, %142 : vector<8x64xi1>, vector<8x64xf32>
    %144 = arith.index_cast %c2_i32 : i32 to index
    %c0_60 = arith.constant 0 : index
    %c0_61 = arith.constant 0 : index
    %145 = vector.load %arg6[%144, %c0_60, %c0_61] : memref<8x8x64xf32, #tpu.memory_space<vmem>>, vector<1x8x64xf32>
    %146 = vector.shape_cast %145 : vector<1x8x64xf32> to vector<8x64xf32>
    %147 = vector.shape_cast %143 : vector<8x64xf32> to vector<1x8x64xf32>
    tpu.vector_store %arg6[%144, %c0_60, %c0_61], %147 {strides = array<i32>} : memref<8x8x64xf32, #tpu.memory_space<vmem>>, vector<1x8x64xf32>,
    %c3_i32 = arith.constant 3 : i32
    %c0_62 = arith.constant 0 : index
    %c0_63 = arith.constant 0 : index
    %148 = vector.load %arg9[%c0_62, %c0_63] : memref<8x64xf32, #tpu.memory_space<vmem>>, vector<8x64xf32>
    %c0_64 = arith.constant 0 : index
    %c0_65 = arith.constant 0 : index
    %149 = vector.load %arg10[%c0_64, %c0_65] : memref<8x64xf32, #tpu.memory_space<vmem>>, vector<8x64xf32>
    %150 = arith.index_cast %c3_i32 : i32 to index
    %c0_66 = arith.constant 0 : index
    %c0_67 = arith.constant 0 : index
    %151 = vector.load %arg1[%150, %c0_66, %c0_67] : memref<8x8x256xf32, #tpu.memory_space<vmem>>, vector<1x8x256xf32>
    %152 = vector.shape_cast %151 : vector<1x8x256xf32> to vector<8x256xf32>
    %153 = arith.truncf %148 : vector<8x64xf32> to vector<8x64xbf16>
    %cst_68 = arith.constant dense<0.000000e+00> : vector<8x256xf32>
    %154 = tpu.matmul %153, %3, %cst_68 {dimension_numbers = #tpu.dot_dimension_numbers<[1], [0], [0], [1], [0, 0, 1, 1], [], []>} : vector<8x64xbf16>, vector<64x256xbf16>, vector<8x256xf32> -> vector<8x256xf32>
    %155 = arith.addf %152, %154 : vector<8x256xf32>
    %156 = vector.extract_strided_slice %155 {offsets = [0, 0], sizes = [8, 64], strides = [1, 1]} : vector<8x256xf32> to vector<8x64xf32>
    %157 = arith.negf %156 : vector<8x64xf32>
    %158 = math.exp %157 : vector<8x64xf32>
    %cst_69 = arith.constant 1.000000e+00 : f32
    %159 = vector.broadcast %cst_69 : f32 to vector<8x64xf32>
    %160 = arith.addf %159, %158 : vector<8x64xf32>
    %161 = arith.divf %159, %160 : vector<8x64xf32>
    %162 = vector.extract_strided_slice %155 {offsets = [0, 64], sizes = [8, 64], strides = [1, 1]} : vector<8x256xf32> to vector<8x64xf32>
    %163 = arith.negf %162 : vector<8x64xf32>
    %164 = math.exp %163 : vector<8x64xf32>
    %cst_70 = arith.constant 1.000000e+00 : f32
    %165 = vector.broadcast %cst_70 : f32 to vector<8x64xf32>
    %166 = arith.addf %165, %164 : vector<8x64xf32>
    %167 = arith.divf %165, %166 : vector<8x64xf32>
    %168 = vector.extract_strided_slice %155 {offsets = [0, 128], sizes = [8, 64], strides = [1, 1]} : vector<8x256xf32> to vector<8x64xf32>
    %169 = math.tanh %168 : vector<8x64xf32>
    %170 = vector.extract_strided_slice %155 {offsets = [0, 192], sizes = [8, 64], strides = [1, 1]} : vector<8x256xf32> to vector<8x64xf32>
    %171 = arith.negf %170 : vector<8x64xf32>
    %172 = math.exp %171 : vector<8x64xf32>
    %cst_71 = arith.constant 1.000000e+00 : f32
    %173 = vector.broadcast %cst_71 : f32 to vector<8x64xf32>
    %174 = arith.addf %173, %172 : vector<8x64xf32>
    %175 = arith.divf %173, %174 : vector<8x64xf32>
    %176 = arith.mulf %167, %149 : vector<8x64xf32>
    %177 = arith.mulf %161, %169 : vector<8x64xf32>
    %178 = arith.addf %176, %177 : vector<8x64xf32>
    %179 = math.tanh %178 : vector<8x64xf32>
    %180 = arith.mulf %175, %179 : vector<8x64xf32>
    %181 = arith.index_cast %c3_i32 : i32 to index
    %c0_72 = arith.constant 0 : index
    %c0_73 = arith.constant 0 : index
    %182 = vector.load %arg2[%181, %c0_72, %c0_73] : memref<8x8x64xf32, #tpu.memory_space<vmem>>, vector<1x8x64xf32>
    %183 = vector.shape_cast %182 : vector<1x8x64xf32> to vector<8x64xf32>
    %cst_74 = arith.constant 5.000000e-01 : f32
    %184 = vector.broadcast %cst_74 : f32 to vector<8x64xf32>
    %185 = arith.cmpf ogt, %183, %184 : vector<8x64xf32>
    %186 = arith.select %185, %180, %148 : vector<8x64xi1>, vector<8x64xf32>
    %c0_75 = arith.constant 0 : index
    %c0_76 = arith.constant 0 : index
    %187 = vector.load %arg9[%c0_75, %c0_76] : memref<8x64xf32, #tpu.memory_space<vmem>>, vector<8x64xf32>
    tpu.vector_store %arg9[%c0_75, %c0_76], %186 {strides = array<i32>} : memref<8x64xf32, #tpu.memory_space<vmem>>, vector<8x64xf32>,
    %188 = arith.select %185, %178, %149 : vector<8x64xi1>, vector<8x64xf32>
    %c0_77 = arith.constant 0 : index
    %c0_78 = arith.constant 0 : index
    %189 = vector.load %arg10[%c0_77, %c0_78] : memref<8x64xf32, #tpu.memory_space<vmem>>, vector<8x64xf32>
    tpu.vector_store %arg10[%c0_77, %c0_78], %188 {strides = array<i32>} : memref<8x64xf32, #tpu.memory_space<vmem>>, vector<8x64xf32>,
    %cst_79 = arith.constant 0.000000e+00 : f32
    %190 = vector.broadcast %cst_79 : f32 to vector<8x64xf32>
    %191 = arith.select %185, %180, %190 : vector<8x64xi1>, vector<8x64xf32>
    %192 = arith.index_cast %c3_i32 : i32 to index
    %c0_80 = arith.constant 0 : index
    %c0_81 = arith.constant 0 : index
    %193 = vector.load %arg6[%192, %c0_80, %c0_81] : memref<8x8x64xf32, #tpu.memory_space<vmem>>, vector<1x8x64xf32>
    %194 = vector.shape_cast %193 : vector<1x8x64xf32> to vector<8x64xf32>
    %195 = vector.shape_cast %191 : vector<8x64xf32> to vector<1x8x64xf32>
    tpu.vector_store %arg6[%192, %c0_80, %c0_81], %195 {strides = array<i32>} : memref<8x8x64xf32, #tpu.memory_space<vmem>>, vector<1x8x64xf32>,
    %c4_i32 = arith.constant 4 : i32
    %c0_82 = arith.constant 0 : index
    %c0_83 = arith.constant 0 : index
    %196 = vector.load %arg9[%c0_82, %c0_83] : memref<8x64xf32, #tpu.memory_space<vmem>>, vector<8x64xf32>
    %c0_84 = arith.constant 0 : index
    %c0_85 = arith.constant 0 : index
    %197 = vector.load %arg10[%c0_84, %c0_85] : memref<8x64xf32, #tpu.memory_space<vmem>>, vector<8x64xf32>
    %198 = arith.index_cast %c4_i32 : i32 to index
    %c0_86 = arith.constant 0 : index
    %c0_87 = arith.constant 0 : index
    %199 = vector.load %arg1[%198, %c0_86, %c0_87] : memref<8x8x256xf32, #tpu.memory_space<vmem>>, vector<1x8x256xf32>
    %200 = vector.shape_cast %199 : vector<1x8x256xf32> to vector<8x256xf32>
    %201 = arith.truncf %196 : vector<8x64xf32> to vector<8x64xbf16>
    %cst_88 = arith.constant dense<0.000000e+00> : vector<8x256xf32>
    %202 = tpu.matmul %201, %3, %cst_88 {dimension_numbers = #tpu.dot_dimension_numbers<[1], [0], [0], [1], [0, 0, 1, 1], [], []>} : vector<8x64xbf16>, vector<64x256xbf16>, vector<8x256xf32> -> vector<8x256xf32>
    %203 = arith.addf %200, %202 : vector<8x256xf32>
    %204 = vector.extract_strided_slice %203 {offsets = [0, 0], sizes = [8, 64], strides = [1, 1]} : vector<8x256xf32> to vector<8x64xf32>
    %205 = arith.negf %204 : vector<8x64xf32>
    %206 = math.exp %205 : vector<8x64xf32>
    %cst_89 = arith.constant 1.000000e+00 : f32
    %207 = vector.broadcast %cst_89 : f32 to vector<8x64xf32>
    %208 = arith.addf %207, %206 : vector<8x64xf32>
    %209 = arith.divf %207, %208 : vector<8x64xf32>
    %210 = vector.extract_strided_slice %203 {offsets = [0, 64], sizes = [8, 64], strides = [1, 1]} : vector<8x256xf32> to vector<8x64xf32>
    %211 = arith.negf %210 : vector<8x64xf32>
    %212 = math.exp %211 : vector<8x64xf32>
    %cst_90 = arith.constant 1.000000e+00 : f32
    %213 = vector.broadcast %cst_90 : f32 to vector<8x64xf32>
    %214 = arith.addf %213, %212 : vector<8x64xf32>
    %215 = arith.divf %213, %214 : vector<8x64xf32>
    %216 = vector.extract_strided_slice %203 {offsets = [0, 128], sizes = [8, 64], strides = [1, 1]} : vector<8x256xf32> to vector<8x64xf32>
    %217 = math.tanh %216 : vector<8x64xf32>
    %218 = vector.extract_strided_slice %203 {offsets = [0, 192], sizes = [8, 64], strides = [1, 1]} : vector<8x256xf32> to vector<8x64xf32>
    %219 = arith.negf %218 : vector<8x64xf32>
    %220 = math.exp %219 : vector<8x64xf32>
    %cst_91 = arith.constant 1.000000e+00 : f32
    %221 = vector.broadcast %cst_91 : f32 to vector<8x64xf32>
    %222 = arith.addf %221, %220 : vector<8x64xf32>
    %223 = arith.divf %221, %222 : vector<8x64xf32>
    %224 = arith.mulf %215, %197 : vector<8x64xf32>
    %225 = arith.mulf %209, %217 : vector<8x64xf32>
    %226 = arith.addf %224, %225 : vector<8x64xf32>
    %227 = math.tanh %226 : vector<8x64xf32>
    %228 = arith.mulf %223, %227 : vector<8x64xf32>
    %229 = arith.index_cast %c4_i32 : i32 to index
    %c0_92 = arith.constant 0 : index
    %c0_93 = arith.constant 0 : index
    %230 = vector.load %arg2[%229, %c0_92, %c0_93] : memref<8x8x64xf32, #tpu.memory_space<vmem>>, vector<1x8x64xf32>
    %231 = vector.shape_cast %230 : vector<1x8x64xf32> to vector<8x64xf32>
    %cst_94 = arith.constant 5.000000e-01 : f32
    %232 = vector.broadcast %cst_94 : f32 to vector<8x64xf32>
    %233 = arith.cmpf ogt, %231, %232 : vector<8x64xf32>
    %234 = arith.select %233, %228, %196 : vector<8x64xi1>, vector<8x64xf32>
    %c0_95 = arith.constant 0 : index
    %c0_96 = arith.constant 0 : index
    %235 = vector.load %arg9[%c0_95, %c0_96] : memref<8x64xf32, #tpu.memory_space<vmem>>, vector<8x64xf32>
    tpu.vector_store %arg9[%c0_95, %c0_96], %234 {strides = array<i32>} : memref<8x64xf32, #tpu.memory_space<vmem>>, vector<8x64xf32>,
    %236 = arith.select %233, %226, %197 : vector<8x64xi1>, vector<8x64xf32>
    %c0_97 = arith.constant 0 : index
    %c0_98 = arith.constant 0 : index
    %237 = vector.load %arg10[%c0_97, %c0_98] : memref<8x64xf32, #tpu.memory_space<vmem>>, vector<8x64xf32>
    tpu.vector_store %arg10[%c0_97, %c0_98], %236 {strides = array<i32>} : memref<8x64xf32, #tpu.memory_space<vmem>>, vector<8x64xf32>,
    %cst_99 = arith.constant 0.000000e+00 : f32
    %238 = vector.broadcast %cst_99 : f32 to vector<8x64xf32>
    %239 = arith.select %233, %228, %238 : vector<8x64xi1>, vector<8x64xf32>
    %240 = arith.index_cast %c4_i32 : i32 to index
    %c0_100 = arith.constant 0 : index
    %c0_101 = arith.constant 0 : index
    %241 = vector.load %arg6[%240, %c0_100, %c0_101] : memref<8x8x64xf32, #tpu.memory_space<vmem>>, vector<1x8x64xf32>
    %242 = vector.shape_cast %241 : vector<1x8x64xf32> to vector<8x64xf32>
    %243 = vector.shape_cast %239 : vector<8x64xf32> to vector<1x8x64xf32>
    tpu.vector_store %arg6[%240, %c0_100, %c0_101], %243 {strides = array<i32>} : memref<8x8x64xf32, #tpu.memory_space<vmem>>, vector<1x8x64xf32>,
    %c5_i32 = arith.constant 5 : i32
    %c0_102 = arith.constant 0 : index
    %c0_103 = arith.constant 0 : index
    %244 = vector.load %arg9[%c0_102, %c0_103] : memref<8x64xf32, #tpu.memory_space<vmem>>, vector<8x64xf32>
    %c0_104 = arith.constant 0 : index
    %c0_105 = arith.constant 0 : index
    %245 = vector.load %arg10[%c0_104, %c0_105] : memref<8x64xf32, #tpu.memory_space<vmem>>, vector<8x64xf32>
    %246 = arith.index_cast %c5_i32 : i32 to index
    %c0_106 = arith.constant 0 : index
    %c0_107 = arith.constant 0 : index
    %247 = vector.load %arg1[%246, %c0_106, %c0_107] : memref<8x8x256xf32, #tpu.memory_space<vmem>>, vector<1x8x256xf32>
    %248 = vector.shape_cast %247 : vector<1x8x256xf32> to vector<8x256xf32>
    %249 = arith.truncf %244 : vector<8x64xf32> to vector<8x64xbf16>
    %cst_108 = arith.constant dense<0.000000e+00> : vector<8x256xf32>
    %250 = tpu.matmul %249, %3, %cst_108 {dimension_numbers = #tpu.dot_dimension_numbers<[1], [0], [0], [1], [0, 0, 1, 1], [], []>} : vector<8x64xbf16>, vector<64x256xbf16>, vector<8x256xf32> -> vector<8x256xf32>
    %251 = arith.addf %248, %250 : vector<8x256xf32>
    %252 = vector.extract_strided_slice %251 {offsets = [0, 0], sizes = [8, 64], strides = [1, 1]} : vector<8x256xf32> to vector<8x64xf32>
    %253 = arith.negf %252 : vector<8x64xf32>
    %254 = math.exp %253 : vector<8x64xf32>
    %cst_109 = arith.constant 1.000000e+00 : f32
    %255 = vector.broadcast %cst_109 : f32 to vector<8x64xf32>
    %256 = arith.addf %255, %254 : vector<8x64xf32>
    %257 = arith.divf %255, %256 : vector<8x64xf32>
    %258 = vector.extract_strided_slice %251 {offsets = [0, 64], sizes = [8, 64], strides = [1, 1]} : vector<8x256xf32> to vector<8x64xf32>
    %259 = arith.negf %258 : vector<8x64xf32>
    %260 = math.exp %259 : vector<8x64xf32>
    %cst_110 = arith.constant 1.000000e+00 : f32
    %261 = vector.broadcast %cst_110 : f32 to vector<8x64xf32>
    %262 = arith.addf %261, %260 : vector<8x64xf32>
    %263 = arith.divf %261, %262 : vector<8x64xf32>
    %264 = vector.extract_strided_slice %251 {offsets = [0, 128], sizes = [8, 64], strides = [1, 1]} : vector<8x256xf32> to vector<8x64xf32>
    %265 = math.tanh %264 : vector<8x64xf32>
    %266 = vector.extract_strided_slice %251 {offsets = [0, 192], sizes = [8, 64], strides = [1, 1]} : vector<8x256xf32> to vector<8x64xf32>
    %267 = arith.negf %266 : vector<8x64xf32>
    %268 = math.exp %267 : vector<8x64xf32>
    %cst_111 = arith.constant 1.000000e+00 : f32
    %269 = vector.broadcast %cst_111 : f32 to vector<8x64xf32>
    %270 = arith.addf %269, %268 : vector<8x64xf32>
    %271 = arith.divf %269, %270 : vector<8x64xf32>
    %272 = arith.mulf %263, %245 : vector<8x64xf32>
    %273 = arith.mulf %257, %265 : vector<8x64xf32>
    %274 = arith.addf %272, %273 : vector<8x64xf32>
    %275 = math.tanh %274 : vector<8x64xf32>
    %276 = arith.mulf %271, %275 : vector<8x64xf32>
    %277 = arith.index_cast %c5_i32 : i32 to index
    %c0_112 = arith.constant 0 : index
    %c0_113 = arith.constant 0 : index
    %278 = vector.load %arg2[%277, %c0_112, %c0_113] : memref<8x8x64xf32, #tpu.memory_space<vmem>>, vector<1x8x64xf32>
    %279 = vector.shape_cast %278 : vector<1x8x64xf32> to vector<8x64xf32>
    %cst_114 = arith.constant 5.000000e-01 : f32
    %280 = vector.broadcast %cst_114 : f32 to vector<8x64xf32>
    %281 = arith.cmpf ogt, %279, %280 : vector<8x64xf32>
    %282 = arith.select %281, %276, %244 : vector<8x64xi1>, vector<8x64xf32>
    %c0_115 = arith.constant 0 : index
    %c0_116 = arith.constant 0 : index
    %283 = vector.load %arg9[%c0_115, %c0_116] : memref<8x64xf32, #tpu.memory_space<vmem>>, vector<8x64xf32>
    tpu.vector_store %arg9[%c0_115, %c0_116], %282 {strides = array<i32>} : memref<8x64xf32, #tpu.memory_space<vmem>>, vector<8x64xf32>,
    %284 = arith.select %281, %274, %245 : vector<8x64xi1>, vector<8x64xf32>
    %c0_117 = arith.constant 0 : index
    %c0_118 = arith.constant 0 : index
    %285 = vector.load %arg10[%c0_117, %c0_118] : memref<8x64xf32, #tpu.memory_space<vmem>>, vector<8x64xf32>
    tpu.vector_store %arg10[%c0_117, %c0_118], %284 {strides = array<i32>} : memref<8x64xf32, #tpu.memory_space<vmem>>, vector<8x64xf32>,
    %cst_119 = arith.constant 0.000000e+00 : f32
    %286 = vector.broadcast %cst_119 : f32 to vector<8x64xf32>
    %287 = arith.select %281, %276, %286 : vector<8x64xi1>, vector<8x64xf32>
    %288 = arith.index_cast %c5_i32 : i32 to index
    %c0_120 = arith.constant 0 : index
    %c0_121 = arith.constant 0 : index
    %289 = vector.load %arg6[%288, %c0_120, %c0_121] : memref<8x8x64xf32, #tpu.memory_space<vmem>>, vector<1x8x64xf32>
    %290 = vector.shape_cast %289 : vector<1x8x64xf32> to vector<8x64xf32>
    %291 = vector.shape_cast %287 : vector<8x64xf32> to vector<1x8x64xf32>
    tpu.vector_store %arg6[%288, %c0_120, %c0_121], %291 {strides = array<i32>} : memref<8x8x64xf32, #tpu.memory_space<vmem>>, vector<1x8x64xf32>,
    %c6_i32 = arith.constant 6 : i32
    %c0_122 = arith.constant 0 : index
    %c0_123 = arith.constant 0 : index
    %292 = vector.load %arg9[%c0_122, %c0_123] : memref<8x64xf32, #tpu.memory_space<vmem>>, vector<8x64xf32>
    %c0_124 = arith.constant 0 : index
    %c0_125 = arith.constant 0 : index
    %293 = vector.load %arg10[%c0_124, %c0_125] : memref<8x64xf32, #tpu.memory_space<vmem>>, vector<8x64xf32>
    %294 = arith.index_cast %c6_i32 : i32 to index
    %c0_126 = arith.constant 0 : index
    %c0_127 = arith.constant 0 : index
    %295 = vector.load %arg1[%294, %c0_126, %c0_127] : memref<8x8x256xf32, #tpu.memory_space<vmem>>, vector<1x8x256xf32>
    %296 = vector.shape_cast %295 : vector<1x8x256xf32> to vector<8x256xf32>
    %297 = arith.truncf %292 : vector<8x64xf32> to vector<8x64xbf16>
    %cst_128 = arith.constant dense<0.000000e+00> : vector<8x256xf32>
    %298 = tpu.matmul %297, %3, %cst_128 {dimension_numbers = #tpu.dot_dimension_numbers<[1], [0], [0], [1], [0, 0, 1, 1], [], []>} : vector<8x64xbf16>, vector<64x256xbf16>, vector<8x256xf32> -> vector<8x256xf32>
    %299 = arith.addf %296, %298 : vector<8x256xf32>
    %300 = vector.extract_strided_slice %299 {offsets = [0, 0], sizes = [8, 64], strides = [1, 1]} : vector<8x256xf32> to vector<8x64xf32>
    %301 = arith.negf %300 : vector<8x64xf32>
    %302 = math.exp %301 : vector<8x64xf32>
    %cst_129 = arith.constant 1.000000e+00 : f32
    %303 = vector.broadcast %cst_129 : f32 to vector<8x64xf32>
    %304 = arith.addf %303, %302 : vector<8x64xf32>
    %305 = arith.divf %303, %304 : vector<8x64xf32>
    %306 = vector.extract_strided_slice %299 {offsets = [0, 64], sizes = [8, 64], strides = [1, 1]} : vector<8x256xf32> to vector<8x64xf32>
    %307 = arith.negf %306 : vector<8x64xf32>
    %308 = math.exp %307 : vector<8x64xf32>
    %cst_130 = arith.constant 1.000000e+00 : f32
    %309 = vector.broadcast %cst_130 : f32 to vector<8x64xf32>
    %310 = arith.addf %309, %308 : vector<8x64xf32>
    %311 = arith.divf %309, %310 : vector<8x64xf32>
    %312 = vector.extract_strided_slice %299 {offsets = [0, 128], sizes = [8, 64], strides = [1, 1]} : vector<8x256xf32> to vector<8x64xf32>
    %313 = math.tanh %312 : vector<8x64xf32>
    %314 = vector.extract_strided_slice %299 {offsets = [0, 192], sizes = [8, 64], strides = [1, 1]} : vector<8x256xf32> to vector<8x64xf32>
    %315 = arith.negf %314 : vector<8x64xf32>
    %316 = math.exp %315 : vector<8x64xf32>
    %cst_131 = arith.constant 1.000000e+00 : f32
    %317 = vector.broadcast %cst_131 : f32 to vector<8x64xf32>
    %318 = arith.addf %317, %316 : vector<8x64xf32>
    %319 = arith.divf %317, %318 : vector<8x64xf32>
    %320 = arith.mulf %311, %293 : vector<8x64xf32>
    %321 = arith.mulf %305, %313 : vector<8x64xf32>
    %322 = arith.addf %320, %321 : vector<8x64xf32>
    %323 = math.tanh %322 : vector<8x64xf32>
    %324 = arith.mulf %319, %323 : vector<8x64xf32>
    %325 = arith.index_cast %c6_i32 : i32 to index
    %c0_132 = arith.constant 0 : index
    %c0_133 = arith.constant 0 : index
    %326 = vector.load %arg2[%325, %c0_132, %c0_133] : memref<8x8x64xf32, #tpu.memory_space<vmem>>, vector<1x8x64xf32>
    %327 = vector.shape_cast %326 : vector<1x8x64xf32> to vector<8x64xf32>
    %cst_134 = arith.constant 5.000000e-01 : f32
    %328 = vector.broadcast %cst_134 : f32 to vector<8x64xf32>
    %329 = arith.cmpf ogt, %327, %328 : vector<8x64xf32>
    %330 = arith.select %329, %324, %292 : vector<8x64xi1>, vector<8x64xf32>
    %c0_135 = arith.constant 0 : index
    %c0_136 = arith.constant 0 : index
    %331 = vector.load %arg9[%c0_135, %c0_136] : memref<8x64xf32, #tpu.memory_space<vmem>>, vector<8x64xf32>
    tpu.vector_store %arg9[%c0_135, %c0_136], %330 {strides = array<i32>} : memref<8x64xf32, #tpu.memory_space<vmem>>, vector<8x64xf32>,
    %332 = arith.select %329, %322, %293 : vector<8x64xi1>, vector<8x64xf32>
    %c0_137 = arith.constant 0 : index
    %c0_138 = arith.constant 0 : index
    %333 = vector.load %arg10[%c0_137, %c0_138] : memref<8x64xf32, #tpu.memory_space<vmem>>, vector<8x64xf32>
    tpu.vector_store %arg10[%c0_137, %c0_138], %332 {strides = array<i32>} : memref<8x64xf32, #tpu.memory_space<vmem>>, vector<8x64xf32>,
    %cst_139 = arith.constant 0.000000e+00 : f32
    %334 = vector.broadcast %cst_139 : f32 to vector<8x64xf32>
    %335 = arith.select %329, %324, %334 : vector<8x64xi1>, vector<8x64xf32>
    %336 = arith.index_cast %c6_i32 : i32 to index
    %c0_140 = arith.constant 0 : index
    %c0_141 = arith.constant 0 : index
    %337 = vector.load %arg6[%336, %c0_140, %c0_141] : memref<8x8x64xf32, #tpu.memory_space<vmem>>, vector<1x8x64xf32>
    %338 = vector.shape_cast %337 : vector<1x8x64xf32> to vector<8x64xf32>
    %339 = vector.shape_cast %335 : vector<8x64xf32> to vector<1x8x64xf32>
    tpu.vector_store %arg6[%336, %c0_140, %c0_141], %339 {strides = array<i32>} : memref<8x8x64xf32, #tpu.memory_space<vmem>>, vector<1x8x64xf32>,
    %c7_i32 = arith.constant 7 : i32
    %c0_142 = arith.constant 0 : index
    %c0_143 = arith.constant 0 : index
    %340 = vector.load %arg9[%c0_142, %c0_143] : memref<8x64xf32, #tpu.memory_space<vmem>>, vector<8x64xf32>
    %c0_144 = arith.constant 0 : index
    %c0_145 = arith.constant 0 : index
    %341 = vector.load %arg10[%c0_144, %c0_145] : memref<8x64xf32, #tpu.memory_space<vmem>>, vector<8x64xf32>
    %342 = arith.index_cast %c7_i32 : i32 to index
    %c0_146 = arith.constant 0 : index
    %c0_147 = arith.constant 0 : index
    %343 = vector.load %arg1[%342, %c0_146, %c0_147] : memref<8x8x256xf32, #tpu.memory_space<vmem>>, vector<1x8x256xf32>
    %344 = vector.shape_cast %343 : vector<1x8x256xf32> to vector<8x256xf32>
    %345 = arith.truncf %340 : vector<8x64xf32> to vector<8x64xbf16>
    %cst_148 = arith.constant dense<0.000000e+00> : vector<8x256xf32>
    %346 = tpu.matmul %345, %3, %cst_148 {dimension_numbers = #tpu.dot_dimension_numbers<[1], [0], [0], [1], [0, 0, 1, 1], [], []>} : vector<8x64xbf16>, vector<64x256xbf16>, vector<8x256xf32> -> vector<8x256xf32>
    %347 = arith.addf %344, %346 : vector<8x256xf32>
    %348 = vector.extract_strided_slice %347 {offsets = [0, 0], sizes = [8, 64], strides = [1, 1]} : vector<8x256xf32> to vector<8x64xf32>
    %349 = arith.negf %348 : vector<8x64xf32>
    %350 = math.exp %349 : vector<8x64xf32>
    %cst_149 = arith.constant 1.000000e+00 : f32
    %351 = vector.broadcast %cst_149 : f32 to vector<8x64xf32>
    %352 = arith.addf %351, %350 : vector<8x64xf32>
    %353 = arith.divf %351, %352 : vector<8x64xf32>
    %354 = vector.extract_strided_slice %347 {offsets = [0, 64], sizes = [8, 64], strides = [1, 1]} : vector<8x256xf32> to vector<8x64xf32>
    %355 = arith.negf %354 : vector<8x64xf32>
    %356 = math.exp %355 : vector<8x64xf32>
    %cst_150 = arith.constant 1.000000e+00 : f32
    %357 = vector.broadcast %cst_150 : f32 to vector<8x64xf32>
    %358 = arith.addf %357, %356 : vector<8x64xf32>
    %359 = arith.divf %357, %358 : vector<8x64xf32>
    %360 = vector.extract_strided_slice %347 {offsets = [0, 128], sizes = [8, 64], strides = [1, 1]} : vector<8x256xf32> to vector<8x64xf32>
    %361 = math.tanh %360 : vector<8x64xf32>
    %362 = vector.extract_strided_slice %347 {offsets = [0, 192], sizes = [8, 64], strides = [1, 1]} : vector<8x256xf32> to vector<8x64xf32>
    %363 = arith.negf %362 : vector<8x64xf32>
    %364 = math.exp %363 : vector<8x64xf32>
    %cst_151 = arith.constant 1.000000e+00 : f32
    %365 = vector.broadcast %cst_151 : f32 to vector<8x64xf32>
    %366 = arith.addf %365, %364 : vector<8x64xf32>
    %367 = arith.divf %365, %366 : vector<8x64xf32>
    %368 = arith.mulf %359, %341 : vector<8x64xf32>
    %369 = arith.mulf %353, %361 : vector<8x64xf32>
    %370 = arith.addf %368, %369 : vector<8x64xf32>
    %371 = math.tanh %370 : vector<8x64xf32>
    %372 = arith.mulf %367, %371 : vector<8x64xf32>
    %373 = arith.index_cast %c7_i32 : i32 to index
    %c0_152 = arith.constant 0 : index
    %c0_153 = arith.constant 0 : index
    %374 = vector.load %arg2[%373, %c0_152, %c0_153] : memref<8x8x64xf32, #tpu.memory_space<vmem>>, vector<1x8x64xf32>
    %375 = vector.shape_cast %374 : vector<1x8x64xf32> to vector<8x64xf32>
    %cst_154 = arith.constant 5.000000e-01 : f32
    %376 = vector.broadcast %cst_154 : f32 to vector<8x64xf32>
    %377 = arith.cmpf ogt, %375, %376 : vector<8x64xf32>
    %378 = arith.select %377, %372, %340 : vector<8x64xi1>, vector<8x64xf32>
    %c0_155 = arith.constant 0 : index
    %c0_156 = arith.constant 0 : index
    %379 = vector.load %arg9[%c0_155, %c0_156] : memref<8x64xf32, #tpu.memory_space<vmem>>, vector<8x64xf32>
    tpu.vector_store %arg9[%c0_155, %c0_156], %378 {strides = array<i32>} : memref<8x64xf32, #tpu.memory_space<vmem>>, vector<8x64xf32>,
    %380 = arith.select %377, %370, %341 : vector<8x64xi1>, vector<8x64xf32>
    %c0_157 = arith.constant 0 : index
    %c0_158 = arith.constant 0 : index
    %381 = vector.load %arg10[%c0_157, %c0_158] : memref<8x64xf32, #tpu.memory_space<vmem>>, vector<8x64xf32>
    tpu.vector_store %arg10[%c0_157, %c0_158], %380 {strides = array<i32>} : memref<8x64xf32, #tpu.memory_space<vmem>>, vector<8x64xf32>,
    %cst_159 = arith.constant 0.000000e+00 : f32
    %382 = vector.broadcast %cst_159 : f32 to vector<8x64xf32>
    %383 = arith.select %377, %372, %382 : vector<8x64xi1>, vector<8x64xf32>
    %384 = arith.index_cast %c7_i32 : i32 to index
    %c0_160 = arith.constant 0 : index
    %c0_161 = arith.constant 0 : index
    %385 = vector.load %arg6[%384, %c0_160, %c0_161] : memref<8x8x64xf32, #tpu.memory_space<vmem>>, vector<1x8x64xf32>
    %386 = vector.shape_cast %385 : vector<1x8x64xf32> to vector<8x64xf32>
    %387 = vector.shape_cast %383 : vector<8x64xf32> to vector<1x8x64xf32>
    tpu.vector_store %arg6[%384, %c0_160, %c0_161], %387 {strides = array<i32>} : memref<8x8x64xf32, #tpu.memory_space<vmem>>, vector<1x8x64xf32>,
    %c8_i32 = arith.constant 8 : i32
    %c0_i32_162 = arith.constant 0 : i32
    %388 = arith.cmpi eq, %arg0, %c0_i32_162 : i32
    %389 = arith.extui %388 : i1 to i32
    %c0_i32_163 = arith.constant 0 : i32
    %390 = arith.cmpi ne, %389, %c0_i32_163 : i32
    scf.if %390 {
      %c0_164 = arith.constant 0 : index
      %c0_165 = arith.constant 0 : index
      %391 = vector.load %arg9[%c0_164, %c0_165] : memref<8x64xf32, #tpu.memory_space<vmem>>, vector<8x64xf32>
      %c0_166 = arith.constant 0 : index
      %c0_167 = arith.constant 0 : index
      %392 = vector.load %arg7[%c0_166, %c0_167] : memref<8x64xf32, #tpu.memory_space<vmem>>, vector<8x64xf32>
      tpu.vector_store %arg7[%c0_166, %c0_167], %391 {strides = array<i32>} : memref<8x64xf32, #tpu.memory_space<vmem>>, vector<8x64xf32>,
      %c0_168 = arith.constant 0 : index
      %c0_169 = arith.constant 0 : index
      %393 = vector.load %arg10[%c0_168, %c0_169] : memref<8x64xf32, #tpu.memory_space<vmem>>, vector<8x64xf32>
      %c0_170 = arith.constant 0 : index
      %c0_171 = arith.constant 0 : index
      %394 = vector.load %arg8[%c0_170, %c0_171] : memref<8x64xf32, #tpu.memory_space<vmem>>, vector<8x64xf32>
      tpu.vector_store %arg8[%c0_170, %c0_171], %393 {strides = array<i32>} : memref<8x64xf32, #tpu.memory_space<vmem>>, vector<8x64xf32>,
    } else {
    }
    return
  }
  func.func @transform_0(%arg0: i32) -> (i32, i32, i32) {
    %c0_i32 = arith.constant 0 : i32
    %c0_i32_0 = arith.constant 0 : i32
    %c0_i32_1 = arith.constant 0 : i32
    return %arg0, %c0_i32, %c0_i32_0 : i32, i32, i32
  }
  func.func @transform_1(%arg0: i32) -> (i32, i32, i32) {
    %c0_i32 = arith.constant 0 : i32
    %c0_i32_0 = arith.constant 0 : i32
    %c0_i32_1 = arith.constant 0 : i32
    return %arg0, %c0_i32, %c0_i32_0 : i32, i32, i32
  }
  func.func @transform_2(%arg0: i32) -> (i32, i32) {
    %c0_i32 = arith.constant 0 : i32
    %c0_i32_0 = arith.constant 0 : i32
    %c0_i32_1 = arith.constant 0 : i32
    return %c0_i32, %c0_i32_0 : i32, i32
  }
  func.func @transform_3(%arg0: i32) -> (i32, i32) {
    %c0_i32 = arith.constant 0 : i32
    %c0_i32_0 = arith.constant 0 : i32
    %c0_i32_1 = arith.constant 0 : i32
    return %c0_i32, %c0_i32_0 : i32, i32
  }
  func.func @transform_4(%arg0: i32) -> (i32, i32) {
    %c0_i32 = arith.constant 0 : i32
    %c0_i32_0 = arith.constant 0 : i32
    %c0_i32_1 = arith.constant 0 : i32
    return %c0_i32, %c0_i32_0 : i32, i32
  }
  func.func @transform_5(%arg0: i32) -> (i32, i32, i32) {
    %c0_i32 = arith.constant 0 : i32
    %c0_i32_0 = arith.constant 0 : i32
    %c0_i32_1 = arith.constant 0 : i32
    return %arg0, %c0_i32, %c0_i32_0 : i32, i32, i32
  }
  func.func @transform_6(%arg0: i32) -> (i32, i32) {
    %c0_i32 = arith.constant 0 : i32
    %c0_i32_0 = arith.constant 0 : i32
    %c0_i32_1 = arith.constant 0 : i32
    return %c0_i32, %c0_i32_0 : i32, i32
  }
  func.func @transform_7(%arg0: i32) -> (i32, i32) {
    %c0_i32 = arith.constant 0 : i32
    %c0_i32_0 = arith.constant 0 : i32
    %c0_i32_1 = arith.constant 0 : i32
    return %c0_i32, %c0_i32_0 : i32, i32
  }
}

module attributes {stable_mosaic.version = 11 : i64} {
  func.func @_bilstm_rec_kernel(%arg0: i32, %arg1: memref<8x8x256xf32, #tpu.memory_space<vmem>>, %arg2: memref<8x8x64xf32, #tpu.memory_space<vmem>>, %arg3: memref<64x256xbf16, #tpu.memory_space<vmem>>, %arg4: memref<8x64xf32, #tpu.memory_space<vmem>>, %arg5: memref<8x64xf32, #tpu.memory_space<vmem>>, %arg6: memref<8x8x64xf32, #tpu.memory_space<vmem>>, %arg7: memref<8x64xf32, #tpu.memory_space<vmem>>, %arg8: memref<8x64xf32, #tpu.memory_space<vmem>>, %arg9: memref<8x64xf32, #tpu.memory_space<vmem>>, %arg10: memref<8x64xf32, #tpu.memory_space<vmem>>) attributes {dimension_semantics = [#tpu.dimension_semantics<arbitrary>], iteration_bounds = array<i64: 1>, scalar_prefetch = 0 : i64, scratch_operands = 2 : i64, tpu.core_type = #tpu.core_type<tc>, window_params = [{transform_indices = @transform_0, window_bounds = array<i64: 8, 8, 256>}, {transform_indices = @transform_1, window_bounds = array<i64: 8, 8, 64>}, {pipeline_mode = #tpu.pipeline_mode<synchronous>, transform_indices = @transform_2, window_bounds = array<i64: 64, 256>}, {pipeline_mode = #tpu.pipeline_mode<synchronous>, transform_indices = @transform_3, window_bounds = array<i64: 8, 64>}, {pipeline_mode = #tpu.pipeline_mode<synchronous>, transform_indices = @transform_4, window_bounds = array<i64: 8, 64>}, {transform_indices = @transform_5, window_bounds = array<i64: 8, 8, 64>}, {pipeline_mode = #tpu.pipeline_mode<synchronous>, transform_indices = @transform_6, window_bounds = array<i64: 8, 64>}, {pipeline_mode = #tpu.pipeline_mode<synchronous>, transform_indices = @transform_7, window_bounds = array<i64: 8, 64>}]} {
    %c0_i32 = arith.constant 0 : i32
    %0 = arith.cmpi eq, %arg0, %c0_i32 : i32
    %1 = arith.extui %0 : i1 to i32
    %c0_i32_0 = arith.constant 0 : i32
    %2 = arith.cmpi ne, %1, %c0_i32_0 : i32
    scf.if %2 {
      %c0_164 = arith.constant 0 : index
      %c0_165 = arith.constant 0 : index
      %391 = vector.load %arg4[%c0_164, %c0_165] : memref<8x64xf32, #tpu.memory_space<vmem>>, vector<8x64xf32>
      %c0_166 = arith.constant 0 : index
      %c0_167 = arith.constant 0 : index
      %392 = vector.load %arg9[%c0_166, %c0_167] : memref<8x64xf32, #tpu.memory_space<vmem>>, vector<8x64xf32>
      tpu.vector_store %arg9[%c0_166, %c0_167], %391 {strides = array<i32>} : memref<8x64xf32, #tpu.memory_space<vmem>>, vector<8x64xf32>,
      %c0_168 = arith.constant 0 : index
      %c0_169 = arith.constant 0 : index
      %393 = vector.load %arg5[%c0_168, %c0_169] : memref<8x64xf32, #tpu.memory_space<vmem>>, vector<8x64xf32>
      %c0_170 = arith.constant 0 : index
      %c0_171 = arith.constant 0 : index
      %394 = vector.load %arg10[%c0_170, %c0_171] : memref<8x64xf32, #tpu.memory_space<vmem>>, vector<8x64xf32>
      tpu.vector_store %arg10[%c0_170, %c0_171], %393 {strides = array<i32>} : memref<8x64xf32, #tpu.memory_space<vmem>>, vector<8x64xf32>,
    } else {
    }
    %c0 = arith.constant 0 : index
    %c0_1 = arith.constant 0 : index
    %3 = vector.load %arg3[%c0, %c0_1] : memref<64x256xbf16, #tpu.memory_space<vmem>>, vector<64x256xbf16>
    %c0_i32_2 = arith.constant 0 : i32
    %c0_3 = arith.constant 0 : index
    %c0_4 = arith.constant 0 : index
    %4 = vector.load %arg9[%c0_3, %c0_4] : memref<8x64xf32, #tpu.memory_space<vmem>>, vector<8x64xf32>
    %c0_5 = arith.constant 0 : index
    %c0_6 = arith.constant 0 : index
    %5 = vector.load %arg10[%c0_5, %c0_6] : memref<8x64xf32, #tpu.memory_space<vmem>>, vector<8x64xf32>
    %6 = arith.index_cast %c0_i32_2 : i32 to index
    %c0_7 = arith.constant 0 : index
    %c0_8 = arith.constant 0 : index
    %7 = vector.load %arg1[%6, %c0_7, %c0_8] : memref<8x8x256xf32, #tpu.memory_space<vmem>>, vector<1x8x256xf32>
    %8 = vector.shape_cast %7 : vector<1x8x256xf32> to vector<8x256xf32>
    %9 = arith.truncf %4 : vector<8x64xf32> to vector<8x64xbf16>
    %cst = arith.constant dense<0.000000e+00> : vector<8x256xf32>
    %10 = tpu.matmul %9, %3, %cst {dimension_numbers = #tpu.dot_dimension_numbers<[1], [0], [0], [1], [0, 0, 1, 1], [], []>} : vector<8x64xbf16>, vector<64x256xbf16>, vector<8x256xf32> -> vector<8x256xf32>
    %11 = arith.addf %8, %10 : vector<8x256xf32>
    %12 = vector.extract_strided_slice %11 {offsets = [0, 0], sizes = [8, 64], strides = [1, 1]} : vector<8x256xf32> to vector<8x64xf32>
    %13 = arith.negf %12 : vector<8x64xf32>
    %14 = math.exp %13 : vector<8x64xf32>
    %cst_9 = arith.constant 1.000000e+00 : f32
    %15 = vector.broadcast %cst_9 : f32 to vector<8x64xf32>
    %16 = arith.addf %15, %14 : vector<8x64xf32>
    %17 = arith.divf %15, %16 : vector<8x64xf32>
    %18 = vector.extract_strided_slice %11 {offsets = [0, 64], sizes = [8, 64], strides = [1, 1]} : vector<8x256xf32> to vector<8x64xf32>
    %19 = arith.negf %18 : vector<8x64xf32>
    %20 = math.exp %19 : vector<8x64xf32>
    %cst_10 = arith.constant 1.000000e+00 : f32
    %21 = vector.broadcast %cst_10 : f32 to vector<8x64xf32>
    %22 = arith.addf %21, %20 : vector<8x64xf32>
    %23 = arith.divf %21, %22 : vector<8x64xf32>
    %24 = vector.extract_strided_slice %11 {offsets = [0, 128], sizes = [8, 64], strides = [1, 1]} : vector<8x256xf32> to vector<8x64xf32>
    %25 = math.tanh %24 : vector<8x64xf32>
    %26 = vector.extract_strided_slice %11 {offsets = [0, 192], sizes = [8, 64], strides = [1, 1]} : vector<8x256xf32> to vector<8x64xf32>
    %27 = arith.negf %26 : vector<8x64xf32>
    %28 = math.exp %27 : vector<8x64xf32>
    %cst_11 = arith.constant 1.000000e+00 : f32
    %29 = vector.broadcast %cst_11 : f32 to vector<8x64xf32>
    %30 = arith.addf %29, %28 : vector<8x64xf32>
    %31 = arith.divf %29, %30 : vector<8x64xf32>
    %32 = arith.mulf %23, %5 : vector<8x64xf32>
    %33 = arith.mulf %17, %25 : vector<8x64xf32>
    %34 = arith.addf %32, %33 : vector<8x64xf32>
    %35 = math.tanh %34 : vector<8x64xf32>
    %36 = arith.mulf %31, %35 : vector<8x64xf32>
    %37 = arith.index_cast %c0_i32_2 : i32 to index
    %c0_12 = arith.constant 0 : index
    %c0_13 = arith.constant 0 : index
    %38 = vector.load %arg2[%37, %c0_12, %c0_13] : memref<8x8x64xf32, #tpu.memory_space<vmem>>, vector<1x8x64xf32>
    %39 = vector.shape_cast %38 : vector<1x8x64xf32> to vector<8x64xf32>
    %cst_14 = arith.constant 5.000000e-01 : f32
    %40 = vector.broadcast %cst_14 : f32 to vector<8x64xf32>
    %41 = arith.cmpf ogt, %39, %40 : vector<8x64xf32>
    %42 = arith.select %41, %36, %4 : vector<8x64xi1>, vector<8x64xf32>
    %c0_15 = arith.constant 0 : index
    %c0_16 = arith.constant 0 : index
    %43 = vector.load %arg9[%c0_15, %c0_16] : memref<8x64xf32, #tpu.memory_space<vmem>>, vector<8x64xf32>
    tpu.vector_store %arg9[%c0_15, %c0_16], %42 {strides = array<i32>} : memref<8x64xf32, #tpu.memory_space<vmem>>, vector<8x64xf32>,
    %44 = arith.select %41, %34, %5 : vector<8x64xi1>, vector<8x64xf32>
    %c0_17 = arith.constant 0 : index
    %c0_18 = arith.constant 0 : index
    %45 = vector.load %arg10[%c0_17, %c0_18] : memref<8x64xf32, #tpu.memory_space<vmem>>, vector<8x64xf32>
    tpu.vector_store %arg10[%c0_17, %c0_18], %44 {strides = array<i32>} : memref<8x64xf32, #tpu.memory_space<vmem>>, vector<8x64xf32>,
    %cst_19 = arith.constant 0.000000e+00 : f32
    %46 = vector.broadcast %cst_19 : f32 to vector<8x64xf32>
    %47 = arith.select %41, %36, %46 : vector<8x64xi1>, vector<8x64xf32>
    %48 = arith.index_cast %c0_i32_2 : i32 to index
    %c0_20 = arith.constant 0 : index
    %c0_21 = arith.constant 0 : index
    %49 = vector.load %arg6[%48, %c0_20, %c0_21] : memref<8x8x64xf32, #tpu.memory_space<vmem>>, vector<1x8x64xf32>
    %50 = vector.shape_cast %49 : vector<1x8x64xf32> to vector<8x64xf32>
    %51 = vector.shape_cast %47 : vector<8x64xf32> to vector<1x8x64xf32>
    tpu.vector_store %arg6[%48, %c0_20, %c0_21], %51 {strides = array<i32>} : memref<8x8x64xf32, #tpu.memory_space<vmem>>, vector<1x8x64xf32>,
    %c1_i32 = arith.constant 1 : i32
    %c0_22 = arith.constant 0 : index
    %c0_23 = arith.constant 0 : index
    %52 = vector.load %arg9[%c0_22, %c0_23] : memref<8x64xf32, #tpu.memory_space<vmem>>, vector<8x64xf32>
    %c0_24 = arith.constant 0 : index
    %c0_25 = arith.constant 0 : index
    %53 = vector.load %arg10[%c0_24, %c0_25] : memref<8x64xf32, #tpu.memory_space<vmem>>, vector<8x64xf32>
    %54 = arith.index_cast %c1_i32 : i32 to index
    %c0_26 = arith.constant 0 : index
    %c0_27 = arith.constant 0 : index
    %55 = vector.load %arg1[%54, %c0_26, %c0_27] : memref<8x8x256xf32, #tpu.memory_space<vmem>>, vector<1x8x256xf32>
    %56 = vector.shape_cast %55 : vector<1x8x256xf32> to vector<8x256xf32>
    %57 = arith.truncf %52 : vector<8x64xf32> to vector<8x64xbf16>
    %cst_28 = arith.constant dense<0.000000e+00> : vector<8x256xf32>
    %58 = tpu.matmul %57, %3, %cst_28 {dimension_numbers = #tpu.dot_dimension_numbers<[1], [0], [0], [1], [0, 0, 1, 1], [], []>} : vector<8x64xbf16>, vector<64x256xbf16>, vector<8x256xf32> -> vector<8x256xf32>
    %59 = arith.addf %56, %58 : vector<8x256xf32>
    %60 = vector.extract_strided_slice %59 {offsets = [0, 0], sizes = [8, 64], strides = [1, 1]} : vector<8x256xf32> to vector<8x64xf32>
    %61 = arith.negf %60 : vector<8x64xf32>
    %62 = math.exp %61 : vector<8x64xf32>
    %cst_29 = arith.constant 1.000000e+00 : f32
    %63 = vector.broadcast %cst_29 : f32 to vector<8x64xf32>
    %64 = arith.addf %63, %62 : vector<8x64xf32>
    %65 = arith.divf %63, %64 : vector<8x64xf32>
    %66 = vector.extract_strided_slice %59 {offsets = [0, 64], sizes = [8, 64], strides = [1, 1]} : vector<8x256xf32> to vector<8x64xf32>
    %67 = arith.negf %66 : vector<8x64xf32>
    %68 = math.exp %67 : vector<8x64xf32>
    %cst_30 = arith.constant 1.000000e+00 : f32
    %69 = vector.broadcast %cst_30 : f32 to vector<8x64xf32>
    %70 = arith.addf %69, %68 : vector<8x64xf32>
    %71 = arith.divf %69, %70 : vector<8x64xf32>
    %72 = vector.extract_strided_slice %59 {offsets = [0, 128], sizes = [8, 64], strides = [1, 1]} : vector<8x256xf32> to vector<8x64xf32>
    %73 = math.tanh %72 : vector<8x64xf32>
    %74 = vector.extract_strided_slice %59 {offsets = [0, 192], sizes = [8, 64], strides = [1, 1]} : vector<8x256xf32> to vector<8x64xf32>
    %75 = arith.negf %74 : vector<8x64xf32>
    %76 = math.exp %75 : vector<8x64xf32>
    %cst_31 = arith.constant 1.000000e+00 : f32
    %77 = vector.broadcast %cst_31 : f32 to vector<8x64xf32>
    %78 = arith.addf %77, %76 : vector<8x64xf32>
    %79 = arith.divf %77, %78 : vector<8x64xf32>
    %80 = arith.mulf %71, %53 : vector<8x64xf32>
    %81 = arith.mulf %65, %73 : vector<8x64xf32>
    %82 = arith.addf %80, %81 : vector<8x64xf32>
    %83 = math.tanh %82 : vector<8x64xf32>
    %84 = arith.mulf %79, %83 : vector<8x64xf32>
    %85 = arith.index_cast %c1_i32 : i32 to index
    %c0_32 = arith.constant 0 : index
    %c0_33 = arith.constant 0 : index
    %86 = vector.load %arg2[%85, %c0_32, %c0_33] : memref<8x8x64xf32, #tpu.memory_space<vmem>>, vector<1x8x64xf32>
    %87 = vector.shape_cast %86 : vector<1x8x64xf32> to vector<8x64xf32>
    %cst_34 = arith.constant 5.000000e-01 : f32
    %88 = vector.broadcast %cst_34 : f32 to vector<8x64xf32>
    %89 = arith.cmpf ogt, %87, %88 : vector<8x64xf32>
    %90 = arith.select %89, %84, %52 : vector<8x64xi1>, vector<8x64xf32>
    %c0_35 = arith.constant 0 : index
    %c0_36 = arith.constant 0 : index
    %91 = vector.load %arg9[%c0_35, %c0_36] : memref<8x64xf32, #tpu.memory_space<vmem>>, vector<8x64xf32>
    tpu.vector_store %arg9[%c0_35, %c0_36], %90 {strides = array<i32>} : memref<8x64xf32, #tpu.memory_space<vmem>>, vector<8x64xf32>,
    %92 = arith.select %89, %82, %53 : vector<8x64xi1>, vector<8x64xf32>
    %c0_37 = arith.constant 0 : index
    %c0_38 = arith.constant 0 : index
    %93 = vector.load %arg10[%c0_37, %c0_38] : memref<8x64xf32, #tpu.memory_space<vmem>>, vector<8x64xf32>
    tpu.vector_store %arg10[%c0_37, %c0_38], %92 {strides = array<i32>} : memref<8x64xf32, #tpu.memory_space<vmem>>, vector<8x64xf32>,
    %cst_39 = arith.constant 0.000000e+00 : f32
    %94 = vector.broadcast %cst_39 : f32 to vector<8x64xf32>
    %95 = arith.select %89, %84, %94 : vector<8x64xi1>, vector<8x64xf32>
    %96 = arith.index_cast %c1_i32 : i32 to index
    %c0_40 = arith.constant 0 : index
    %c0_41 = arith.constant 0 : index
    %97 = vector.load %arg6[%96, %c0_40, %c0_41] : memref<8x8x64xf32, #tpu.memory_space<vmem>>, vector<1x8x64xf32>
    %98 = vector.shape_cast %97 : vector<1x8x64xf32> to vector<8x64xf32>
    %99 = vector.shape_cast %95 : vector<8x64xf32> to vector<1x8x64xf32>
    tpu.vector_store %arg6[%96, %c0_40, %c0_41], %99 {strides = array<i32>} : memref<8x8x64xf32, #tpu.memory_space<vmem>>, vector<1x8x64xf32>,
    %c2_i32 = arith.constant 2 : i32
    %c0_42 = arith.constant 0 : index
    %c0_43 = arith.constant 0 : index
    %100 = vector.load %arg9[%c0_42, %c0_43] : memref<8x64xf32, #tpu.memory_space<vmem>>, vector<8x64xf32>
    %c0_44 = arith.constant 0 : index
    %c0_45 = arith.constant 0 : index
    %101 = vector.load %arg10[%c0_44, %c0_45] : memref<8x64xf32, #tpu.memory_space<vmem>>, vector<8x64xf32>
    %102 = arith.index_cast %c2_i32 : i32 to index
    %c0_46 = arith.constant 0 : index
    %c0_47 = arith.constant 0 : index
    %103 = vector.load %arg1[%102, %c0_46, %c0_47] : memref<8x8x256xf32, #tpu.memory_space<vmem>>, vector<1x8x256xf32>
    %104 = vector.shape_cast %103 : vector<1x8x256xf32> to vector<8x256xf32>
    %105 = arith.truncf %100 : vector<8x64xf32> to vector<8x64xbf16>
    %cst_48 = arith.constant dense<0.000000e+00> : vector<8x256xf32>
    %106 = tpu.matmul %105, %3, %cst_48 {dimension_numbers = #tpu.dot_dimension_numbers<[1], [0], [0], [1], [0, 0, 1, 1], [], []>} : vector<8x64xbf16>, vector<64x256xbf16>, vector<8x256xf32> -> vector<8x256xf32>
    %107 = arith.addf %104, %106 : vector<8x256xf32>
    %108 = vector.extract_strided_slice %107 {offsets = [0, 0], sizes = [8, 64], strides = [1, 1]} : vector<8x256xf32> to vector<8x64xf32>
    %109 = arith.negf %108 : vector<8x64xf32>
    %110 = math.exp %109 : vector<8x64xf32>
    %cst_49 = arith.constant 1.000000e+00 : f32
    %111 = vector.broadcast %cst_49 : f32 to vector<8x64xf32>
    %112 = arith.addf %111, %110 : vector<8x64xf32>
    %113 = arith.divf %111, %112 : vector<8x64xf32>
    %114 = vector.extract_strided_slice %107 {offsets = [0, 64], sizes = [8, 64], strides = [1, 1]} : vector<8x256xf32> to vector<8x64xf32>
    %115 = arith.negf %114 : vector<8x64xf32>
    %116 = math.exp %115 : vector<8x64xf32>
    %cst_50 = arith.constant 1.000000e+00 : f32
    %117 = vector.broadcast %cst_50 : f32 to vector<8x64xf32>
    %118 = arith.addf %117, %116 : vector<8x64xf32>
    %119 = arith.divf %117, %118 : vector<8x64xf32>
    %120 = vector.extract_strided_slice %107 {offsets = [0, 128], sizes = [8, 64], strides = [1, 1]} : vector<8x256xf32> to vector<8x64xf32>
    %121 = math.tanh %120 : vector<8x64xf32>
    %122 = vector.extract_strided_slice %107 {offsets = [0, 192], sizes = [8, 64], strides = [1, 1]} : vector<8x256xf32> to vector<8x64xf32>
    %123 = arith.negf %122 : vector<8x64xf32>
    %124 = math.exp %123 : vector<8x64xf32>
    %cst_51 = arith.constant 1.000000e+00 : f32
    %125 = vector.broadcast %cst_51 : f32 to vector<8x64xf32>
    %126 = arith.addf %125, %124 : vector<8x64xf32>
    %127 = arith.divf %125, %126 : vector<8x64xf32>
    %128 = arith.mulf %119, %101 : vector<8x64xf32>
    %129 = arith.mulf %113, %121 : vector<8x64xf32>
    %130 = arith.addf %128, %129 : vector<8x64xf32>
    %131 = math.tanh %130 : vector<8x64xf32>
    %132 = arith.mulf %127, %131 : vector<8x64xf32>
    %133 = arith.index_cast %c2_i32 : i32 to index
    %c0_52 = arith.constant 0 : index
    %c0_53 = arith.constant 0 : index
    %134 = vector.load %arg2[%133, %c0_52, %c0_53] : memref<8x8x64xf32, #tpu.memory_space<vmem>>, vector<1x8x64xf32>
    %135 = vector.shape_cast %134 : vector<1x8x64xf32> to vector<8x64xf32>
    %cst_54 = arith.constant 5.000000e-01 : f32
    %136 = vector.broadcast %cst_54 : f32 to vector<8x64xf32>
    %137 = arith.cmpf ogt, %135, %136 : vector<8x64xf32>
    %138 = arith.select %137, %132, %100 : vector<8x64xi1>, vector<8x64xf32>
    %c0_55 = arith.constant 0 : index
    %c0_56 = arith.constant 0 : index
    %139 = vector.load %arg9[%c0_55, %c0_56] : memref<8x64xf32, #tpu.memory_space<vmem>>, vector<8x64xf32>
    tpu.vector_store %arg9[%c0_55, %c0_56], %138 {strides = array<i32>} : memref<8x64xf32, #tpu.memory_space<vmem>>, vector<8x64xf32>,
    %140 = arith.select %137, %130, %101 : vector<8x64xi1>, vector<8x64xf32>
    %c0_57 = arith.constant 0 : index
    %c0_58 = arith.constant 0 : index
    %141 = vector.load %arg10[%c0_57, %c0_58] : memref<8x64xf32, #tpu.memory_space<vmem>>, vector<8x64xf32>
    tpu.vector_store %arg10[%c0_57, %c0_58], %140 {strides = array<i32>} : memref<8x64xf32, #tpu.memory_space<vmem>>, vector<8x64xf32>,
    %cst_59 = arith.constant 0.000000e+00 : f32
    %142 = vector.broadcast %cst_59 : f32 to vector<8x64xf32>
    %143 = arith.select %137, %132, %142 : vector<8x64xi1>, vector<8x64xf32>
    %144 = arith.index_cast %c2_i32 : i32 to index
    %c0_60 = arith.constant 0 : index
    %c0_61 = arith.constant 0 : index
    %145 = vector.load %arg6[%144, %c0_60, %c0_61] : memref<8x8x64xf32, #tpu.memory_space<vmem>>, vector<1x8x64xf32>
    %146 = vector.shape_cast %145 : vector<1x8x64xf32> to vector<8x64xf32>
    %147 = vector.shape_cast %143 : vector<8x64xf32> to vector<1x8x64xf32>
    tpu.vector_store %arg6[%144, %c0_60, %c0_61], %147 {strides = array<i32>} : memref<8x8x64xf32, #tpu.memory_space<vmem>>, vector<1x8x64xf32>,
    %c3_i32 = arith.constant 3 : i32
    %c0_62 = arith.constant 0 : index
    %c0_63 = arith.constant 0 : index
    %148 = vector.load %arg9[%c0_62, %c0_63] : memref<8x64xf32, #tpu.memory_space<vmem>>, vector<8x64xf32>
    %c0_64 = arith.constant 0 : index
    %c0_65 = arith.constant 0 : index
    %149 = vector.load %arg10[%c0_64, %c0_65] : memref<8x64xf32, #tpu.memory_space<vmem>>, vector<8x64xf32>
    %150 = arith.index_cast %c3_i32 : i32 to index
    %c0_66 = arith.constant 0 : index
    %c0_67 = arith.constant 0 : index
    %151 = vector.load %arg1[%150, %c0_66, %c0_67] : memref<8x8x256xf32, #tpu.memory_space<vmem>>, vector<1x8x256xf32>
    %152 = vector.shape_cast %151 : vector<1x8x256xf32> to vector<8x256xf32>
    %153 = arith.truncf %148 : vector<8x64xf32> to vector<8x64xbf16>
    %cst_68 = arith.constant dense<0.000000e+00> : vector<8x256xf32>
    %154 = tpu.matmul %153, %3, %cst_68 {dimension_numbers = #tpu.dot_dimension_numbers<[1], [0], [0], [1], [0, 0, 1, 1], [], []>} : vector<8x64xbf16>, vector<64x256xbf16>, vector<8x256xf32> -> vector<8x256xf32>
    %155 = arith.addf %152, %154 : vector<8x256xf32>
    %156 = vector.extract_strided_slice %155 {offsets = [0, 0], sizes = [8, 64], strides = [1, 1]} : vector<8x256xf32> to vector<8x64xf32>
    %157 = arith.negf %156 : vector<8x64xf32>
    %158 = math.exp %157 : vector<8x64xf32>
    %cst_69 = arith.constant 1.000000e+00 : f32
    %159 = vector.broadcast %cst_69 : f32 to vector<8x64xf32>
    %160 = arith.addf %159, %158 : vector<8x64xf32>
    %161 = arith.divf %159, %160 : vector<8x64xf32>
    %162 = vector.extract_strided_slice %155 {offsets = [0, 64], sizes = [8, 64], strides = [1, 1]} : vector<8x256xf32> to vector<8x64xf32>
    %163 = arith.negf %162 : vector<8x64xf32>
    %164 = math.exp %163 : vector<8x64xf32>
    %cst_70 = arith.constant 1.000000e+00 : f32
    %165 = vector.broadcast %cst_70 : f32 to vector<8x64xf32>
    %166 = arith.addf %165, %164 : vector<8x64xf32>
    %167 = arith.divf %165, %166 : vector<8x64xf32>
    %168 = vector.extract_strided_slice %155 {offsets = [0, 128], sizes = [8, 64], strides = [1, 1]} : vector<8x256xf32> to vector<8x64xf32>
    %169 = math.tanh %168 : vector<8x64xf32>
    %170 = vector.extract_strided_slice %155 {offsets = [0, 192], sizes = [8, 64], strides = [1, 1]} : vector<8x256xf32> to vector<8x64xf32>
    %171 = arith.negf %170 : vector<8x64xf32>
    %172 = math.exp %171 : vector<8x64xf32>
    %cst_71 = arith.constant 1.000000e+00 : f32
    %173 = vector.broadcast %cst_71 : f32 to vector<8x64xf32>
    %174 = arith.addf %173, %172 : vector<8x64xf32>
    %175 = arith.divf %173, %174 : vector<8x64xf32>
    %176 = arith.mulf %167, %149 : vector<8x64xf32>
    %177 = arith.mulf %161, %169 : vector<8x64xf32>
    %178 = arith.addf %176, %177 : vector<8x64xf32>
    %179 = math.tanh %178 : vector<8x64xf32>
    %180 = arith.mulf %175, %179 : vector<8x64xf32>
    %181 = arith.index_cast %c3_i32 : i32 to index
    %c0_72 = arith.constant 0 : index
    %c0_73 = arith.constant 0 : index
    %182 = vector.load %arg2[%181, %c0_72, %c0_73] : memref<8x8x64xf32, #tpu.memory_space<vmem>>, vector<1x8x64xf32>
    %183 = vector.shape_cast %182 : vector<1x8x64xf32> to vector<8x64xf32>
    %cst_74 = arith.constant 5.000000e-01 : f32
    %184 = vector.broadcast %cst_74 : f32 to vector<8x64xf32>
    %185 = arith.cmpf ogt, %183, %184 : vector<8x64xf32>
    %186 = arith.select %185, %180, %148 : vector<8x64xi1>, vector<8x64xf32>
    %c0_75 = arith.constant 0 : index
    %c0_76 = arith.constant 0 : index
    %187 = vector.load %arg9[%c0_75, %c0_76] : memref<8x64xf32, #tpu.memory_space<vmem>>, vector<8x64xf32>
    tpu.vector_store %arg9[%c0_75, %c0_76], %186 {strides = array<i32>} : memref<8x64xf32, #tpu.memory_space<vmem>>, vector<8x64xf32>,
    %188 = arith.select %185, %178, %149 : vector<8x64xi1>, vector<8x64xf32>
    %c0_77 = arith.constant 0 : index
    %c0_78 = arith.constant 0 : index
    %189 = vector.load %arg10[%c0_77, %c0_78] : memref<8x64xf32, #tpu.memory_space<vmem>>, vector<8x64xf32>
    tpu.vector_store %arg10[%c0_77, %c0_78], %188 {strides = array<i32>} : memref<8x64xf32, #tpu.memory_space<vmem>>, vector<8x64xf32>,
    %cst_79 = arith.constant 0.000000e+00 : f32
    %190 = vector.broadcast %cst_79 : f32 to vector<8x64xf32>
    %191 = arith.select %185, %180, %190 : vector<8x64xi1>, vector<8x64xf32>
    %192 = arith.index_cast %c3_i32 : i32 to index
    %c0_80 = arith.constant 0 : index
    %c0_81 = arith.constant 0 : index
    %193 = vector.load %arg6[%192, %c0_80, %c0_81] : memref<8x8x64xf32, #tpu.memory_space<vmem>>, vector<1x8x64xf32>
    %194 = vector.shape_cast %193 : vector<1x8x64xf32> to vector<8x64xf32>
    %195 = vector.shape_cast %191 : vector<8x64xf32> to vector<1x8x64xf32>
    tpu.vector_store %arg6[%192, %c0_80, %c0_81], %195 {strides = array<i32>} : memref<8x8x64xf32, #tpu.memory_space<vmem>>, vector<1x8x64xf32>,
    %c4_i32 = arith.constant 4 : i32
    %c0_82 = arith.constant 0 : index
    %c0_83 = arith.constant 0 : index
    %196 = vector.load %arg9[%c0_82, %c0_83] : memref<8x64xf32, #tpu.memory_space<vmem>>, vector<8x64xf32>
    %c0_84 = arith.constant 0 : index
    %c0_85 = arith.constant 0 : index
    %197 = vector.load %arg10[%c0_84, %c0_85] : memref<8x64xf32, #tpu.memory_space<vmem>>, vector<8x64xf32>
    %198 = arith.index_cast %c4_i32 : i32 to index
    %c0_86 = arith.constant 0 : index
    %c0_87 = arith.constant 0 : index
    %199 = vector.load %arg1[%198, %c0_86, %c0_87] : memref<8x8x256xf32, #tpu.memory_space<vmem>>, vector<1x8x256xf32>
    %200 = vector.shape_cast %199 : vector<1x8x256xf32> to vector<8x256xf32>
    %201 = arith.truncf %196 : vector<8x64xf32> to vector<8x64xbf16>
    %cst_88 = arith.constant dense<0.000000e+00> : vector<8x256xf32>
    %202 = tpu.matmul %201, %3, %cst_88 {dimension_numbers = #tpu.dot_dimension_numbers<[1], [0], [0], [1], [0, 0, 1, 1], [], []>} : vector<8x64xbf16>, vector<64x256xbf16>, vector<8x256xf32> -> vector<8x256xf32>
    %203 = arith.addf %200, %202 : vector<8x256xf32>
    %204 = vector.extract_strided_slice %203 {offsets = [0, 0], sizes = [8, 64], strides = [1, 1]} : vector<8x256xf32> to vector<8x64xf32>
    %205 = arith.negf %204 : vector<8x64xf32>
    %206 = math.exp %205 : vector<8x64xf32>
    %cst_89 = arith.constant 1.000000e+00 : f32
    %207 = vector.broadcast %cst_89 : f32 to vector<8x64xf32>
    %208 = arith.addf %207, %206 : vector<8x64xf32>
    %209 = arith.divf %207, %208 : vector<8x64xf32>
    %210 = vector.extract_strided_slice %203 {offsets = [0, 64], sizes = [8, 64], strides = [1, 1]} : vector<8x256xf32> to vector<8x64xf32>
    %211 = arith.negf %210 : vector<8x64xf32>
    %212 = math.exp %211 : vector<8x64xf32>
    %cst_90 = arith.constant 1.000000e+00 : f32
    %213 = vector.broadcast %cst_90 : f32 to vector<8x64xf32>
    %214 = arith.addf %213, %212 : vector<8x64xf32>
    %215 = arith.divf %213, %214 : vector<8x64xf32>
    %216 = vector.extract_strided_slice %203 {offsets = [0, 128], sizes = [8, 64], strides = [1, 1]} : vector<8x256xf32> to vector<8x64xf32>
    %217 = math.tanh %216 : vector<8x64xf32>
    %218 = vector.extract_strided_slice %203 {offsets = [0, 192], sizes = [8, 64], strides = [1, 1]} : vector<8x256xf32> to vector<8x64xf32>
    %219 = arith.negf %218 : vector<8x64xf32>
    %220 = math.exp %219 : vector<8x64xf32>
    %cst_91 = arith.constant 1.000000e+00 : f32
    %221 = vector.broadcast %cst_91 : f32 to vector<8x64xf32>
    %222 = arith.addf %221, %220 : vector<8x64xf32>
    %223 = arith.divf %221, %222 : vector<8x64xf32>
    %224 = arith.mulf %215, %197 : vector<8x64xf32>
    %225 = arith.mulf %209, %217 : vector<8x64xf32>
    %226 = arith.addf %224, %225 : vector<8x64xf32>
    %227 = math.tanh %226 : vector<8x64xf32>
    %228 = arith.mulf %223, %227 : vector<8x64xf32>
    %229 = arith.index_cast %c4_i32 : i32 to index
    %c0_92 = arith.constant 0 : index
    %c0_93 = arith.constant 0 : index
    %230 = vector.load %arg2[%229, %c0_92, %c0_93] : memref<8x8x64xf32, #tpu.memory_space<vmem>>, vector<1x8x64xf32>
    %231 = vector.shape_cast %230 : vector<1x8x64xf32> to vector<8x64xf32>
    %cst_94 = arith.constant 5.000000e-01 : f32
    %232 = vector.broadcast %cst_94 : f32 to vector<8x64xf32>
    %233 = arith.cmpf ogt, %231, %232 : vector<8x64xf32>
    %234 = arith.select %233, %228, %196 : vector<8x64xi1>, vector<8x64xf32>
    %c0_95 = arith.constant 0 : index
    %c0_96 = arith.constant 0 : index
    %235 = vector.load %arg9[%c0_95, %c0_96] : memref<8x64xf32, #tpu.memory_space<vmem>>, vector<8x64xf32>
    tpu.vector_store %arg9[%c0_95, %c0_96], %234 {strides = array<i32>} : memref<8x64xf32, #tpu.memory_space<vmem>>, vector<8x64xf32>,
    %236 = arith.select %233, %226, %197 : vector<8x64xi1>, vector<8x64xf32>
    %c0_97 = arith.constant 0 : index
    %c0_98 = arith.constant 0 : index
    %237 = vector.load %arg10[%c0_97, %c0_98] : memref<8x64xf32, #tpu.memory_space<vmem>>, vector<8x64xf32>
    tpu.vector_store %arg10[%c0_97, %c0_98], %236 {strides = array<i32>} : memref<8x64xf32, #tpu.memory_space<vmem>>, vector<8x64xf32>,
    %cst_99 = arith.constant 0.000000e+00 : f32
    %238 = vector.broadcast %cst_99 : f32 to vector<8x64xf32>
    %239 = arith.select %233, %228, %238 : vector<8x64xi1>, vector<8x64xf32>
    %240 = arith.index_cast %c4_i32 : i32 to index
    %c0_100 = arith.constant 0 : index
    %c0_101 = arith.constant 0 : index
    %241 = vector.load %arg6[%240, %c0_100, %c0_101] : memref<8x8x64xf32, #tpu.memory_space<vmem>>, vector<1x8x64xf32>
    %242 = vector.shape_cast %241 : vector<1x8x64xf32> to vector<8x64xf32>
    %243 = vector.shape_cast %239 : vector<8x64xf32> to vector<1x8x64xf32>
    tpu.vector_store %arg6[%240, %c0_100, %c0_101], %243 {strides = array<i32>} : memref<8x8x64xf32, #tpu.memory_space<vmem>>, vector<1x8x64xf32>,
    %c5_i32 = arith.constant 5 : i32
    %c0_102 = arith.constant 0 : index
    %c0_103 = arith.constant 0 : index
    %244 = vector.load %arg9[%c0_102, %c0_103] : memref<8x64xf32, #tpu.memory_space<vmem>>, vector<8x64xf32>
    %c0_104 = arith.constant 0 : index
    %c0_105 = arith.constant 0 : index
    %245 = vector.load %arg10[%c0_104, %c0_105] : memref<8x64xf32, #tpu.memory_space<vmem>>, vector<8x64xf32>
    %246 = arith.index_cast %c5_i32 : i32 to index
    %c0_106 = arith.constant 0 : index
    %c0_107 = arith.constant 0 : index
    %247 = vector.load %arg1[%246, %c0_106, %c0_107] : memref<8x8x256xf32, #tpu.memory_space<vmem>>, vector<1x8x256xf32>
    %248 = vector.shape_cast %247 : vector<1x8x256xf32> to vector<8x256xf32>
    %249 = arith.truncf %244 : vector<8x64xf32> to vector<8x64xbf16>
    %cst_108 = arith.constant dense<0.000000e+00> : vector<8x256xf32>
    %250 = tpu.matmul %249, %3, %cst_108 {dimension_numbers = #tpu.dot_dimension_numbers<[1], [0], [0], [1], [0, 0, 1, 1], [], []>} : vector<8x64xbf16>, vector<64x256xbf16>, vector<8x256xf32> -> vector<8x256xf32>
    %251 = arith.addf %248, %250 : vector<8x256xf32>
    %252 = vector.extract_strided_slice %251 {offsets = [0, 0], sizes = [8, 64], strides = [1, 1]} : vector<8x256xf32> to vector<8x64xf32>
    %253 = arith.negf %252 : vector<8x64xf32>
    %254 = math.exp %253 : vector<8x64xf32>
    %cst_109 = arith.constant 1.000000e+00 : f32
    %255 = vector.broadcast %cst_109 : f32 to vector<8x64xf32>
    %256 = arith.addf %255, %254 : vector<8x64xf32>
    %257 = arith.divf %255, %256 : vector<8x64xf32>
    %258 = vector.extract_strided_slice %251 {offsets = [0, 64], sizes = [8, 64], strides = [1, 1]} : vector<8x256xf32> to vector<8x64xf32>
    %259 = arith.negf %258 : vector<8x64xf32>
    %260 = math.exp %259 : vector<8x64xf32>
    %cst_110 = arith.constant 1.000000e+00 : f32
    %261 = vector.broadcast %cst_110 : f32 to vector<8x64xf32>
    %262 = arith.addf %261, %260 : vector<8x64xf32>
    %263 = arith.divf %261, %262 : vector<8x64xf32>
    %264 = vector.extract_strided_slice %251 {offsets = [0, 128], sizes = [8, 64], strides = [1, 1]} : vector<8x256xf32> to vector<8x64xf32>
    %265 = math.tanh %264 : vector<8x64xf32>
    %266 = vector.extract_strided_slice %251 {offsets = [0, 192], sizes = [8, 64], strides = [1, 1]} : vector<8x256xf32> to vector<8x64xf32>
    %267 = arith.negf %266 : vector<8x64xf32>
    %268 = math.exp %267 : vector<8x64xf32>
    %cst_111 = arith.constant 1.000000e+00 : f32
    %269 = vector.broadcast %cst_111 : f32 to vector<8x64xf32>
    %270 = arith.addf %269, %268 : vector<8x64xf32>
    %271 = arith.divf %269, %270 : vector<8x64xf32>
    %272 = arith.mulf %263, %245 : vector<8x64xf32>
    %273 = arith.mulf %257, %265 : vector<8x64xf32>
    %274 = arith.addf %272, %273 : vector<8x64xf32>
    %275 = math.tanh %274 : vector<8x64xf32>
    %276 = arith.mulf %271, %275 : vector<8x64xf32>
    %277 = arith.index_cast %c5_i32 : i32 to index
    %c0_112 = arith.constant 0 : index
    %c0_113 = arith.constant 0 : index
    %278 = vector.load %arg2[%277, %c0_112, %c0_113] : memref<8x8x64xf32, #tpu.memory_space<vmem>>, vector<1x8x64xf32>
    %279 = vector.shape_cast %278 : vector<1x8x64xf32> to vector<8x64xf32>
    %cst_114 = arith.constant 5.000000e-01 : f32
    %280 = vector.broadcast %cst_114 : f32 to vector<8x64xf32>
    %281 = arith.cmpf ogt, %279, %280 : vector<8x64xf32>
    %282 = arith.select %281, %276, %244 : vector<8x64xi1>, vector<8x64xf32>
    %c0_115 = arith.constant 0 : index
    %c0_116 = arith.constant 0 : index
    %283 = vector.load %arg9[%c0_115, %c0_116] : memref<8x64xf32, #tpu.memory_space<vmem>>, vector<8x64xf32>
    tpu.vector_store %arg9[%c0_115, %c0_116], %282 {strides = array<i32>} : memref<8x64xf32, #tpu.memory_space<vmem>>, vector<8x64xf32>,
    %284 = arith.select %281, %274, %245 : vector<8x64xi1>, vector<8x64xf32>
    %c0_117 = arith.constant 0 : index
    %c0_118 = arith.constant 0 : index
    %285 = vector.load %arg10[%c0_117, %c0_118] : memref<8x64xf32, #tpu.memory_space<vmem>>, vector<8x64xf32>
    tpu.vector_store %arg10[%c0_117, %c0_118], %284 {strides = array<i32>} : memref<8x64xf32, #tpu.memory_space<vmem>>, vector<8x64xf32>,
    %cst_119 = arith.constant 0.000000e+00 : f32
    %286 = vector.broadcast %cst_119 : f32 to vector<8x64xf32>
    %287 = arith.select %281, %276, %286 : vector<8x64xi1>, vector<8x64xf32>
    %288 = arith.index_cast %c5_i32 : i32 to index
    %c0_120 = arith.constant 0 : index
    %c0_121 = arith.constant 0 : index
    %289 = vector.load %arg6[%288, %c0_120, %c0_121] : memref<8x8x64xf32, #tpu.memory_space<vmem>>, vector<1x8x64xf32>
    %290 = vector.shape_cast %289 : vector<1x8x64xf32> to vector<8x64xf32>
    %291 = vector.shape_cast %287 : vector<8x64xf32> to vector<1x8x64xf32>
    tpu.vector_store %arg6[%288, %c0_120, %c0_121], %291 {strides = array<i32>} : memref<8x8x64xf32, #tpu.memory_space<vmem>>, vector<1x8x64xf32>,
    %c6_i32 = arith.constant 6 : i32
    %c0_122 = arith.constant 0 : index
    %c0_123 = arith.constant 0 : index
    %292 = vector.load %arg9[%c0_122, %c0_123] : memref<8x64xf32, #tpu.memory_space<vmem>>, vector<8x64xf32>
    %c0_124 = arith.constant 0 : index
    %c0_125 = arith.constant 0 : index
    %293 = vector.load %arg10[%c0_124, %c0_125] : memref<8x64xf32, #tpu.memory_space<vmem>>, vector<8x64xf32>
    %294 = arith.index_cast %c6_i32 : i32 to index
    %c0_126 = arith.constant 0 : index
    %c0_127 = arith.constant 0 : index
    %295 = vector.load %arg1[%294, %c0_126, %c0_127] : memref<8x8x256xf32, #tpu.memory_space<vmem>>, vector<1x8x256xf32>
    %296 = vector.shape_cast %295 : vector<1x8x256xf32> to vector<8x256xf32>
    %297 = arith.truncf %292 : vector<8x64xf32> to vector<8x64xbf16>
    %cst_128 = arith.constant dense<0.000000e+00> : vector<8x256xf32>
    %298 = tpu.matmul %297, %3, %cst_128 {dimension_numbers = #tpu.dot_dimension_numbers<[1], [0], [0], [1], [0, 0, 1, 1], [], []>} : vector<8x64xbf16>, vector<64x256xbf16>, vector<8x256xf32> -> vector<8x256xf32>
    %299 = arith.addf %296, %298 : vector<8x256xf32>
    %300 = vector.extract_strided_slice %299 {offsets = [0, 0], sizes = [8, 64], strides = [1, 1]} : vector<8x256xf32> to vector<8x64xf32>
    %301 = arith.negf %300 : vector<8x64xf32>
    %302 = math.exp %301 : vector<8x64xf32>
    %cst_129 = arith.constant 1.000000e+00 : f32
    %303 = vector.broadcast %cst_129 : f32 to vector<8x64xf32>
    %304 = arith.addf %303, %302 : vector<8x64xf32>
    %305 = arith.divf %303, %304 : vector<8x64xf32>
    %306 = vector.extract_strided_slice %299 {offsets = [0, 64], sizes = [8, 64], strides = [1, 1]} : vector<8x256xf32> to vector<8x64xf32>
    %307 = arith.negf %306 : vector<8x64xf32>
    %308 = math.exp %307 : vector<8x64xf32>
    %cst_130 = arith.constant 1.000000e+00 : f32
    %309 = vector.broadcast %cst_130 : f32 to vector<8x64xf32>
    %310 = arith.addf %309, %308 : vector<8x64xf32>
    %311 = arith.divf %309, %310 : vector<8x64xf32>
    %312 = vector.extract_strided_slice %299 {offsets = [0, 128], sizes = [8, 64], strides = [1, 1]} : vector<8x256xf32> to vector<8x64xf32>
    %313 = math.tanh %312 : vector<8x64xf32>
    %314 = vector.extract_strided_slice %299 {offsets = [0, 192], sizes = [8, 64], strides = [1, 1]} : vector<8x256xf32> to vector<8x64xf32>
    %315 = arith.negf %314 : vector<8x64xf32>
    %316 = math.exp %315 : vector<8x64xf32>
    %cst_131 = arith.constant 1.000000e+00 : f32
    %317 = vector.broadcast %cst_131 : f32 to vector<8x64xf32>
    %318 = arith.addf %317, %316 : vector<8x64xf32>
    %319 = arith.divf %317, %318 : vector<8x64xf32>
    %320 = arith.mulf %311, %293 : vector<8x64xf32>
    %321 = arith.mulf %305, %313 : vector<8x64xf32>
    %322 = arith.addf %320, %321 : vector<8x64xf32>
    %323 = math.tanh %322 : vector<8x64xf32>
    %324 = arith.mulf %319, %323 : vector<8x64xf32>
    %325 = arith.index_cast %c6_i32 : i32 to index
    %c0_132 = arith.constant 0 : index
    %c0_133 = arith.constant 0 : index
    %326 = vector.load %arg2[%325, %c0_132, %c0_133] : memref<8x8x64xf32, #tpu.memory_space<vmem>>, vector<1x8x64xf32>
    %327 = vector.shape_cast %326 : vector<1x8x64xf32> to vector<8x64xf32>
    %cst_134 = arith.constant 5.000000e-01 : f32
    %328 = vector.broadcast %cst_134 : f32 to vector<8x64xf32>
    %329 = arith.cmpf ogt, %327, %328 : vector<8x64xf32>
    %330 = arith.select %329, %324, %292 : vector<8x64xi1>, vector<8x64xf32>
    %c0_135 = arith.constant 0 : index
    %c0_136 = arith.constant 0 : index
    %331 = vector.load %arg9[%c0_135, %c0_136] : memref<8x64xf32, #tpu.memory_space<vmem>>, vector<8x64xf32>
    tpu.vector_store %arg9[%c0_135, %c0_136], %330 {strides = array<i32>} : memref<8x64xf32, #tpu.memory_space<vmem>>, vector<8x64xf32>,
    %332 = arith.select %329, %322, %293 : vector<8x64xi1>, vector<8x64xf32>
    %c0_137 = arith.constant 0 : index
    %c0_138 = arith.constant 0 : index
    %333 = vector.load %arg10[%c0_137, %c0_138] : memref<8x64xf32, #tpu.memory_space<vmem>>, vector<8x64xf32>
    tpu.vector_store %arg10[%c0_137, %c0_138], %332 {strides = array<i32>} : memref<8x64xf32, #tpu.memory_space<vmem>>, vector<8x64xf32>,
    %cst_139 = arith.constant 0.000000e+00 : f32
    %334 = vector.broadcast %cst_139 : f32 to vector<8x64xf32>
    %335 = arith.select %329, %324, %334 : vector<8x64xi1>, vector<8x64xf32>
    %336 = arith.index_cast %c6_i32 : i32 to index
    %c0_140 = arith.constant 0 : index
    %c0_141 = arith.constant 0 : index
    %337 = vector.load %arg6[%336, %c0_140, %c0_141] : memref<8x8x64xf32, #tpu.memory_space<vmem>>, vector<1x8x64xf32>
    %338 = vector.shape_cast %337 : vector<1x8x64xf32> to vector<8x64xf32>
    %339 = vector.shape_cast %335 : vector<8x64xf32> to vector<1x8x64xf32>
    tpu.vector_store %arg6[%336, %c0_140, %c0_141], %339 {strides = array<i32>} : memref<8x8x64xf32, #tpu.memory_space<vmem>>, vector<1x8x64xf32>,
    %c7_i32 = arith.constant 7 : i32
    %c0_142 = arith.constant 0 : index
    %c0_143 = arith.constant 0 : index
    %340 = vector.load %arg9[%c0_142, %c0_143] : memref<8x64xf32, #tpu.memory_space<vmem>>, vector<8x64xf32>
    %c0_144 = arith.constant 0 : index
    %c0_145 = arith.constant 0 : index
    %341 = vector.load %arg10[%c0_144, %c0_145] : memref<8x64xf32, #tpu.memory_space<vmem>>, vector<8x64xf32>
    %342 = arith.index_cast %c7_i32 : i32 to index
    %c0_146 = arith.constant 0 : index
    %c0_147 = arith.constant 0 : index
    %343 = vector.load %arg1[%342, %c0_146, %c0_147] : memref<8x8x256xf32, #tpu.memory_space<vmem>>, vector<1x8x256xf32>
    %344 = vector.shape_cast %343 : vector<1x8x256xf32> to vector<8x256xf32>
    %345 = arith.truncf %340 : vector<8x64xf32> to vector<8x64xbf16>
    %cst_148 = arith.constant dense<0.000000e+00> : vector<8x256xf32>
    %346 = tpu.matmul %345, %3, %cst_148 {dimension_numbers = #tpu.dot_dimension_numbers<[1], [0], [0], [1], [0, 0, 1, 1], [], []>} : vector<8x64xbf16>, vector<64x256xbf16>, vector<8x256xf32> -> vector<8x256xf32>
    %347 = arith.addf %344, %346 : vector<8x256xf32>
    %348 = vector.extract_strided_slice %347 {offsets = [0, 0], sizes = [8, 64], strides = [1, 1]} : vector<8x256xf32> to vector<8x64xf32>
    %349 = arith.negf %348 : vector<8x64xf32>
    %350 = math.exp %349 : vector<8x64xf32>
    %cst_149 = arith.constant 1.000000e+00 : f32
    %351 = vector.broadcast %cst_149 : f32 to vector<8x64xf32>
    %352 = arith.addf %351, %350 : vector<8x64xf32>
    %353 = arith.divf %351, %352 : vector<8x64xf32>
    %354 = vector.extract_strided_slice %347 {offsets = [0, 64], sizes = [8, 64], strides = [1, 1]} : vector<8x256xf32> to vector<8x64xf32>
    %355 = arith.negf %354 : vector<8x64xf32>
    %356 = math.exp %355 : vector<8x64xf32>
    %cst_150 = arith.constant 1.000000e+00 : f32
    %357 = vector.broadcast %cst_150 : f32 to vector<8x64xf32>
    %358 = arith.addf %357, %356 : vector<8x64xf32>
    %359 = arith.divf %357, %358 : vector<8x64xf32>
    %360 = vector.extract_strided_slice %347 {offsets = [0, 128], sizes = [8, 64], strides = [1, 1]} : vector<8x256xf32> to vector<8x64xf32>
    %361 = math.tanh %360 : vector<8x64xf32>
    %362 = vector.extract_strided_slice %347 {offsets = [0, 192], sizes = [8, 64], strides = [1, 1]} : vector<8x256xf32> to vector<8x64xf32>
    %363 = arith.negf %362 : vector<8x64xf32>
    %364 = math.exp %363 : vector<8x64xf32>
    %cst_151 = arith.constant 1.000000e+00 : f32
    %365 = vector.broadcast %cst_151 : f32 to vector<8x64xf32>
    %366 = arith.addf %365, %364 : vector<8x64xf32>
    %367 = arith.divf %365, %366 : vector<8x64xf32>
    %368 = arith.mulf %359, %341 : vector<8x64xf32>
    %369 = arith.mulf %353, %361 : vector<8x64xf32>
    %370 = arith.addf %368, %369 : vector<8x64xf32>
    %371 = math.tanh %370 : vector<8x64xf32>
    %372 = arith.mulf %367, %371 : vector<8x64xf32>
    %373 = arith.index_cast %c7_i32 : i32 to index
    %c0_152 = arith.constant 0 : index
    %c0_153 = arith.constant 0 : index
    %374 = vector.load %arg2[%373, %c0_152, %c0_153] : memref<8x8x64xf32, #tpu.memory_space<vmem>>, vector<1x8x64xf32>
    %375 = vector.shape_cast %374 : vector<1x8x64xf32> to vector<8x64xf32>
    %cst_154 = arith.constant 5.000000e-01 : f32
    %376 = vector.broadcast %cst_154 : f32 to vector<8x64xf32>
    %377 = arith.cmpf ogt, %375, %376 : vector<8x64xf32>
    %378 = arith.select %377, %372, %340 : vector<8x64xi1>, vector<8x64xf32>
    %c0_155 = arith.constant 0 : index
    %c0_156 = arith.constant 0 : index
    %379 = vector.load %arg9[%c0_155, %c0_156] : memref<8x64xf32, #tpu.memory_space<vmem>>, vector<8x64xf32>
    tpu.vector_store %arg9[%c0_155, %c0_156], %378 {strides = array<i32>} : memref<8x64xf32, #tpu.memory_space<vmem>>, vector<8x64xf32>,
    %380 = arith.select %377, %370, %341 : vector<8x64xi1>, vector<8x64xf32>
    %c0_157 = arith.constant 0 : index
    %c0_158 = arith.constant 0 : index
    %381 = vector.load %arg10[%c0_157, %c0_158] : memref<8x64xf32, #tpu.memory_space<vmem>>, vector<8x64xf32>
    tpu.vector_store %arg10[%c0_157, %c0_158], %380 {strides = array<i32>} : memref<8x64xf32, #tpu.memory_space<vmem>>, vector<8x64xf32>,
    %cst_159 = arith.constant 0.000000e+00 : f32
    %382 = vector.broadcast %cst_159 : f32 to vector<8x64xf32>
    %383 = arith.select %377, %372, %382 : vector<8x64xi1>, vector<8x64xf32>
    %384 = arith.index_cast %c7_i32 : i32 to index
    %c0_160 = arith.constant 0 : index
    %c0_161 = arith.constant 0 : index
    %385 = vector.load %arg6[%384, %c0_160, %c0_161] : memref<8x8x64xf32, #tpu.memory_space<vmem>>, vector<1x8x64xf32>
    %386 = vector.shape_cast %385 : vector<1x8x64xf32> to vector<8x64xf32>
    %387 = vector.shape_cast %383 : vector<8x64xf32> to vector<1x8x64xf32>
    tpu.vector_store %arg6[%384, %c0_160, %c0_161], %387 {strides = array<i32>} : memref<8x8x64xf32, #tpu.memory_space<vmem>>, vector<1x8x64xf32>,
    %c8_i32 = arith.constant 8 : i32
    %c0_i32_162 = arith.constant 0 : i32
    %388 = arith.cmpi eq, %arg0, %c0_i32_162 : i32
    %389 = arith.extui %388 : i1 to i32
    %c0_i32_163 = arith.constant 0 : i32
    %390 = arith.cmpi ne, %389, %c0_i32_163 : i32
    scf.if %390 {
      %c0_164 = arith.constant 0 : index
      %c0_165 = arith.constant 0 : index
      %391 = vector.load %arg9[%c0_164, %c0_165] : memref<8x64xf32, #tpu.memory_space<vmem>>, vector<8x64xf32>
      %c0_166 = arith.constant 0 : index
      %c0_167 = arith.constant 0 : index
      %392 = vector.load %arg7[%c0_166, %c0_167] : memref<8x64xf32, #tpu.memory_space<vmem>>, vector<8x64xf32>
      tpu.vector_store %arg7[%c0_166, %c0_167], %391 {strides = array<i32>} : memref<8x64xf32, #tpu.memory_space<vmem>>, vector<8x64xf32>,
      %c0_168 = arith.constant 0 : index
      %c0_169 = arith.constant 0 : index
      %393 = vector.load %arg10[%c0_168, %c0_169] : memref<8x64xf32, #tpu.memory_space<vmem>>, vector<8x64xf32>
      %c0_170 = arith.constant 0 : index
      %c0_171 = arith.constant 0 : index
      %394 = vector.load %arg8[%c0_170, %c0_171] : memref<8x64xf32, #tpu.memory_space<vmem>>, vector<8x64xf32>
      tpu.vector_store %arg8[%c0_170, %c0_171], %393 {strides = array<i32>} : memref<8x64xf32, #tpu.memory_space<vmem>>, vector<8x64xf32>,
    } else {
    }
    return
  }
  func.func @transform_0(%arg0: i32) -> (i32, i32, i32) {
    %c0_i32 = arith.constant 0 : i32
    %c0_i32_0 = arith.constant 0 : i32
    %c0_i32_1 = arith.constant 0 : i32
    return %arg0, %c0_i32, %c0_i32_0 : i32, i32, i32
  }
  func.func @transform_1(%arg0: i32) -> (i32, i32, i32) {
    %c0_i32 = arith.constant 0 : i32
    %c0_i32_0 = arith.constant 0 : i32
    %c0_i32_1 = arith.constant 0 : i32
    return %arg0, %c0_i32, %c0_i32_0 : i32, i32, i32
  }
  func.func @transform_2(%arg0: i32) -> (i32, i32) {
    %c0_i32 = arith.constant 0 : i32
    %c0_i32_0 = arith.constant 0 : i32
    %c0_i32_1 = arith.constant 0 : i32
    return %c0_i32, %c0_i32_0 : i32, i32
  }
  func.func @transform_3(%arg0: i32) -> (i32, i32) {
    %c0_i32 = arith.constant 0 : i32
    %c0_i32_0 = arith.constant 0 : i32
    %c0_i32_1 = arith.constant 0 : i32
    return %c0_i32, %c0_i32_0 : i32, i32
  }
  func.func @transform_4(%arg0: i32) -> (i32, i32) {
    %c0_i32 = arith.constant 0 : i32
    %c0_i32_0 = arith.constant 0 : i32
    %c0_i32_1 = arith.constant 0 : i32
    return %c0_i32, %c0_i32_0 : i32, i32
  }
  func.func @transform_5(%arg0: i32) -> (i32, i32, i32) {
    %c0_i32 = arith.constant 0 : i32
    %c0_i32_0 = arith.constant 0 : i32
    %c0_i32_1 = arith.constant 0 : i32
    return %arg0, %c0_i32, %c0_i32_0 : i32, i32, i32
  }
  func.func @transform_6(%arg0: i32) -> (i32, i32) {
    %c0_i32 = arith.constant 0 : i32
    %c0_i32_0 = arith.constant 0 : i32
    %c0_i32_1 = arith.constant 0 : i32
    return %c0_i32, %c0_i32_0 : i32, i32
  }
  func.func @transform_7(%arg0: i32) -> (i32, i32) {
    %c0_i32 = arith.constant 0 : i32
    %c0_i32_0 = arith.constant 0 : i32
    %c0_i32_1 = arith.constant 0 : i32
    return %c0_i32, %c0_i32_0 : i32, i32
  }
}

</mosaic_0001>

<llo_original>
// kernel: bicond_lstm_forward.2
$region0: #{bicond_lstm_forward.2}
  #allocation0 [shape = 'u32[]', space=smem, size = 0x4, offset = 0x4, fixed_abs, tag = 'smem constant byte address 0x4 - core index']
  #allocation1 [shape = 'u32[144,128]{1,0:T(1,128)}', space=vmem, size = 0x12000, scoped, tag = 'internal scratch']
  #allocation2 [shape = 'f32[8,64]{1,0:T(8,128)}', space=vmem, size = 0x1000, scoped, tag = 'scratch operand']
  #allocation3 [shape = 'f32[8,64]{1,0:T(8,128)}', space=vmem, size = 0x1000, scoped, tag = 'scratch operand']
  %s0 = inlined_call_operand.vmem [shape: f32[8,8,256], index: 0, kind: input, shape index: {}]
  %s1 = inlined_call_operand.vmem [shape: f32[8,8,64], index: 1, kind: input, shape index: {}]
  %s2 = inlined_call_operand.vmem [shape: bf16[64,256], index: 2, kind: input, shape index: {}]
  %s3 = inlined_call_operand.vmem [shape: f32[8,64], index: 3, kind: input, shape index: {}, may-alias: {3,4}]
  %s4 = inlined_call_operand.vmem [shape: f32[8,64], index: 4, kind: input, shape index: {}, may-alias: {3,4}]
  %s5 = inlined_call_operand.vmem [shape: f32[8,8,64], index: 5, kind: output, shape index: {0}]
  %s6 = inlined_call_operand.vmem [shape: f32[8,64], index: 6, kind: output, shape index: {1}]
  %s7 = inlined_call_operand.vmem [shape: f32[8,64], index: 7, kind: output, shape index: {2}]
  %8 = xla_tuple %s5, %s6, %s7
  %s9 = sld [smem:[#allocation0]]
  $region54: #{bicond_lstm_forward.2} parent=0
    _
  %s11 = ssub.s32 1, %s9
  %s12 = scalar_select 0, %s11, %s9
  // Predicated region
  $region2: #{bicond_lstm_forward.2} parent=0 // pred_check
    _
  $region3: #{bicond_lstm_forward.2} parent=0 // pred_check_branch
    %14 = sbr.rel (0) target = $region5
  $region4: #{bicond_lstm_forward.2} parent=0 // pred_region
    _
  $region5: #{bicond_lstm_forward.2} parent=0 // pred_fallthru
    _
  // Predicated region
  $region6: #{bicond_lstm_forward.2} parent=0 // pred_check
    _
  $region7: #{bicond_lstm_forward.2} parent=0 // pred_check_branch
    %16 = sbr.rel (0) target = $region9
  $region8: #{bicond_lstm_forward.2} parent=0 // pred_region
    _
  $region9: #{bicond_lstm_forward.2} parent=0 // pred_fallthru
    _
  // Predicated region
  $region10: #{bicond_lstm_forward.2} parent=0 // pred_check
    _
  $region11: #{bicond_lstm_forward.2} parent=0 // pred_check_branch
    %18 = sbr.rel (0) target = $region13
  $region12: #{bicond_lstm_forward.2} parent=0 // pred_region
    _
  $region13: #{bicond_lstm_forward.2} parent=0 // pred_fallthru
    _
  // Predicated region
  $region14: #{bicond_lstm_forward.2} parent=0 // pred_check
    _
  $region15: #{bicond_lstm_forward.2} parent=0 // pred_check_branch
    %20 = sbr.rel (0) target = $region17
  $region16: #{bicond_lstm_forward.2} parent=0 // pred_region
    _
  $region17: #{bicond_lstm_forward.2} parent=0 // pred_fallthru
    _
  // Predicated region
  $region18: #{bicond_lstm_forward.2} parent=0 // pred_check
    _
  $region19: #{bicond_lstm_forward.2} parent=0 // pred_check_branch
    %22 = sbr.rel (0) target = $region21
  $region20: #{bicond_lstm_forward.2} parent=0 // pred_region
    _
  $region21: #{bicond_lstm_forward.2} parent=0 // pred_fallthru
    _
  %p24 = scmp.eq.s32.totalorder 0, 0
  // Predicated region
  $region22: #{bicond_lstm_forward.2} parent=0 // pred_check
    %p25 = pneg %p24
  $region23: #{bicond_lstm_forward.2} parent=0 // pred_check_branch
    %27 = sbr.rel (%p25) target = $region25
  $region24: #{bicond_lstm_forward.2} parent=0 // pred_region
    %v28 = vld [vmem:[%s3] sm:$0xff]
    %vm29 = vcmask 523264
    %30 = vst.msk [vmem:[#allocation2] sm:$0xff] %vm29, %v28
    %v31 = vld [vmem:[%s4] sm:$0xff]
    %32 = vst.msk [vmem:[#allocation3] sm:$0xff] %vm29, %v31
  $region25: #{bicond_lstm_forward.2} parent=0 // pred_fallthru
    _
  %v33 = vld [vmem:[%s2] sm:$0xff]
  %v34 = vld [vmem:[%s2 + $0x8] sm:$0xff]
  %v35 = vld [vmem:[%s2 + $0x10] sm:$0xff]
  %v36 = vld [vmem:[%s2 + $0x18] sm:$0xff]
  %v37 = vld [vmem:[%s2 + $0x20] sm:$0xff]
  %v38 = vld [vmem:[%s2 + $0x28] sm:$0xff]
  %v39 = vld [vmem:[%s2 + $0x30] sm:$0xff]
  %v40 = vld [vmem:[%s2 + $0x38] sm:$0xff]
  %v41 = vld [vmem:[#allocation2] sm:$0xff]
  %v42 = vld [vmem:[#allocation3] sm:$0xff]
  %v43 = vld [vmem:[%s0] sm:$0xff]
  %v44 = vld [vmem:[%s0 + $0x8] sm:$0xff]
  %v45 = vpack.c.bf16 %v41, %v41
  %v54 = vunpack.c.l.b16 %v33
  %v55 = vunpack.c.h.b16 %v33
  %v56 = vunpack.c.l.b16 %v34
  %v57 = vunpack.c.h.b16 %v34
  %v58 = vunpack.c.l.b16 %v35
  %v59 = vunpack.c.h.b16 %v35
  %v60 = vunpack.c.l.b16 %v36
  %v61 = vunpack.c.h.b16 %v36
  %v62 = vunpack.c.l.b16 %v37
  %v63 = vunpack.c.h.b16 %v37
  %v64 = vunpack.c.l.b16 %v38
  %v65 = vunpack.c.h.b16 %v38
  %v66 = vunpack.c.l.b16 %v39
  %v67 = vunpack.c.h.b16 %v39
  %v68 = vunpack.c.l.b16 %v40
  %v69 = vunpack.c.h.b16 %v40
  %v70 = vpack.c.b16 %v56, %v54
  %v71 = vpack.c.b16 %v57, %v55
  %v72 = vpack.c.b16 %v60, %v58
  %v73 = vpack.c.b16 %v61, %v59
  %v74 = vpack.c.b16 %v64, %v62
  %v75 = vpack.c.b16 %v65, %v63
  %v76 = vpack.c.b16 %v68, %v66
  %v77 = vpack.c.b16 %v69, %v67
  %vm86 = vcmask 523264
  %v88 = vsel %vm86, %v45, 0
  %90 = vmatprep.subr.bf16.mxu0 %v71
  %91 = vmatpush1.bf16.msra.mxu0 %v70
  %92 = vmatprep.subr.bf16.mxu0 %v73
  %93 = vmatpush1.bf16.msra.mxu0 %v72
  %94 = vmatprep.subr.bf16.mxu0 %v75
  %95 = vmatpush1.bf16.msra.mxu0 %v74
  %96 = vmatprep.subr.bf16.mxu0 %v77
  %97 = vmatpush1.bf16.msra.mxu0 %v76
  %98 = vmatprep.subr.bf16.mxu0 0
  %99 = vmatpush1.bf16.msra.mxu0 0
  %100 = vmatprep.subr.bf16.mxu0 0
  %101 = vmatpush1.bf16.msra.mxu0 0
  %102 = vmatprep.subr.bf16.mxu0 0
  %103 = vmatpush1.bf16.msra.mxu0 0
  %104 = vmatprep.subr.bf16.mxu0 0
  %105 = vmatpush1.bf16.msra.mxu0 0
  %106 = vmatprep.subr.bf16.mxu0 0
  %107 = vmatpush1.bf16.msra.mxu0 0
  %108 = vmatprep.subr.bf16.mxu0 0
  %109 = vmatpush1.bf16.msra.mxu0 0
  %110 = vmatprep.subr.bf16.mxu0 0
  %111 = vmatpush1.bf16.msra.mxu0 0
  %112 = vmatprep.subr.bf16.mxu0 0
  %113 = vmatpush1.bf16.msra.mxu0 0
  %114 = vmatprep.subr.bf16.mxu0 0
  %115 = vmatpush1.bf16.msra.mxu0 0
  %116 = vmatprep.subr.bf16.mxu0 0
  %117 = vmatpush1.bf16.msra.mxu0 0
  %118 = vmatprep.subr.bf16.mxu0 0
  %119 = vmatpush1.bf16.msra.mxu0 0
  %120 = vmatprep.subr.bf16.mxu0 0
  %121 = vmatpush1.bf16.msra.mxu0 0
  %122 = vmatprep.mubr.bf16.mxu0 0
  %123 = vmatmul.mubr.bf16.gmra.mrb[0].mxu0 %v88
  %v124 = vpop.f32.mrb[0].mxu0
  %v125 = vadd.f32 0.0, %v124
  %v126 = vpop.f32.mrb[0].mxu0
  %v127 = vadd.f32 0.0, %v126
  %v128 = vpop.f32.mrb[0].mxu0
  %v129 = vpop.f32.mrb[0].mxu0
  %130 = vdwg.mxu0
  %v131 = vadd.f32 %v43, %v125
  %v132 = vadd.f32 %v44, %v127
  %v133 = vxor.u32 %v131, 2147483648
  %v134 = vmul.f32 %v133, 1.442695
  %v135 = vpow.pop %v134
  %v136 = vadd.f32 %v135, 1.0
  %v137 = vrcp.pop %v136
  %v138 = vmul.f32 1.0, %v137
  %v139 = vtanh.pop %v132
  %v140 = vxor.u32 %v132, 2147483648
  %v141 = vmul.f32 %v140, 1.442695
  %v142 = vpow.pop %v141
  %v143 = vadd.f32 %v142, 1.0
  %v144 = vrcp.pop %v143
  %v145 = vmul.f32 1.0, %v144
  %147 = vrot.lane.b32.xlu0 %v42, 64
  %v148 = vpop.permute.xlu0 %147
  %v150 = vmul.f32 %v138, %v148
  %v151 = vmul.f32 %v138, %v139
  %153 = vrot.lane.b32.xlu0 %v151, 64
  %v154 = vpop.permute.xlu0 %153
  %v156 = vadd.f32 %v150, %v154
  %v157 = vtanh.pop %v156
  %v158 = vmul.f32 %v145, %v157
  %v159 = vld [vmem:[%s1] sm:$0xff]
  %vm160 = vcmp.gt.f32.partialorder %v159, 0.5
  %162 = vrot.lane.b32.xlu0 %v158, 64
  %v163 = vpop.permute.xlu0 %162
  %v165 = vsel %vm160, %v163, %v41
  %166 = vst.msk [vmem:[#allocation2] sm:$0xff] %vm86, %v165
  %168 = vrot.lane.b32.xlu0 %v156, 64
  %v169 = vpop.permute.xlu0 %168
  %v171 = vsel %vm160, %v169, %v42
  %172 = vst.msk [vmem:[#allocation3] sm:$0xff] %vm86, %v171
  %v173 = vsel %vm160, %v163, 0.0
  %174 = vst.msk [vmem:[%s5] sm:$0xff] %vm86, %v173
  %v175 = vld [vmem:[#allocation2] sm:$0xff]
  %v176 = vld [vmem:[#allocation3] sm:$0xff]
  %s177 = scalar_lea.vmem %s0, 16
  %v178 = vld [vmem:[%s177] sm:$0xff]
  %v179 = vld [vmem:[%s177 + $0x8] sm:$0xff]
  %v180 = vpack.c.bf16 %v175, %v175
  %v182 = vsel %vm86, %v180, 0
  %184 = vmatprep.subr.bf16.mxu0 %v71
  %185 = vmatpush1.bf16.msra.mxu0 %v70
  %186 = vmatprep.subr.bf16.mxu0 %v73
  %187 = vmatpush1.bf16.msra.mxu0 %v72
  %188 = vmatprep.subr.bf16.mxu0 %v75
  %189 = vmatpush1.bf16.msra.mxu0 %v74
  %190 = vmatprep.subr.bf16.mxu0 %v77
  %191 = vmatpush1.bf16.msra.mxu0 %v76
  %192 = vmatprep.subr.bf16.mxu0 0
  %193 = vmatpush1.bf16.msra.mxu0 0
  %194 = vmatprep.subr.bf16.mxu0 0
  %195 = vmatpush1.bf16.msra.mxu0 0
  %196 = vmatprep.subr.bf16.mxu0 0
  %197 = vmatpush1.bf16.msra.mxu0 0
  %198 = vmatprep.subr.bf16.mxu0 0
  %199 = vmatpush1.bf16.msra.mxu0 0
  %200 = vmatprep.subr.bf16.mxu0 0
  %201 = vmatpush1.bf16.msra.mxu0 0
  %202 = vmatprep.subr.bf16.mxu0 0
  %203 = vmatpush1.bf16.msra.mxu0 0
  %204 = vmatprep.subr.bf16.mxu0 0
  %205 = vmatpush1.bf16.msra.mxu0 0
  %206 = vmatprep.subr.bf16.mxu0 0
  %207 = vmatpush1.bf16.msra.mxu0 0
  %208 = vmatprep.subr.bf16.mxu0 0
  %209 = vmatpush1.bf16.msra.mxu0 0
  %210 = vmatprep.subr.bf16.mxu0 0
  %211 = vmatpush1.bf16.msra.mxu0 0
  %212 = vmatprep.subr.bf16.mxu0 0
  %213 = vmatpush1.bf16.msra.mxu0 0
  %214 = vmatprep.subr.bf16.mxu0 0
  %215 = vmatpush1.bf16.msra.mxu0 0
  %216 = vmatprep.mubr.bf16.mxu0 0
  %217 = vmatmul.mubr.bf16.gmra.mrb[0].mxu0 %v182
  %v218 = vpop.f32.mrb[0].mxu0
  %v219 = vadd.f32 0.0, %v218
  %v220 = vpop.f32.mrb[0].mxu0
  %v221 = vadd.f32 0.0, %v220
  %v222 = vpop.f32.mrb[0].mxu0
  %v223 = vpop.f32.mrb[0].mxu0
  %224 = vdwg.mxu0
  %v225 = vadd.f32 %v178, %v219
  %v226 = vadd.f32 %v179, %v221
  %v227 = vxor.u32 %v225, 2147483648
  %v228 = vmul.f32 %v227, 1.442695
  %v229 = vpow.pop %v228
  %v230 = vadd.f32 %v229, 1.0
  %v231 = vrcp.pop %v230
  %v232 = vmul.f32 1.0, %v231
  %v233 = vtanh.pop %v226
  %v234 = vxor.u32 %v226, 2147483648
  %v235 = vmul.f32 %v234, 1.442695
  %v236 = vpow.pop %v235
  %v237 = vadd.f32 %v236, 1.0
  %v238 = vrcp.pop %v237
  %v239 = vmul.f32 1.0, %v238
  %241 = vrot.lane.b32.xlu0 %v176, 64
  %v242 = vpop.permute.xlu0 %241
  %v244 = vmul.f32 %v232, %v242
  %v245 = vmul.f32 %v232, %v233
  %247 = vrot.lane.b32.xlu0 %v245, 64
  %v248 = vpop.permute.xlu0 %247
  %v250 = vadd.f32 %v244, %v248
  %v251 = vtanh.pop %v250
  %v252 = vmul.f32 %v239, %v251
  %s253 = scalar_lea.vmem %s1, 8
  %v254 = vld [vmem:[%s253] sm:$0xff]
  %vm255 = vcmp.gt.f32.partialorder %v254, 0.5
  %257 = vrot.lane.b32.xlu0 %v252, 64
  %v258 = vpop.permute.xlu0 %257
  %v260 = vsel %vm255, %v258, %v175
  %261 = vst.msk [vmem:[#allocation2] sm:$0xff] %vm86, %v260
  %263 = vrot.lane.b32.xlu0 %v250, 64
  %v264 = vpop.permute.xlu0 %263
  %v266 = vsel %vm255, %v264, %v176
  %267 = vst.msk [vmem:[#allocation3] sm:$0xff] %vm86, %v266
  %v268 = vsel %vm255, %v258, 0.0
  %s269 = scalar_lea.vmem %s5, 8
  %270 = vst.msk [vmem:[%s269] sm:$0xff] %vm86, %v268
  %v271 = vld [vmem:[#allocation2] sm:$0xff]
  %v272 = vld [vmem:[#allocation3] sm:$0xff]
  %s273 = scalar_lea.vmem %s0, 32
  %v274 = vld [vmem:[%s273] sm:$0xff]
  %v275 = vld [vmem:[%s273 + $0x8] sm:$0xff]
  %v276 = vpack.c.bf16 %v271, %v271
  %v278 = vsel %vm86, %v276, 0
  %280 = vmatprep.subr.bf16.mxu0 %v71
  %281 = vmatpush1.bf16.msra.mxu0 %v70
  %282 = vmatprep.subr.bf16.mxu0 %v73
  %283 = vmatpush1.bf16.msra.mxu0 %v72
  %284 = vmatprep.subr.bf16.mxu0 %v75
  %285 = vmatpush1.bf16.msra.mxu0 %v74
  %286 = vmatprep.subr.bf16.mxu0 %v77
  %287 = vmatpush1.bf16.msra.mxu0 %v76
  %288 = vmatprep.subr.bf16.mxu0 0
  %289 = vmatpush1.bf16.msra.mxu0 0
  %290 = vmatprep.subr.bf16.mxu0 0
  %291 = vmatpush1.bf16.msra.mxu0 0
  %292 = vmatprep.subr.bf16.mxu0 0
  %293 = vmatpush1.bf16.msra.mxu0 0
  %294 = vmatprep.subr.bf16.mxu0 0
  %295 = vmatpush1.bf16.msra.mxu0 0
  %296 = vmatprep.subr.bf16.mxu0 0
  %297 = vmatpush1.bf16.msra.mxu0 0
  %298 = vmatprep.subr.bf16.mxu0 0
  %299 = vmatpush1.bf16.msra.mxu0 0
  %300 = vmatprep.subr.bf16.mxu0 0
  %301 = vmatpush1.bf16.msra.mxu0 0
  %302 = vmatprep.subr.bf16.mxu0 0
  %303 = vmatpush1.bf16.msra.mxu0 0
  %304 = vmatprep.subr.bf16.mxu0 0
  %305 = vmatpush1.bf16.msra.mxu0 0
  %306 = vmatprep.subr.bf16.mxu0 0
  %307 = vmatpush1.bf16.msra.mxu0 0
  %308 = vmatprep.subr.bf16.mxu0 0
  %309 = vmatpush1.bf16.msra.mxu0 0
  %310 = vmatprep.subr.bf16.mxu0 0
  %311 = vmatpush1.bf16.msra.mxu0 0
  %312 = vmatprep.mubr.bf16.mxu0 0
  %313 = vmatmul.mubr.bf16.gmra.mrb[0].mxu0 %v278
  %v314 = vpop.f32.mrb[0].mxu0
  %v315 = vadd.f32 0.0, %v314
  %v316 = vpop.f32.mrb[0].mxu0
  %v317 = vadd.f32 0.0, %v316
  %v318 = vpop.f32.mrb[0].mxu0
  %v319 = vpop.f32.mrb[0].mxu0
  %320 = vdwg.mxu0
  %v321 = vadd.f32 %v274, %v315
  %v322 = vadd.f32 %v275, %v317
  %v323 = vxor.u32 %v321, 2147483648
  %v324 = vmul.f32 %v323, 1.442695
  %v325 = vpow.pop %v324
  %v326 = vadd.f32 %v325, 1.0
  %v327 = vrcp.pop %v326
  %v328 = vmul.f32 1.0, %v327
  %v329 = vtanh.pop %v322
  %v330 = vxor.u32 %v322, 2147483648
  %v331 = vmul.f32 %v330, 1.442695
  %v332 = vpow.pop %v331
  %v333 = vadd.f32 %v332, 1.0
  %v334 = vrcp.pop %v333
  %v335 = vmul.f32 1.0, %v334
  %337 = vrot.lane.b32.xlu0 %v272, 64
  %v338 = vpop.permute.xlu0 %337
  %v340 = vmul.f32 %v328, %v338
  %v341 = vmul.f32 %v328, %v329
  %343 = vrot.lane.b32.xlu0 %v341, 64
  %v344 = vpop.permute.xlu0 %343
  %v346 = vadd.f32 %v340, %v344
  %v347 = vtanh.pop %v346
  %v348 = vmul.f32 %v335, %v347
  %s349 = scalar_lea.vmem %s1, 16
  %v350 = vld [vmem:[%s349] sm:$0xff]
  %vm351 = vcmp.gt.f32.partialorder %v350, 0.5
  %353 = vrot.lane.b32.xlu0 %v348, 64
  %v354 = vpop.permute.xlu0 %353
  %v356 = vsel %vm351, %v354, %v271
  %357 = vst.msk [vmem:[#allocation2] sm:$0xff] %vm86, %v356
  %359 = vrot.lane.b32.xlu0 %v346, 64
  %v360 = vpop.permute.xlu0 %359
  %v362 = vsel %vm351, %v360, %v272
  %363 = vst.msk [vmem:[#allocation3] sm:$0xff] %vm86, %v362
  %v364 = vsel %vm351, %v354, 0.0
  %s365 = scalar_lea.vmem %s5, 16
  %366 = vst.msk [vmem:[%s365] sm:$0xff] %vm86, %v364
  %v367 = vld [vmem:[#allocation2] sm:$0xff]
  %v368 = vld [vmem:[#allocation3] sm:$0xff]
  %s369 = scalar_lea.vmem %s0, 48
  %v370 = vld [vmem:[%s369] sm:$0xff]
  %v371 = vld [vmem:[%s369 + $0x8] sm:$0xff]
  %v372 = vpack.c.bf16 %v367, %v367
  %v374 = vsel %vm86, %v372, 0
  %376 = vmatprep.subr.bf16.mxu0 %v71
  %377 = vmatpush1.bf16.msra.mxu0 %v70
  %378 = vmatprep.subr.bf16.mxu0 %v73
  %379 = vmatpush1.bf16.msra.mxu0 %v72
  %380 = vmatprep.subr.bf16.mxu0 %v75
  %381 = vmatpush1.bf16.msra.mxu0 %v74
  %382 = vmatprep.subr.bf16.mxu0 %v77
  %383 = vmatpush1.bf16.msra.mxu0 %v76
  %384 = vmatprep.subr.bf16.mxu0 0
  %385 = vmatpush1.bf16.msra.mxu0 0
  %386 = vmatprep.subr.bf16.mxu0 0
  %387 = vmatpush1.bf16.msra.mxu0 0
  %388 = vmatprep.subr.bf16.mxu0 0
  %389 = vmatpush1.bf16.msra.mxu0 0
  %390 = vmatprep.subr.bf16.mxu0 0
  %391 = vmatpush1.bf16.msra.mxu0 0
  %392 = vmatprep.subr.bf16.mxu0 0
  %393 = vmatpush1.bf16.msra.mxu0 0
  %394 = vmatprep.subr.bf16.mxu0 0
  %395 = vmatpush1.bf16.msra.mxu0 0
  %396 = vmatprep.subr.bf16.mxu0 0
  %397 = vmatpush1.bf16.msra.mxu0 0
  %398 = vmatprep.subr.bf16.mxu0 0
  %399 = vmatpush1.bf16.msra.mxu0 0
  %400 = vmatprep.subr.bf16.mxu0 0
  %401 = vmatpush1.bf16.msra.mxu0 0
  %402 = vmatprep.subr.bf16.mxu0 0
  %403 = vmatpush1.bf16.msra.mxu0 0
  %404 = vmatprep.subr.bf16.mxu0 0
  %405 = vmatpush1.bf16.msra.mxu0 0
  %406 = vmatprep.subr.bf16.mxu0 0
  %407 = vmatpush1.bf16.msra.mxu0 0
  %408 = vmatprep.mubr.bf16.mxu0 0
  %409 = vmatmul.mubr.bf16.gmra.mrb[0].mxu0 %v374
  %v410 = vpop.f32.mrb[0].mxu0
  %v411 = vadd.f32 0.0, %v410
  %v412 = vpop.f32.mrb[0].mxu0
  %v413 = vadd.f32 0.0, %v412
  %v414 = vpop.f32.mrb[0].mxu0
  %v415 = vpop.f32.mrb[0].mxu0
  %416 = vdwg.mxu0
  %v417 = vadd.f32 %v370, %v411
  %v418 = vadd.f32 %v371, %v413
  %v419 = vxor.u32 %v417, 2147483648
  %v420 = vmul.f32 %v419, 1.442695
  %v421 = vpow.pop %v420
  %v422 = vadd.f32 %v421, 1.0
  %v423 = vrcp.pop %v422
  %v424 = vmul.f32 1.0, %v423
  %v425 = vtanh.pop %v418
  %v426 = vxor.u32 %v418, 2147483648
  %v427 = vmul.f32 %v426, 1.442695
  %v428 = vpow.pop %v427
  %v429 = vadd.f32 %v428, 1.0
  %v430 = vrcp.pop %v429
  %v431 = vmul.f32 1.0, %v430
  %433 = vrot.lane.b32.xlu0 %v368, 64
  %v434 = vpop.permute.xlu0 %433
  %v436 = vmul.f32 %v424, %v434
  %v437 = vmul.f32 %v424, %v425
  %439 = vrot.lane.b32.xlu0 %v437, 64
  %v440 = vpop.permute.xlu0 %439
  %v442 = vadd.f32 %v436, %v440
  %v443 = vtanh.pop %v442
  %v444 = vmul.f32 %v431, %v443
  %s445 = scalar_lea.vmem %s1, 24
  %v446 = vld [vmem:[%s445] sm:$0xff]
  %vm447 = vcmp.gt.f32.partialorder %v446, 0.5
  %449 = vrot.lane.b32.xlu0 %v444, 64
  %v450 = vpop.permute.xlu0 %449
  %v452 = vsel %vm447, %v450, %v367
  %453 = vst.msk [vmem:[#allocation2] sm:$0xff] %vm86, %v452
  %455 = vrot.lane.b32.xlu0 %v442, 64
  %v456 = vpop.permute.xlu0 %455
  %v458 = vsel %vm447, %v456, %v368
  %459 = vst.msk [vmem:[#allocation3] sm:$0xff] %vm86, %v458
  %v460 = vsel %vm447, %v450, 0.0
  %s461 = scalar_lea.vmem %s5, 24
  %462 = vst.msk [vmem:[%s461] sm:$0xff] %vm86, %v460
  %v463 = vld [vmem:[#allocation2] sm:$0xff]
  %v464 = vld [vmem:[#allocation3] sm:$0xff]
  %s465 = scalar_lea.vmem %s0, 64
  %v466 = vld [vmem:[%s465] sm:$0xff]
  %v467 = vld [vmem:[%s465 + $0x8] sm:$0xff]
  %v468 = vpack.c.bf16 %v463, %v463
  %v470 = vsel %vm86, %v468, 0
  %472 = vmatprep.subr.bf16.mxu0 %v71
  %473 = vmatpush1.bf16.msra.mxu0 %v70
  %474 = vmatprep.subr.bf16.mxu0 %v73
  %475 = vmatpush1.bf16.msra.mxu0 %v72
  %476 = vmatprep.subr.bf16.mxu0 %v75
  %477 = vmatpush1.bf16.msra.mxu0 %v74
  %478 = vmatprep.subr.bf16.mxu0 %v77
  %479 = vmatpush1.bf16.msra.mxu0 %v76
  %480 = vmatprep.subr.bf16.mxu0 0
  %481 = vmatpush1.bf16.msra.mxu0 0
  %482 = vmatprep.subr.bf16.mxu0 0
  %483 = vmatpush1.bf16.msra.mxu0 0
  %484 = vmatprep.subr.bf16.mxu0 0
  %485 = vmatpush1.bf16.msra.mxu0 0
  %486 = vmatprep.subr.bf16.mxu0 0
  %487 = vmatpush1.bf16.msra.mxu0 0
  %488 = vmatprep.subr.bf16.mxu0 0
  %489 = vmatpush1.bf16.msra.mxu0 0
  %490 = vmatprep.subr.bf16.mxu0 0
  %491 = vmatpush1.bf16.msra.mxu0 0
  %492 = vmatprep.subr.bf16.mxu0 0
  %493 = vmatpush1.bf16.msra.mxu0 0
  %494 = vmatprep.subr.bf16.mxu0 0
  %495 = vmatpush1.bf16.msra.mxu0 0
  %496 = vmatprep.subr.bf16.mxu0 0
  %497 = vmatpush1.bf16.msra.mxu0 0
  %498 = vmatprep.subr.bf16.mxu0 0
  %499 = vmatpush1.bf16.msra.mxu0 0
  %500 = vmatprep.subr.bf16.mxu0 0
  %501 = vmatpush1.bf16.msra.mxu0 0
  %502 = vmatprep.subr.bf16.mxu0 0
  %503 = vmatpush1.bf16.msra.mxu0 0
  %504 = vmatprep.mubr.bf16.mxu0 0
  %505 = vmatmul.mubr.bf16.gmra.mrb[0].mxu0 %v470
  %v506 = vpop.f32.mrb[0].mxu0
  %v507 = vadd.f32 0.0, %v506
  %v508 = vpop.f32.mrb[0].mxu0
  %v509 = vadd.f32 0.0, %v508
  %v510 = vpop.f32.mrb[0].mxu0
  %v511 = vpop.f32.mrb[0].mxu0
  %512 = vdwg.mxu0
  %v513 = vadd.f32 %v466, %v507
  %v514 = vadd.f32 %v467, %v509
  %v515 = vxor.u32 %v513, 2147483648
  %v516 = vmul.f32 %v515, 1.442695
  %v517 = vpow.pop %v516
  %v518 = vadd.f32 %v517, 1.0
  %v519 = vrcp.pop %v518
  %v520 = vmul.f32 1.0, %v519
  %v521 = vtanh.pop %v514
  %v522 = vxor.u32 %v514, 2147483648
  %v523 = vmul.f32 %v522, 1.442695
  %v524 = vpow.pop %v523
  %v525 = vadd.f32 %v524, 1.0
  %v526 = vrcp.pop %v525
  %v527 = vmul.f32 1.0, %v526
  %529 = vrot.lane.b32.xlu0 %v464, 64
  %v530 = vpop.permute.xlu0 %529
  %v532 = vmul.f32 %v520, %v530
  %v533 = vmul.f32 %v520, %v521
  %535 = vrot.lane.b32.xlu0 %v533, 64
  %v536 = vpop.permute.xlu0 %535
  %v538 = vadd.f32 %v532, %v536
  %v539 = vtanh.pop %v538
  %v540 = vmul.f32 %v527, %v539
  %s541 = scalar_lea.vmem %s1, 32
  %v542 = vld [vmem:[%s541] sm:$0xff]
  %vm543 = vcmp.gt.f32.partialorder %v542, 0.5
  %545 = vrot.lane.b32.xlu0 %v540, 64
  %v546 = vpop.permute.xlu0 %545
  %v548 = vsel %vm543, %v546, %v463
  %549 = vst.msk [vmem:[#allocation2] sm:$0xff] %vm86, %v548
  %551 = vrot.lane.b32.xlu0 %v538, 64
  %v552 = vpop.permute.xlu0 %551
  %v554 = vsel %vm543, %v552, %v464
  %555 = vst.msk [vmem:[#allocation3] sm:$0xff] %vm86, %v554
  %v556 = vsel %vm543, %v546, 0.0
  %s557 = scalar_lea.vmem %s5, 32
  %558 = vst.msk [vmem:[%s557] sm:$0xff] %vm86, %v556
  %v559 = vld [vmem:[#allocation2] sm:$0xff]
  %v560 = vld [vmem:[#allocation3] sm:$0xff]
  %s561 = scalar_lea.vmem %s0, 80
  %v562 = vld [vmem:[%s561] sm:$0xff]
  %v563 = vld [vmem:[%s561 + $0x8] sm:$0xff]
  %v564 = vpack.c.bf16 %v559, %v559
  %v566 = vsel %vm86, %v564, 0
  %568 = vmatprep.subr.bf16.mxu0 %v71
  %569 = vmatpush1.bf16.msra.mxu0 %v70
  %570 = vmatprep.subr.bf16.mxu0 %v73
  %571 = vmatpush1.bf16.msra.mxu0 %v72
  %572 = vmatprep.subr.bf16.mxu0 %v75
  %573 = vmatpush1.bf16.msra.mxu0 %v74
  %574 = vmatprep.subr.bf16.mxu0 %v77
  %575 = vmatpush1.bf16.msra.mxu0 %v76
  %576 = vmatprep.subr.bf16.mxu0 0
  %577 = vmatpush1.bf16.msra.mxu0 0
  %578 = vmatprep.subr.bf16.mxu0 0
  %579 = vmatpush1.bf16.msra.mxu0 0
  %580 = vmatprep.subr.bf16.mxu0 0
  %581 = vmatpush1.bf16.msra.mxu0 0
  %582 = vmatprep.subr.bf16.mxu0 0
  %583 = vmatpush1.bf16.msra.mxu0 0
  %584 = vmatprep.subr.bf16.mxu0 0
  %585 = vmatpush1.bf16.msra.mxu0 0
  %586 = vmatprep.subr.bf16.mxu0 0
  %587 = vmatpush1.bf16.msra.mxu0 0
  %588 = vmatprep.subr.bf16.mxu0 0
  %589 = vmatpush1.bf16.msra.mxu0 0
  %590 = vmatprep.subr.bf16.mxu0 0
  %591 = vmatpush1.bf16.msra.mxu0 0
  %592 = vmatprep.subr.bf16.mxu0 0
  %593 = vmatpush1.bf16.msra.mxu0 0
  %594 = vmatprep.subr.bf16.mxu0 0
  %595 = vmatpush1.bf16.msra.mxu0 0
  %596 = vmatprep.subr.bf16.mxu0 0
  %597 = vmatpush1.bf16.msra.mxu0 0
  %598 = vmatprep.subr.bf16.mxu0 0
  %599 = vmatpush1.bf16.msra.mxu0 0
  %600 = vmatprep.mubr.bf16.mxu0 0
  %601 = vmatmul.mubr.bf16.gmra.mrb[0].mxu0 %v566
  %v602 = vpop.f32.mrb[0].mxu0
  %v603 = vadd.f32 0.0, %v602
  %v604 = vpop.f32.mrb[0].mxu0
  %v605 = vadd.f32 0.0, %v604
  %v606 = vpop.f32.mrb[0].mxu0
  %v607 = vpop.f32.mrb[0].mxu0
  %608 = vdwg.mxu0
  %v609 = vadd.f32 %v562, %v603
  %v610 = vadd.f32 %v563, %v605
  %v611 = vxor.u32 %v609, 2147483648
  %v612 = vmul.f32 %v611, 1.442695
  %v613 = vpow.pop %v612
  %v614 = vadd.f32 %v613, 1.0
  %v615 = vrcp.pop %v614
  %v616 = vmul.f32 1.0, %v615
  %v617 = vtanh.pop %v610
  %v618 = vxor.u32 %v610, 2147483648
  %v619 = vmul.f32 %v618, 1.442695
  %v620 = vpow.pop %v619
  %v621 = vadd.f32 %v620, 1.0
  %v622 = vrcp.pop %v621
  %v623 = vmul.f32 1.0, %v622
  %625 = vrot.lane.b32.xlu0 %v560, 64
  %v626 = vpop.permute.xlu0 %625
  %v628 = vmul.f32 %v616, %v626
  %v629 = vmul.f32 %v616, %v617
  %631 = vrot.lane.b32.xlu0 %v629, 64
  %v632 = vpop.permute.xlu0 %631
  %v634 = vadd.f32 %v628, %v632
  %v635 = vtanh.pop %v634
  %v636 = vmul.f32 %v623, %v635
  %s637 = scalar_lea.vmem %s1, 40
  %v638 = vld [vmem:[%s637] sm:$0xff]
  %vm639 = vcmp.gt.f32.partialorder %v638, 0.5
  %641 = vrot.lane.b32.xlu0 %v636, 64
  %v642 = vpop.permute.xlu0 %641
  %v644 = vsel %vm639, %v642, %v559
  %645 = vst.msk [vmem:[#allocation2] sm:$0xff] %vm86, %v644
  %647 = vrot.lane.b32.xlu0 %v634, 64
  %v648 = vpop.permute.xlu0 %647
  %v650 = vsel %vm639, %v648, %v560
  %651 = vst.msk [vmem:[#allocation3] sm:$0xff] %vm86, %v650
  %v652 = vsel %vm639, %v642, 0.0
  %s653 = scalar_lea.vmem %s5, 40
  %654 = vst.msk [vmem:[%s653] sm:$0xff] %vm86, %v652
  %v655 = vld [vmem:[#allocation2] sm:$0xff]
  %v656 = vld [vmem:[#allocation3] sm:$0xff]
  %s657 = scalar_lea.vmem %s0, 96
  %v658 = vld [vmem:[%s657] sm:$0xff]
  %v659 = vld [vmem:[%s657 + $0x8] sm:$0xff]
  %v660 = vpack.c.bf16 %v655, %v655
  %v662 = vsel %vm86, %v660, 0
  %664 = vmatprep.subr.bf16.mxu0 %v71
  %665 = vmatpush1.bf16.msra.mxu0 %v70
  %666 = vmatprep.subr.bf16.mxu0 %v73
  %667 = vmatpush1.bf16.msra.mxu0 %v72
  %668 = vmatprep.subr.bf16.mxu0 %v75
  %669 = vmatpush1.bf16.msra.mxu0 %v74
  %670 = vmatprep.subr.bf16.mxu0 %v77
  %671 = vmatpush1.bf16.msra.mxu0 %v76
  %672 = vmatprep.subr.bf16.mxu0 0
  %673 = vmatpush1.bf16.msra.mxu0 0
  %674 = vmatprep.subr.bf16.mxu0 0
  %675 = vmatpush1.bf16.msra.mxu0 0
  %676 = vmatprep.subr.bf16.mxu0 0
  %677 = vmatpush1.bf16.msra.mxu0 0
  %678 = vmatprep.subr.bf16.mxu0 0
  %679 = vmatpush1.bf16.msra.mxu0 0
  %680 = vmatprep.subr.bf16.mxu0 0
  %681 = vmatpush1.bf16.msra.mxu0 0
  %682 = vmatprep.subr.bf16.mxu0 0
  %683 = vmatpush1.bf16.msra.mxu0 0
  %684 = vmatprep.subr.bf16.mxu0 0
  %685 = vmatpush1.bf16.msra.mxu0 0
  %686 = vmatprep.subr.bf16.mxu0 0
  %687 = vmatpush1.bf16.msra.mxu0 0
  %688 = vmatprep.subr.bf16.mxu0 0
  %689 = vmatpush1.bf16.msra.mxu0 0
  %690 = vmatprep.subr.bf16.mxu0 0
  %691 = vmatpush1.bf16.msra.mxu0 0
  %692 = vmatprep.subr.bf16.mxu0 0
  %693 = vmatpush1.bf16.msra.mxu0 0
  %694 = vmatprep.subr.bf16.mxu0 0
  %695 = vmatpush1.bf16.msra.mxu0 0
  %696 = vmatprep.mubr.bf16.mxu0 0
  %697 = vmatmul.mubr.bf16.gmra.mrb[0].mxu0 %v662
  %v698 = vpop.f32.mrb[0].mxu0
  %v699 = vadd.f32 0.0, %v698
  %v700 = vpop.f32.mrb[0].mxu0
  %v701 = vadd.f32 0.0, %v700
  %v702 = vpop.f32.mrb[0].mxu0
  %v703 = vpop.f32.mrb[0].mxu0
  %704 = vdwg.mxu0
  %v705 = vadd.f32 %v658, %v699
  %v706 = vadd.f32 %v659, %v701
  %v707 = vxor.u32 %v705, 2147483648
  %v708 = vmul.f32 %v707, 1.442695
  %v709 = vpow.pop %v708
  %v710 = vadd.f32 %v709, 1.0
  %v711 = vrcp.pop %v710
  %v712 = vmul.f32 1.0, %v711
  %v713 = vtanh.pop %v706
  %v714 = vxor.u32 %v706, 2147483648
  %v715 = vmul.f32 %v714, 1.442695
  %v716 = vpow.pop %v715
  %v717 = vadd.f32 %v716, 1.0
  %v718 = vrcp.pop %v717
  %v719 = vmul.f32 1.0, %v718
  %721 = vrot.lane.b32.xlu0 %v656, 64
  %v722 = vpop.permute.xlu0 %721
  %v724 = vmul.f32 %v712, %v722
  %v725 = vmul.f32 %v712, %v713
  %727 = vrot.lane.b32.xlu0 %v725, 64
  %v728 = vpop.permute.xlu0 %727
  %v730 = vadd.f32 %v724, %v728
  %v731 = vtanh.pop %v730
  %v732 = vmul.f32 %v719, %v731
  %s733 = scalar_lea.vmem %s1, 48
  %v734 = vld [vmem:[%s733] sm:$0xff]
  %vm735 = vcmp.gt.f32.partialorder %v734, 0.5
  %737 = vrot.lane.b32.xlu0 %v732, 64
  %v738 = vpop.permute.xlu0 %737
  %v740 = vsel %vm735, %v738, %v655
  %741 = vst.msk [vmem:[#allocation2] sm:$0xff] %vm86, %v740
  %743 = vrot.lane.b32.xlu0 %v730, 64
  %v744 = vpop.permute.xlu0 %743
  %v746 = vsel %vm735, %v744, %v656
  %747 = vst.msk [vmem:[#allocation3] sm:$0xff] %vm86, %v746
  %v748 = vsel %vm735, %v738, 0.0
  %s749 = scalar_lea.vmem %s5, 48
  %750 = vst.msk [vmem:[%s749] sm:$0xff] %vm86, %v748
  %v751 = vld [vmem:[#allocation2] sm:$0xff]
  %v752 = vld [vmem:[#allocation3] sm:$0xff]
  %s753 = scalar_lea.vmem %s0, 112
  %v754 = vld [vmem:[%s753] sm:$0xff]
  %v755 = vld [vmem:[%s753 + $0x8] sm:$0xff]
  %v756 = vpack.c.bf16 %v751, %v751
  %v758 = vsel %vm86, %v756, 0
  %760 = vmatprep.subr.bf16.mxu0 %v71
  %761 = vmatpush1.bf16.msra.mxu0 %v70
  %762 = vmatprep.subr.bf16.mxu0 %v73
  %763 = vmatpush1.bf16.msra.mxu0 %v72
  %764 = vmatprep.subr.bf16.mxu0 %v75
  %765 = vmatpush1.bf16.msra.mxu0 %v74
  %766 = vmatprep.subr.bf16.mxu0 %v77
  %767 = vmatpush1.bf16.msra.mxu0 %v76
  %768 = vmatprep.subr.bf16.mxu0 0
  %769 = vmatpush1.bf16.msra.mxu0 0
  %770 = vmatprep.subr.bf16.mxu0 0
  %771 = vmatpush1.bf16.msra.mxu0 0
  %772 = vmatprep.subr.bf16.mxu0 0
  %773 = vmatpush1.bf16.msra.mxu0 0
  %774 = vmatprep.subr.bf16.mxu0 0
  %775 = vmatpush1.bf16.msra.mxu0 0
  %776 = vmatprep.subr.bf16.mxu0 0
  %777 = vmatpush1.bf16.msra.mxu0 0
  %778 = vmatprep.subr.bf16.mxu0 0
  %779 = vmatpush1.bf16.msra.mxu0 0
  %780 = vmatprep.subr.bf16.mxu0 0
  %781 = vmatpush1.bf16.msra.mxu0 0
  %782 = vmatprep.subr.bf16.mxu0 0
  %783 = vmatpush1.bf16.msra.mxu0 0
  %784 = vmatprep.subr.bf16.mxu0 0
  %785 = vmatpush1.bf16.msra.mxu0 0
  %786 = vmatprep.subr.bf16.mxu0 0
  %787 = vmatpush1.bf16.msra.mxu0 0
  %788 = vmatprep.subr.bf16.mxu0 0
  %789 = vmatpush1.bf16.msra.mxu0 0
  %790 = vmatprep.subr.bf16.mxu0 0
  %791 = vmatpush1.bf16.msra.mxu0 0
  %792 = vmatprep.mubr.bf16.mxu0 0
  %793 = vmatmul.mubr.bf16.gmra.mrb[0].mxu0 %v758
  %v794 = vpop.f32.mrb[0].mxu0
  %v795 = vadd.f32 0.0, %v794
  %v796 = vpop.f32.mrb[0].mxu0
  %v797 = vadd.f32 0.0, %v796
  %v798 = vpop.f32.mrb[0].mxu0
  %v799 = vpop.f32.mrb[0].mxu0
  %800 = vdwg.mxu0
  %v801 = vadd.f32 %v754, %v795
  %v802 = vadd.f32 %v755, %v797
  %v803 = vxor.u32 %v801, 2147483648
  %v804 = vmul.f32 %v803, 1.442695
  %v805 = vpow.pop %v804
  %v806 = vadd.f32 %v805, 1.0
  %v807 = vrcp.pop %v806
  %v808 = vmul.f32 1.0, %v807
  %v809 = vtanh.pop %v802
  %v810 = vxor.u32 %v802, 2147483648
  %v811 = vmul.f32 %v810, 1.442695
  %v812 = vpow.pop %v811
  %v813 = vadd.f32 %v812, 1.0
  %v814 = vrcp.pop %v813
  %v815 = vmul.f32 1.0, %v814
  %817 = vrot.lane.b32.xlu0 %v752, 64
  %v818 = vpop.permute.xlu0 %817
  %v820 = vmul.f32 %v808, %v818
  %v821 = vmul.f32 %v808, %v809
  %823 = vrot.lane.b32.xlu0 %v821, 64
  %v824 = vpop.permute.xlu0 %823
  %v826 = vadd.f32 %v820, %v824
  %v827 = vtanh.pop %v826
  %v828 = vmul.f32 %v815, %v827
  %s829 = scalar_lea.vmem %s1, 56
  %v830 = vld [vmem:[%s829] sm:$0xff]
  %vm831 = vcmp.gt.f32.partialorder %v830, 0.5
  %833 = vrot.lane.b32.xlu0 %v828, 64
  %v834 = vpop.permute.xlu0 %833
  %v836 = vsel %vm831, %v834, %v751
  %837 = vst.msk [vmem:[#allocation2] sm:$0xff] %vm86, %v836
  %839 = vrot.lane.b32.xlu0 %v826, 64
  %v840 = vpop.permute.xlu0 %839
  %v842 = vsel %vm831, %v840, %v752
  %843 = vst.msk [vmem:[#allocation3] sm:$0xff] %vm86, %v842
  %v844 = vsel %vm831, %v834, 0.0
  %s845 = scalar_lea.vmem %s5, 56
  %846 = vst.msk [vmem:[%s845] sm:$0xff] %vm86, %v844
  // Predicated region
  $region26: #{bicond_lstm_forward.2} parent=0 // pred_check
    %p847 = pneg %p24
  $region27: #{bicond_lstm_forward.2} parent=0 // pred_check_branch
    %849 = sbr.rel (%p847) target = $region29
  $region28: #{bicond_lstm_forward.2} parent=0 // pred_region
    %v850 = vld [vmem:[#allocation2] sm:$0xff]
    %851 = vst.msk [vmem:[%s6] sm:$0xff] %vm86, %v850
    %v852 = vld [vmem:[#allocation3] sm:$0xff]
    %853 = vst.msk [vmem:[%s7] sm:$0xff] %vm86, %v852
  $region29: #{bicond_lstm_forward.2} parent=0 // pred_fallthru
    _
  // Predicated region
  $region30: #{bicond_lstm_forward.2} parent=0 // pred_check
    _
  $region31: #{bicond_lstm_forward.2} parent=0 // pred_check_branch
    %855 = sbr.rel (0) target = $region33
  $region32: #{bicond_lstm_forward.2} parent=0 // pred_region
    _
  $region33: #{bicond_lstm_forward.2} parent=0 // pred_fallthru
    _
  // Predicated region
  $region34: #{bicond_lstm_forward.2} parent=0 // pred_check
    _
  $region35: #{bicond_lstm_forward.2} parent=0 // pred_check_branch
    %857 = sbr.rel (0) target = $region37
  $region36: #{bicond_lstm_forward.2} parent=0 // pred_region
    _
  $region37: #{bicond_lstm_forward.2} parent=0 // pred_fallthru
    _
  // Predicated region
  $region38: #{bicond_lstm_forward.2} parent=0 // pred_check
    _
  $region39: #{bicond_lstm_forward.2} parent=0 // pred_check_branch
    %859 = sbr.rel (0) target = $region41
  $region40: #{bicond_lstm_forward.2} parent=0 // pred_region
    _
  $region41: #{bicond_lstm_forward.2} parent=0 // pred_fallthru
    _
  // Predicated region
  $region42: #{bicond_lstm_forward.2} parent=0 // pred_check
    _
  $region43: #{bicond_lstm_forward.2} parent=0 // pred_check_branch
    %861 = sbr.rel (0) target = $region45
  $region44: #{bicond_lstm_forward.2} parent=0 // pred_region
    _
  $region45: #{bicond_lstm_forward.2} parent=0 // pred_fallthru
    _
  // Predicated region
  $region46: #{bicond_lstm_forward.2} parent=0 // pred_check
    _
  $region47: #{bicond_lstm_forward.2} parent=0 // pred_check_branch
    %863 = sbr.rel (0) target = $region49
  $region48: #{bicond_lstm_forward.2} parent=0 // pred_region
    _
  $region49: #{bicond_lstm_forward.2} parent=0 // pred_fallthru
    _
  // Predicated region
  $region50: #{bicond_lstm_forward.2} parent=0 // pred_check
    _
  $region51: #{bicond_lstm_forward.2} parent=0 // pred_check_branch
    %865 = sbr.rel (0) target = $region53
  $region52: #{bicond_lstm_forward.2} parent=0 // pred_region
    _
  $region53: #{bicond_lstm_forward.2} parent=0 // pred_fallthru
    _

// kernel: bicond_lstm_forward.3
$region0: #{bicond_lstm_forward.3}
  #allocation0 [shape = 'u32[]', space=smem, size = 0x4, offset = 0x4, fixed_abs, tag = 'smem constant byte address 0x4 - core index']
  #allocation1 [shape = 'u32[144,128]{1,0:T(1,128)}', space=vmem, size = 0x12000, scoped, tag = 'internal scratch']
  #allocation2 [shape = 'f32[8,64]{1,0:T(8,128)}', space=vmem, size = 0x1000, scoped, tag = 'scratch operand']
  #allocation3 [shape = 'f32[8,64]{1,0:T(8,128)}', space=vmem, size = 0x1000, scoped, tag = 'scratch operand']
  %s0 = inlined_call_operand.vmem [shape: f32[8,8,256], index: 0, kind: input, shape index: {}]
  %s1 = inlined_call_operand.vmem [shape: f32[8,8,64], index: 1, kind: input, shape index: {}]
  %s2 = inlined_call_operand.vmem [shape: bf16[64,256], index: 2, kind: input, shape index: {}]
  %s3 = inlined_call_operand.vmem [shape: f32[8,64], index: 3, kind: input, shape index: {}]
  %s4 = inlined_call_operand.vmem [shape: f32[8,64], index: 4, kind: input, shape index: {}]
  %s5 = inlined_call_operand.vmem [shape: f32[8,8,64], index: 5, kind: output, shape index: {0}]
  %s6 = inlined_call_operand.vmem [shape: f32[8,64], index: 6, kind: output, shape index: {1}]
  %s7 = inlined_call_operand.hbm [shape: f32[8,64], index: 7, kind: output, shape index: {2}]
  %8 = xla_tuple %s5, %s6, %s7
  %s9 = sld [smem:[#allocation0]]
  $region54: #{bicond_lstm_forward.3} parent=0
    _
  %s11 = ssub.s32 1, %s9
  %s12 = scalar_select 0, %s11, %s9
  $region1: #{bicond_lstm_forward.3} parent=0
    #allocation4 [shape = 'u8[4096]{0}', space=vmem, size = 0x1000, scoped, tag = 'output window, operand 2, single buffered']
    #allocation5 [shape = 's32[1]{0}', space=sflag, size = 0x4, scoped, tag = 'scoped memory for bicond_lstm_forward.3']
    %13 = vsyncpa [#allocation5], 0
    // Predicated region
    $region2: #{bicond_lstm_forward.3} parent=1 // pred_check
      _
    $region3: #{bicond_lstm_forward.3} parent=1 // pred_check_branch
      %15 = sbr.rel (0) target = $region5
    $region4: #{bicond_lstm_forward.3} parent=1 // pred_region
      _
    $region5: #{bicond_lstm_forward.3} parent=1 // pred_fallthru
      _
    // Predicated region
    $region6: #{bicond_lstm_forward.3} parent=1 // pred_check
      _
    $region7: #{bicond_lstm_forward.3} parent=1 // pred_check_branch
      %17 = sbr.rel (0) target = $region9
    $region8: #{bicond_lstm_forward.3} parent=1 // pred_region
      _
    $region9: #{bicond_lstm_forward.3} parent=1 // pred_fallthru
      _
    // Predicated region
    $region10: #{bicond_lstm_forward.3} parent=1 // pred_check
      _
    $region11: #{bicond_lstm_forward.3} parent=1 // pred_check_branch
      %19 = sbr.rel (0) target = $region13
    $region12: #{bicond_lstm_forward.3} parent=1 // pred_region
      _
    $region13: #{bicond_lstm_forward.3} parent=1 // pred_fallthru
      _
    // Predicated region
    $region14: #{bicond_lstm_forward.3} parent=1 // pred_check
      _
    $region15: #{bicond_lstm_forward.3} parent=1 // pred_check_branch
      %21 = sbr.rel (0) target = $region17
    $region16: #{bicond_lstm_forward.3} parent=1 // pred_region
      _
    $region17: #{bicond_lstm_forward.3} parent=1 // pred_fallthru
      _
    // Predicated region
    $region18: #{bicond_lstm_forward.3} parent=1 // pred_check
      _
    $region19: #{bicond_lstm_forward.3} parent=1 // pred_check_branch
      %23 = sbr.rel (0) target = $region21
    $region20: #{bicond_lstm_forward.3} parent=1 // pred_region
      _
    $region21: #{bicond_lstm_forward.3} parent=1 // pred_fallthru
      _
    %p25 = scmp.eq.s32.totalorder 0, 0
    // Predicated region
    $region22: #{bicond_lstm_forward.3} parent=1 // pred_check
      %p26 = pneg %p25
    $region23: #{bicond_lstm_forward.3} parent=1 // pred_check_branch
      %28 = sbr.rel (%p26) target = $region25
    $region24: #{bicond_lstm_forward.3} parent=1 // pred_region
      %v29 = vld [vmem:[%s3] sm:$0xff]
      %vm30 = vcmask 523264
      %31 = vst.msk [vmem:[#allocation2] sm:$0xff] %vm30, %v29
      %v32 = vld [vmem:[%s4] sm:$0xff]
      %33 = vst.msk [vmem:[#allocation3] sm:$0xff] %vm30, %v32
    $region25: #{bicond_lstm_forward.3} parent=1 // pred_fallthru
      _
    %v34 = vld [vmem:[%s2] sm:$0xff]
    %v35 = vld [vmem:[%s2 + $0x8] sm:$0xff]
    %v36 = vld [vmem:[%s2 + $0x10] sm:$0xff]
    %v37 = vld [vmem:[%s2 + $0x18] sm:$0xff]
    %v38 = vld [vmem:[%s2 + $0x20] sm:$0xff]
    %v39 = vld [vmem:[%s2 + $0x28] sm:$0xff]
    %v40 = vld [vmem:[%s2 + $0x30] sm:$0xff]
    %v41 = vld [vmem:[%s2 + $0x38] sm:$0xff]
    %v42 = vld [vmem:[#allocation2] sm:$0xff]
    %v43 = vld [vmem:[#allocation3] sm:$0xff]
    %v44 = vld [vmem:[%s0] sm:$0xff]
    %v45 = vld [vmem:[%s0 + $0x8] sm:$0xff]
    %v46 = vpack.c.bf16 %v42, %v42
    %v55 = vunpack.c.l.b16 %v34
    %v56 = vunpack.c.h.b16 %v34
    %v57 = vunpack.c.l.b16 %v35
    %v58 = vunpack.c.h.b16 %v35
    %v59 = vunpack.c.l.b16 %v36
    %v60 = vunpack.c.h.b16 %v36
    %v61 = vunpack.c.l.b16 %v37
    %v62 = vunpack.c.h.b16 %v37
    %v63 = vunpack.c.l.b16 %v38
    %v64 = vunpack.c.h.b16 %v38
    %v65 = vunpack.c.l.b16 %v39
    %v66 = vunpack.c.h.b16 %v39
    %v67 = vunpack.c.l.b16 %v40
    %v68 = vunpack.c.h.b16 %v40
    %v69 = vunpack.c.l.b16 %v41
    %v70 = vunpack.c.h.b16 %v41
    %v71 = vpack.c.b16 %v57, %v55
    %v72 = vpack.c.b16 %v58, %v56
    %v73 = vpack.c.b16 %v61, %v59
    %v74 = vpack.c.b16 %v62, %v60
    %v75 = vpack.c.b16 %v65, %v63
    %v76 = vpack.c.b16 %v66, %v64
    %v77 = vpack.c.b16 %v69, %v67
    %v78 = vpack.c.b16 %v70, %v68
    %vm87 = vcmask 523264
    %v89 = vsel %vm87, %v46, 0
    %91 = vmatprep.subr.bf16.mxu0 %v72
    %92 = vmatpush1.bf16.msra.mxu0 %v71
    %93 = vmatprep.subr.bf16.mxu0 %v74
    %94 = vmatpush1.bf16.msra.mxu0 %v73
    %95 = vmatprep.subr.bf16.mxu0 %v76
    %96 = vmatpush1.bf16.msra.mxu0 %v75
    %97 = vmatprep.subr.bf16.mxu0 %v78
    %98 = vmatpush1.bf16.msra.mxu0 %v77
    %99 = vmatprep.subr.bf16.mxu0 0
    %100 = vmatpush1.bf16.msra.mxu0 0
    %101 = vmatprep.subr.bf16.mxu0 0
    %102 = vmatpush1.bf16.msra.mxu0 0
    %103 = vmatprep.subr.bf16.mxu0 0
    %104 = vmatpush1.bf16.msra.mxu0 0
    %105 = vmatprep.subr.bf16.mxu0 0
    %106 = vmatpush1.bf16.msra.mxu0 0
    %107 = vmatprep.subr.bf16.mxu0 0
    %108 = vmatpush1.bf16.msra.mxu0 0
    %109 = vmatprep.subr.bf16.mxu0 0
    %110 = vmatpush1.bf16.msra.mxu0 0
    %111 = vmatprep.subr.bf16.mxu0 0
    %112 = vmatpush1.bf16.msra.mxu0 0
    %113 = vmatprep.subr.bf16.mxu0 0
    %114 = vmatpush1.bf16.msra.mxu0 0
    %115 = vmatprep.subr.bf16.mxu0 0
    %116 = vmatpush1.bf16.msra.mxu0 0
    %117 = vmatprep.subr.bf16.mxu0 0
    %118 = vmatpush1.bf16.msra.mxu0 0
    %119 = vmatprep.subr.bf16.mxu0 0
    %120 = vmatpush1.bf16.msra.mxu0 0
    %121 = vmatprep.subr.bf16.mxu0 0
    %122 = vmatpush1.bf16.msra.mxu0 0
    %123 = vmatprep.mubr.bf16.mxu0 0
    %124 = vmatmul.mubr.bf16.gmra.mrb[0].mxu0 %v89
    %v125 = vpop.f32.mrb[0].mxu0
    %v126 = vadd.f32 0.0, %v125
    %v127 = vpop.f32.mrb[0].mxu0
    %v128 = vadd.f32 0.0, %v127
    %v129 = vpop.f32.mrb[0].mxu0
    %v130 = vpop.f32.mrb[0].mxu0
    %131 = vdwg.mxu0
    %v132 = vadd.f32 %v44, %v126
    %v133 = vadd.f32 %v45, %v128
    %v134 = vxor.u32 %v132, 2147483648
    %v135 = vmul.f32 %v134, 1.442695
    %v136 = vpow.pop %v135
    %v137 = vadd.f32 %v136, 1.0
    %v138 = vrcp.pop %v137
    %v139 = vmul.f32 1.0, %v138
    %v140 = vtanh.pop %v133
    %v141 = vxor.u32 %v133, 2147483648
    %v142 = vmul.f32 %v141, 1.442695
    %v143 = vpow.pop %v142
    %v144 = vadd.f32 %v143, 1.0
    %v145 = vrcp.pop %v144
    %v146 = vmul.f32 1.0, %v145
    %148 = vrot.lane.b32.xlu0 %v43, 64
    %v149 = vpop.permute.xlu0 %148
    %v151 = vmul.f32 %v139, %v149
    %v152 = vmul.f32 %v139, %v140
    %154 = vrot.lane.b32.xlu0 %v152, 64
    %v155 = vpop.permute.xlu0 %154
    %v157 = vadd.f32 %v151, %v155
    %v158 = vtanh.pop %v157
    %v159 = vmul.f32 %v146, %v158
    %v160 = vld [vmem:[%s1] sm:$0xff]
    %vm161 = vcmp.gt.f32.partialorder %v160, 0.5
    %163 = vrot.lane.b32.xlu0 %v159, 64
    %v164 = vpop.permute.xlu0 %163
    %v166 = vsel %vm161, %v164, %v42
    %167 = vst.msk [vmem:[#allocation2] sm:$0xff] %vm87, %v166
    %169 = vrot.lane.b32.xlu0 %v157, 64
    %v170 = vpop.permute.xlu0 %169
    %v172 = vsel %vm161, %v170, %v43
    %173 = vst.msk [vmem:[#allocation3] sm:$0xff] %vm87, %v172
    %v174 = vsel %vm161, %v164, 0.0
    %175 = vst.msk [vmem:[%s5] sm:$0xff] %vm87, %v174
    %v176 = vld [vmem:[#allocation2] sm:$0xff]
    %v177 = vld [vmem:[#allocation3] sm:$0xff]
    %s178 = scalar_lea.vmem %s0, 16
    %v179 = vld [vmem:[%s178] sm:$0xff]
    %v180 = vld [vmem:[%s178 + $0x8] sm:$0xff]
    %v181 = vpack.c.bf16 %v176, %v176
    %v183 = vsel %vm87, %v181, 0
    %185 = vmatprep.subr.bf16.mxu0 %v72
    %186 = vmatpush1.bf16.msra.mxu0 %v71
    %187 = vmatprep.subr.bf16.mxu0 %v74
    %188 = vmatpush1.bf16.msra.mxu0 %v73
    %189 = vmatprep.subr.bf16.mxu0 %v76
    %190 = vmatpush1.bf16.msra.mxu0 %v75
    %191 = vmatprep.subr.bf16.mxu0 %v78
    %192 = vmatpush1.bf16.msra.mxu0 %v77
    %193 = vmatprep.subr.bf16.mxu0 0
    %194 = vmatpush1.bf16.msra.mxu0 0
    %195 = vmatprep.subr.bf16.mxu0 0
    %196 = vmatpush1.bf16.msra.mxu0 0
    %197 = vmatprep.subr.bf16.mxu0 0
    %198 = vmatpush1.bf16.msra.mxu0 0
    %199 = vmatprep.subr.bf16.mxu0 0
    %200 = vmatpush1.bf16.msra.mxu0 0
    %201 = vmatprep.subr.bf16.mxu0 0
    %202 = vmatpush1.bf16.msra.mxu0 0
    %203 = vmatprep.subr.bf16.mxu0 0
    %204 = vmatpush1.bf16.msra.mxu0 0
    %205 = vmatprep.subr.bf16.mxu0 0
    %206 = vmatpush1.bf16.msra.mxu0 0
    %207 = vmatprep.subr.bf16.mxu0 0
    %208 = vmatpush1.bf16.msra.mxu0 0
    %209 = vmatprep.subr.bf16.mxu0 0
    %210 = vmatpush1.bf16.msra.mxu0 0
    %211 = vmatprep.subr.bf16.mxu0 0
    %212 = vmatpush1.bf16.msra.mxu0 0
    %213 = vmatprep.subr.bf16.mxu0 0
    %214 = vmatpush1.bf16.msra.mxu0 0
    %215 = vmatprep.subr.bf16.mxu0 0
    %216 = vmatpush1.bf16.msra.mxu0 0
    %217 = vmatprep.mubr.bf16.mxu0 0
    %218 = vmatmul.mubr.bf16.gmra.mrb[0].mxu0 %v183
    %v219 = vpop.f32.mrb[0].mxu0
    %v220 = vadd.f32 0.0, %v219
    %v221 = vpop.f32.mrb[0].mxu0
    %v222 = vadd.f32 0.0, %v221
    %v223 = vpop.f32.mrb[0].mxu0
    %v224 = vpop.f32.mrb[0].mxu0
    %225 = vdwg.mxu0
    %v226 = vadd.f32 %v179, %v220
    %v227 = vadd.f32 %v180, %v222
    %v228 = vxor.u32 %v226, 2147483648
    %v229 = vmul.f32 %v228, 1.442695
    %v230 = vpow.pop %v229
    %v231 = vadd.f32 %v230, 1.0
    %v232 = vrcp.pop %v231
    %v233 = vmul.f32 1.0, %v232
    %v234 = vtanh.pop %v227
    %v235 = vxor.u32 %v227, 2147483648
    %v236 = vmul.f32 %v235, 1.442695
    %v237 = vpow.pop %v236
    %v238 = vadd.f32 %v237, 1.0
    %v239 = vrcp.pop %v238
    %v240 = vmul.f32 1.0, %v239
    %242 = vrot.lane.b32.xlu0 %v177, 64
    %v243 = vpop.permute.xlu0 %242
    %v245 = vmul.f32 %v233, %v243
    %v246 = vmul.f32 %v233, %v234
    %248 = vrot.lane.b32.xlu0 %v246, 64
    %v249 = vpop.permute.xlu0 %248
    %v251 = vadd.f32 %v245, %v249
    %v252 = vtanh.pop %v251
    %v253 = vmul.f32 %v240, %v252
    %s254 = scalar_lea.vmem %s1, 8
    %v255 = vld [vmem:[%s254] sm:$0xff]
    %vm256 = vcmp.gt.f32.partialorder %v255, 0.5
    %258 = vrot.lane.b32.xlu0 %v253, 64
    %v259 = vpop.permute.xlu0 %258
    %v261 = vsel %vm256, %v259, %v176
    %262 = vst.msk [vmem:[#allocation2] sm:$0xff] %vm87, %v261
    %264 = vrot.lane.b32.xlu0 %v251, 64
    %v265 = vpop.permute.xlu0 %264
    %v267 = vsel %vm256, %v265, %v177
    %268 = vst.msk [vmem:[#allocation3] sm:$0xff] %vm87, %v267
    %v269 = vsel %vm256, %v259, 0.0
    %s270 = scalar_lea.vmem %s5, 8
    %271 = vst.msk [vmem:[%s270] sm:$0xff] %vm87, %v269
    %v272 = vld [vmem:[#allocation2] sm:$0xff]
    %v273 = vld [vmem:[#allocation3] sm:$0xff]
    %s274 = scalar_lea.vmem %s0, 32
    %v275 = vld [vmem:[%s274] sm:$0xff]
    %v276 = vld [vmem:[%s274 + $0x8] sm:$0xff]
    %v277 = vpack.c.bf16 %v272, %v272
    %v279 = vsel %vm87, %v277, 0
    %281 = vmatprep.subr.bf16.mxu0 %v72
    %282 = vmatpush1.bf16.msra.mxu0 %v71
    %283 = vmatprep.subr.bf16.mxu0 %v74
    %284 = vmatpush1.bf16.msra.mxu0 %v73
    %285 = vmatprep.subr.bf16.mxu0 %v76
    %286 = vmatpush1.bf16.msra.mxu0 %v75
    %287 = vmatprep.subr.bf16.mxu0 %v78
    %288 = vmatpush1.bf16.msra.mxu0 %v77
    %289 = vmatprep.subr.bf16.mxu0 0
    %290 = vmatpush1.bf16.msra.mxu0 0
    %291 = vmatprep.subr.bf16.mxu0 0
    %292 = vmatpush1.bf16.msra.mxu0 0
    %293 = vmatprep.subr.bf16.mxu0 0
    %294 = vmatpush1.bf16.msra.mxu0 0
    %295 = vmatprep.subr.bf16.mxu0 0
    %296 = vmatpush1.bf16.msra.mxu0 0
    %297 = vmatprep.subr.bf16.mxu0 0
    %298 = vmatpush1.bf16.msra.mxu0 0
    %299 = vmatprep.subr.bf16.mxu0 0
    %300 = vmatpush1.bf16.msra.mxu0 0
    %301 = vmatprep.subr.bf16.mxu0 0
    %302 = vmatpush1.bf16.msra.mxu0 0
    %303 = vmatprep.subr.bf16.mxu0 0
    %304 = vmatpush1.bf16.msra.mxu0 0
    %305 = vmatprep.subr.bf16.mxu0 0
    %306 = vmatpush1.bf16.msra.mxu0 0
    %307 = vmatprep.subr.bf16.mxu0 0
    %308 = vmatpush1.bf16.msra.mxu0 0
    %309 = vmatprep.subr.bf16.mxu0 0
    %310 = vmatpush1.bf16.msra.mxu0 0
    %311 = vmatprep.subr.bf16.mxu0 0
    %312 = vmatpush1.bf16.msra.mxu0 0
    %313 = vmatprep.mubr.bf16.mxu0 0
    %314 = vmatmul.mubr.bf16.gmra.mrb[0].mxu0 %v279
    %v315 = vpop.f32.mrb[0].mxu0
    %v316 = vadd.f32 0.0, %v315
    %v317 = vpop.f32.mrb[0].mxu0
    %v318 = vadd.f32 0.0, %v317
    %v319 = vpop.f32.mrb[0].mxu0
    %v320 = vpop.f32.mrb[0].mxu0
    %321 = vdwg.mxu0
    %v322 = vadd.f32 %v275, %v316
    %v323 = vadd.f32 %v276, %v318
    %v324 = vxor.u32 %v322, 2147483648
    %v325 = vmul.f32 %v324, 1.442695
    %v326 = vpow.pop %v325
    %v327 = vadd.f32 %v326, 1.0
    %v328 = vrcp.pop %v327
    %v329 = vmul.f32 1.0, %v328
    %v330 = vtanh.pop %v323
    %v331 = vxor.u32 %v323, 2147483648
    %v332 = vmul.f32 %v331, 1.442695
    %v333 = vpow.pop %v332
    %v334 = vadd.f32 %v333, 1.0
    %v335 = vrcp.pop %v334
    %v336 = vmul.f32 1.0, %v335
    %338 = vrot.lane.b32.xlu0 %v273, 64
    %v339 = vpop.permute.xlu0 %338
    %v341 = vmul.f32 %v329, %v339
    %v342 = vmul.f32 %v329, %v330
    %344 = vrot.lane.b32.xlu0 %v342, 64
    %v345 = vpop.permute.xlu0 %344
    %v347 = vadd.f32 %v341, %v345
    %v348 = vtanh.pop %v347
    %v349 = vmul.f32 %v336, %v348
    %s350 = scalar_lea.vmem %s1, 16
    %v351 = vld [vmem:[%s350] sm:$0xff]
    %vm352 = vcmp.gt.f32.partialorder %v351, 0.5
    %354 = vrot.lane.b32.xlu0 %v349, 64
    %v355 = vpop.permute.xlu0 %354
    %v357 = vsel %vm352, %v355, %v272
    %358 = vst.msk [vmem:[#allocation2] sm:$0xff] %vm87, %v357
    %360 = vrot.lane.b32.xlu0 %v347, 64
    %v361 = vpop.permute.xlu0 %360
    %v363 = vsel %vm352, %v361, %v273
    %364 = vst.msk [vmem:[#allocation3] sm:$0xff] %vm87, %v363
    %v365 = vsel %vm352, %v355, 0.0
    %s366 = scalar_lea.vmem %s5, 16
    %367 = vst.msk [vmem:[%s366] sm:$0xff] %vm87, %v365
    %v368 = vld [vmem:[#allocation2] sm:$0xff]
    %v369 = vld [vmem:[#allocation3] sm:$0xff]
    %s370 = scalar_lea.vmem %s0, 48
    %v371 = vld [vmem:[%s370] sm:$0xff]
    %v372 = vld [vmem:[%s370 + $0x8] sm:$0xff]
    %v373 = vpack.c.bf16 %v368, %v368
    %v375 = vsel %vm87, %v373, 0
    %377 = vmatprep.subr.bf16.mxu0 %v72
    %378 = vmatpush1.bf16.msra.mxu0 %v71
    %379 = vmatprep.subr.bf16.mxu0 %v74
    %380 = vmatpush1.bf16.msra.mxu0 %v73
    %381 = vmatprep.subr.bf16.mxu0 %v76
    %382 = vmatpush1.bf16.msra.mxu0 %v75
    %383 = vmatprep.subr.bf16.mxu0 %v78
    %384 = vmatpush1.bf16.msra.mxu0 %v77
    %385 = vmatprep.subr.bf16.mxu0 0
    %386 = vmatpush1.bf16.msra.mxu0 0
    %387 = vmatprep.subr.bf16.mxu0 0
    %388 = vmatpush1.bf16.msra.mxu0 0
    %389 = vmatprep.subr.bf16.mxu0 0
    %390 = vmatpush1.bf16.msra.mxu0 0
    %391 = vmatprep.subr.bf16.mxu0 0
    %392 = vmatpush1.bf16.msra.mxu0 0
    %393 = vmatprep.subr.bf16.mxu0 0
    %394 = vmatpush1.bf16.msra.mxu0 0
    %395 = vmatprep.subr.bf16.mxu0 0
    %396 = vmatpush1.bf16.msra.mxu0 0
    %397 = vmatprep.subr.bf16.mxu0 0
    %398 = vmatpush1.bf16.msra.mxu0 0
    %399 = vmatprep.subr.bf16.mxu0 0
    %400 = vmatpush1.bf16.msra.mxu0 0
    %401 = vmatprep.subr.bf16.mxu0 0
    %402 = vmatpush1.bf16.msra.mxu0 0
    %403 = vmatprep.subr.bf16.mxu0 0
    %404 = vmatpush1.bf16.msra.mxu0 0
    %405 = vmatprep.subr.bf16.mxu0 0
    %406 = vmatpush1.bf16.msra.mxu0 0
    %407 = vmatprep.subr.bf16.mxu0 0
    %408 = vmatpush1.bf16.msra.mxu0 0
    %409 = vmatprep.mubr.bf16.mxu0 0
    %410 = vmatmul.mubr.bf16.gmra.mrb[0].mxu0 %v375
    %v411 = vpop.f32.mrb[0].mxu0
    %v412 = vadd.f32 0.0, %v411
    %v413 = vpop.f32.mrb[0].mxu0
    %v414 = vadd.f32 0.0, %v413
    %v415 = vpop.f32.mrb[0].mxu0
    %v416 = vpop.f32.mrb[0].mxu0
    %417 = vdwg.mxu0
    %v418 = vadd.f32 %v371, %v412
    %v419 = vadd.f32 %v372, %v414
    %v420 = vxor.u32 %v418, 2147483648
    %v421 = vmul.f32 %v420, 1.442695
    %v422 = vpow.pop %v421
    %v423 = vadd.f32 %v422, 1.0
    %v424 = vrcp.pop %v423
    %v425 = vmul.f32 1.0, %v424
    %v426 = vtanh.pop %v419
    %v427 = vxor.u32 %v419, 2147483648
    %v428 = vmul.f32 %v427, 1.442695
    %v429 = vpow.pop %v428
    %v430 = vadd.f32 %v429, 1.0
    %v431 = vrcp.pop %v430
    %v432 = vmul.f32 1.0, %v431
    %434 = vrot.lane.b32.xlu0 %v369, 64
    %v435 = vpop.permute.xlu0 %434
    %v437 = vmul.f32 %v425, %v435
    %v438 = vmul.f32 %v425, %v426
    %440 = vrot.lane.b32.xlu0 %v438, 64
    %v441 = vpop.permute.xlu0 %440
    %v443 = vadd.f32 %v437, %v441
    %v444 = vtanh.pop %v443
    %v445 = vmul.f32 %v432, %v444
    %s446 = scalar_lea.vmem %s1, 24
    %v447 = vld [vmem:[%s446] sm:$0xff]
    %vm448 = vcmp.gt.f32.partialorder %v447, 0.5
    %450 = vrot.lane.b32.xlu0 %v445, 64
    %v451 = vpop.permute.xlu0 %450
    %v453 = vsel %vm448, %v451, %v368
    %454 = vst.msk [vmem:[#allocation2] sm:$0xff] %vm87, %v453
    %456 = vrot.lane.b32.xlu0 %v443, 64
    %v457 = vpop.permute.xlu0 %456
    %v459 = vsel %vm448, %v457, %v369
    %460 = vst.msk [vmem:[#allocation3] sm:$0xff] %vm87, %v459
    %v461 = vsel %vm448, %v451, 0.0
    %s462 = scalar_lea.vmem %s5, 24
    %463 = vst.msk [vmem:[%s462] sm:$0xff] %vm87, %v461
    %v464 = vld [vmem:[#allocation2] sm:$0xff]
    %v465 = vld [vmem:[#allocation3] sm:$0xff]
    %s466 = scalar_lea.vmem %s0, 64
    %v467 = vld [vmem:[%s466] sm:$0xff]
    %v468 = vld [vmem:[%s466 + $0x8] sm:$0xff]
    %v469 = vpack.c.bf16 %v464, %v464
    %v471 = vsel %vm87, %v469, 0
    %473 = vmatprep.subr.bf16.mxu0 %v72
    %474 = vmatpush1.bf16.msra.mxu0 %v71
    %475 = vmatprep.subr.bf16.mxu0 %v74
    %476 = vmatpush1.bf16.msra.mxu0 %v73
    %477 = vmatprep.subr.bf16.mxu0 %v76
    %478 = vmatpush1.bf16.msra.mxu0 %v75
    %479 = vmatprep.subr.bf16.mxu0 %v78
    %480 = vmatpush1.bf16.msra.mxu0 %v77
    %481 = vmatprep.subr.bf16.mxu0 0
    %482 = vmatpush1.bf16.msra.mxu0 0
    %483 = vmatprep.subr.bf16.mxu0 0
    %484 = vmatpush1.bf16.msra.mxu0 0
    %485 = vmatprep.subr.bf16.mxu0 0
    %486 = vmatpush1.bf16.msra.mxu0 0
    %487 = vmatprep.subr.bf16.mxu0 0
    %488 = vmatpush1.bf16.msra.mxu0 0
    %489 = vmatprep.subr.bf16.mxu0 0
    %490 = vmatpush1.bf16.msra.mxu0 0
    %491 = vmatprep.subr.bf16.mxu0 0
    %492 = vmatpush1.bf16.msra.mxu0 0
    %493 = vmatprep.subr.bf16.mxu0 0
    %494 = vmatpush1.bf16.msra.mxu0 0
    %495 = vmatprep.subr.bf16.mxu0 0
    %496 = vmatpush1.bf16.msra.mxu0 0
    %497 = vmatprep.subr.bf16.mxu0 0
    %498 = vmatpush1.bf16.msra.mxu0 0
    %499 = vmatprep.subr.bf16.mxu0 0
    %500 = vmatpush1.bf16.msra.mxu0 0
    %501 = vmatprep.subr.bf16.mxu0 0
    %502 = vmatpush1.bf16.msra.mxu0 0
    %503 = vmatprep.subr.bf16.mxu0 0
    %504 = vmatpush1.bf16.msra.mxu0 0
    %505 = vmatprep.mubr.bf16.mxu0 0
    %506 = vmatmul.mubr.bf16.gmra.mrb[0].mxu0 %v471
    %v507 = vpop.f32.mrb[0].mxu0
    %v508 = vadd.f32 0.0, %v507
    %v509 = vpop.f32.mrb[0].mxu0
    %v510 = vadd.f32 0.0, %v509
    %v511 = vpop.f32.mrb[0].mxu0
    %v512 = vpop.f32.mrb[0].mxu0
    %513 = vdwg.mxu0
    %v514 = vadd.f32 %v467, %v508
    %v515 = vadd.f32 %v468, %v510
    %v516 = vxor.u32 %v514, 2147483648
    %v517 = vmul.f32 %v516, 1.442695
    %v518 = vpow.pop %v517
    %v519 = vadd.f32 %v518, 1.0
    %v520 = vrcp.pop %v519
    %v521 = vmul.f32 1.0, %v520
    %v522 = vtanh.pop %v515
    %v523 = vxor.u32 %v515, 2147483648
    %v524 = vmul.f32 %v523, 1.442695
    %v525 = vpow.pop %v524
    %v526 = vadd.f32 %v525, 1.0
    %v527 = vrcp.pop %v526
    %v528 = vmul.f32 1.0, %v527
    %530 = vrot.lane.b32.xlu0 %v465, 64
    %v531 = vpop.permute.xlu0 %530
    %v533 = vmul.f32 %v521, %v531
    %v534 = vmul.f32 %v521, %v522
    %536 = vrot.lane.b32.xlu0 %v534, 64
    %v537 = vpop.permute.xlu0 %536
    %v539 = vadd.f32 %v533, %v537
    %v540 = vtanh.pop %v539
    %v541 = vmul.f32 %v528, %v540
    %s542 = scalar_lea.vmem %s1, 32
    %v543 = vld [vmem:[%s542] sm:$0xff]
    %vm544 = vcmp.gt.f32.partialorder %v543, 0.5
    %546 = vrot.lane.b32.xlu0 %v541, 64
    %v547 = vpop.permute.xlu0 %546
    %v549 = vsel %vm544, %v547, %v464
    %550 = vst.msk [vmem:[#allocation2] sm:$0xff] %vm87, %v549
    %552 = vrot.lane.b32.xlu0 %v539, 64
    %v553 = vpop.permute.xlu0 %552
    %v555 = vsel %vm544, %v553, %v465
    %556 = vst.msk [vmem:[#allocation3] sm:$0xff] %vm87, %v555
    %v557 = vsel %vm544, %v547, 0.0
    %s558 = scalar_lea.vmem %s5, 32
    %559 = vst.msk [vmem:[%s558] sm:$0xff] %vm87, %v557
    %v560 = vld [vmem:[#allocation2] sm:$0xff]
    %v561 = vld [vmem:[#allocation3] sm:$0xff]
    %s562 = scalar_lea.vmem %s0, 80
    %v563 = vld [vmem:[%s562] sm:$0xff]
    %v564 = vld [vmem:[%s562 + $0x8] sm:$0xff]
    %v565 = vpack.c.bf16 %v560, %v560
    %v567 = vsel %vm87, %v565, 0
    %569 = vmatprep.subr.bf16.mxu0 %v72
    %570 = vmatpush1.bf16.msra.mxu0 %v71
    %571 = vmatprep.subr.bf16.mxu0 %v74
    %572 = vmatpush1.bf16.msra.mxu0 %v73
    %573 = vmatprep.subr.bf16.mxu0 %v76
    %574 = vmatpush1.bf16.msra.mxu0 %v75
    %575 = vmatprep.subr.bf16.mxu0 %v78
    %576 = vmatpush1.bf16.msra.mxu0 %v77
    %577 = vmatprep.subr.bf16.mxu0 0
    %578 = vmatpush1.bf16.msra.mxu0 0
    %579 = vmatprep.subr.bf16.mxu0 0
    %580 = vmatpush1.bf16.msra.mxu0 0
    %581 = vmatprep.subr.bf16.mxu0 0
    %582 = vmatpush1.bf16.msra.mxu0 0
    %583 = vmatprep.subr.bf16.mxu0 0
    %584 = vmatpush1.bf16.msra.mxu0 0
    %585 = vmatprep.subr.bf16.mxu0 0
    %586 = vmatpush1.bf16.msra.mxu0 0
    %587 = vmatprep.subr.bf16.mxu0 0
    %588 = vmatpush1.bf16.msra.mxu0 0
    %589 = vmatprep.subr.bf16.mxu0 0
    %590 = vmatpush1.bf16.msra.mxu0 0
    %591 = vmatprep.subr.bf16.mxu0 0
    %592 = vmatpush1.bf16.msra.mxu0 0
    %593 = vmatprep.subr.bf16.mxu0 0
    %594 = vmatpush1.bf16.msra.mxu0 0
    %595 = vmatprep.subr.bf16.mxu0 0
    %596 = vmatpush1.bf16.msra.mxu0 0
    %597 = vmatprep.subr.bf16.mxu0 0
    %598 = vmatpush1.bf16.msra.mxu0 0
    %599 = vmatprep.subr.bf16.mxu0 0
    %600 = vmatpush1.bf16.msra.mxu0 0
    %601 = vmatprep.mubr.bf16.mxu0 0
    %602 = vmatmul.mubr.bf16.gmra.mrb[0].mxu0 %v567
    %v603 = vpop.f32.mrb[0].mxu0
    %v604 = vadd.f32 0.0, %v603
    %v605 = vpop.f32.mrb[0].mxu0
    %v606 = vadd.f32 0.0, %v605
    %v607 = vpop.f32.mrb[0].mxu0
    %v608 = vpop.f32.mrb[0].mxu0
    %609 = vdwg.mxu0
    %v610 = vadd.f32 %v563, %v604
    %v611 = vadd.f32 %v564, %v606
    %v612 = vxor.u32 %v610, 2147483648
    %v613 = vmul.f32 %v612, 1.442695
    %v614 = vpow.pop %v613
    %v615 = vadd.f32 %v614, 1.0
    %v616 = vrcp.pop %v615
    %v617 = vmul.f32 1.0, %v616
    %v618 = vtanh.pop %v611
    %v619 = vxor.u32 %v611, 2147483648
    %v620 = vmul.f32 %v619, 1.442695
    %v621 = vpow.pop %v620
    %v622 = vadd.f32 %v621, 1.0
    %v623 = vrcp.pop %v622
    %v624 = vmul.f32 1.0, %v623
    %626 = vrot.lane.b32.xlu0 %v561, 64
    %v627 = vpop.permute.xlu0 %626
    %v629 = vmul.f32 %v617, %v627
    %v630 = vmul.f32 %v617, %v618
    %632 = vrot.lane.b32.xlu0 %v630, 64
    %v633 = vpop.permute.xlu0 %632
    %v635 = vadd.f32 %v629, %v633
    %v636 = vtanh.pop %v635
    %v637 = vmul.f32 %v624, %v636
    %s638 = scalar_lea.vmem %s1, 40
    %v639 = vld [vmem:[%s638] sm:$0xff]
    %vm640 = vcmp.gt.f32.partialorder %v639, 0.5
    %642 = vrot.lane.b32.xlu0 %v637, 64
    %v643 = vpop.permute.xlu0 %642
    %v645 = vsel %vm640, %v643, %v560
    %646 = vst.msk [vmem:[#allocation2] sm:$0xff] %vm87, %v645
    %648 = vrot.lane.b32.xlu0 %v635, 64
    %v649 = vpop.permute.xlu0 %648
    %v651 = vsel %vm640, %v649, %v561
    %652 = vst.msk [vmem:[#allocation3] sm:$0xff] %vm87, %v651
    %v653 = vsel %vm640, %v643, 0.0
    %s654 = scalar_lea.vmem %s5, 40
    %655 = vst.msk [vmem:[%s654] sm:$0xff] %vm87, %v653
    %v656 = vld [vmem:[#allocation2] sm:$0xff]
    %v657 = vld [vmem:[#allocation3] sm:$0xff]
    %s658 = scalar_lea.vmem %s0, 96
    %v659 = vld [vmem:[%s658] sm:$0xff]
    %v660 = vld [vmem:[%s658 + $0x8] sm:$0xff]
    %v661 = vpack.c.bf16 %v656, %v656
    %v663 = vsel %vm87, %v661, 0
    %665 = vmatprep.subr.bf16.mxu0 %v72
    %666 = vmatpush1.bf16.msra.mxu0 %v71
    %667 = vmatprep.subr.bf16.mxu0 %v74
    %668 = vmatpush1.bf16.msra.mxu0 %v73
    %669 = vmatprep.subr.bf16.mxu0 %v76
    %670 = vmatpush1.bf16.msra.mxu0 %v75
    %671 = vmatprep.subr.bf16.mxu0 %v78
    %672 = vmatpush1.bf16.msra.mxu0 %v77
    %673 = vmatprep.subr.bf16.mxu0 0
    %674 = vmatpush1.bf16.msra.mxu0 0
    %675 = vmatprep.subr.bf16.mxu0 0
    %676 = vmatpush1.bf16.msra.mxu0 0
    %677 = vmatprep.subr.bf16.mxu0 0
    %678 = vmatpush1.bf16.msra.mxu0 0
    %679 = vmatprep.subr.bf16.mxu0 0
    %680 = vmatpush1.bf16.msra.mxu0 0
    %681 = vmatprep.subr.bf16.mxu0 0
    %682 = vmatpush1.bf16.msra.mxu0 0
    %683 = vmatprep.subr.bf16.mxu0 0
    %684 = vmatpush1.bf16.msra.mxu0 0
    %685 = vmatprep.subr.bf16.mxu0 0
    %686 = vmatpush1.bf16.msra.mxu0 0
    %687 = vmatprep.subr.bf16.mxu0 0
    %688 = vmatpush1.bf16.msra.mxu0 0
    %689 = vmatprep.subr.bf16.mxu0 0
    %690 = vmatpush1.bf16.msra.mxu0 0
    %691 = vmatprep.subr.bf16.mxu0 0
    %692 = vmatpush1.bf16.msra.mxu0 0
    %693 = vmatprep.subr.bf16.mxu0 0
    %694 = vmatpush1.bf16.msra.mxu0 0
    %695 = vmatprep.subr.bf16.mxu0 0
    %696 = vmatpush1.bf16.msra.mxu0 0
    %697 = vmatprep.mubr.bf16.mxu0 0
    %698 = vmatmul.mubr.bf16.gmra.mrb[0].mxu0 %v663
    %v699 = vpop.f32.mrb[0].mxu0
    %v700 = vadd.f32 0.0, %v699
    %v701 = vpop.f32.mrb[0].mxu0
    %v702 = vadd.f32 0.0, %v701
    %v703 = vpop.f32.mrb[0].mxu0
    %v704 = vpop.f32.mrb[0].mxu0
    %705 = vdwg.mxu0
    %v706 = vadd.f32 %v659, %v700
    %v707 = vadd.f32 %v660, %v702
    %v708 = vxor.u32 %v706, 2147483648
    %v709 = vmul.f32 %v708, 1.442695
    %v710 = vpow.pop %v709
    %v711 = vadd.f32 %v710, 1.0
    %v712 = vrcp.pop %v711
    %v713 = vmul.f32 1.0, %v712
    %v714 = vtanh.pop %v707
    %v715 = vxor.u32 %v707, 2147483648
    %v716 = vmul.f32 %v715, 1.442695
    %v717 = vpow.pop %v716
    %v718 = vadd.f32 %v717, 1.0
    %v719 = vrcp.pop %v718
    %v720 = vmul.f32 1.0, %v719
    %722 = vrot.lane.b32.xlu0 %v657, 64
    %v723 = vpop.permute.xlu0 %722
    %v725 = vmul.f32 %v713, %v723
    %v726 = vmul.f32 %v713, %v714
    %728 = vrot.lane.b32.xlu0 %v726, 64
    %v729 = vpop.permute.xlu0 %728
    %v731 = vadd.f32 %v725, %v729
    %v732 = vtanh.pop %v731
    %v733 = vmul.f32 %v720, %v732
    %s734 = scalar_lea.vmem %s1, 48
    %v735 = vld [vmem:[%s734] sm:$0xff]
    %vm736 = vcmp.gt.f32.partialorder %v735, 0.5
    %738 = vrot.lane.b32.xlu0 %v733, 64
    %v739 = vpop.permute.xlu0 %738
    %v741 = vsel %vm736, %v739, %v656
    %742 = vst.msk [vmem:[#allocation2] sm:$0xff] %vm87, %v741
    %744 = vrot.lane.b32.xlu0 %v731, 64
    %v745 = vpop.permute.xlu0 %744
    %v747 = vsel %vm736, %v745, %v657
    %748 = vst.msk [vmem:[#allocation3] sm:$0xff] %vm87, %v747
    %v749 = vsel %vm736, %v739, 0.0
    %s750 = scalar_lea.vmem %s5, 48
    %751 = vst.msk [vmem:[%s750] sm:$0xff] %vm87, %v749
    %v752 = vld [vmem:[#allocation2] sm:$0xff]
    %v753 = vld [vmem:[#allocation3] sm:$0xff]
    %s754 = scalar_lea.vmem %s0, 112
    %v755 = vld [vmem:[%s754] sm:$0xff]
    %v756 = vld [vmem:[%s754 + $0x8] sm:$0xff]
    %v757 = vpack.c.bf16 %v752, %v752
    %v759 = vsel %vm87, %v757, 0
    %761 = vmatprep.subr.bf16.mxu0 %v72
    %762 = vmatpush1.bf16.msra.mxu0 %v71
    %763 = vmatprep.subr.bf16.mxu0 %v74
    %764 = vmatpush1.bf16.msra.mxu0 %v73
    %765 = vmatprep.subr.bf16.mxu0 %v76
    %766 = vmatpush1.bf16.msra.mxu0 %v75
    %767 = vmatprep.subr.bf16.mxu0 %v78
    %768 = vmatpush1.bf16.msra.mxu0 %v77
    %769 = vmatprep.subr.bf16.mxu0 0
    %770 = vmatpush1.bf16.msra.mxu0 0
    %771 = vmatprep.subr.bf16.mxu0 0
    %772 = vmatpush1.bf16.msra.mxu0 0
    %773 = vmatprep.subr.bf16.mxu0 0
    %774 = vmatpush1.bf16.msra.mxu0 0
    %775 = vmatprep.subr.bf16.mxu0 0
    %776 = vmatpush1.bf16.msra.mxu0 0
    %777 = vmatprep.subr.bf16.mxu0 0
    %778 = vmatpush1.bf16.msra.mxu0 0
    %779 = vmatprep.subr.bf16.mxu0 0
    %780 = vmatpush1.bf16.msra.mxu0 0
    %781 = vmatprep.subr.bf16.mxu0 0
    %782 = vmatpush1.bf16.msra.mxu0 0
    %783 = vmatprep.subr.bf16.mxu0 0
    %784 = vmatpush1.bf16.msra.mxu0 0
    %785 = vmatprep.subr.bf16.mxu0 0
    %786 = vmatpush1.bf16.msra.mxu0 0
    %787 = vmatprep.subr.bf16.mxu0 0
    %788 = vmatpush1.bf16.msra.mxu0 0
    %789 = vmatprep.subr.bf16.mxu0 0
    %790 = vmatpush1.bf16.msra.mxu0 0
    %791 = vmatprep.subr.bf16.mxu0 0
    %792 = vmatpush1.bf16.msra.mxu0 0
    %793 = vmatprep.mubr.bf16.mxu0 0
    %794 = vmatmul.mubr.bf16.gmra.mrb[0].mxu0 %v759
    %v795 = vpop.f32.mrb[0].mxu0
    %v796 = vadd.f32 0.0, %v795
    %v797 = vpop.f32.mrb[0].mxu0
    %v798 = vadd.f32 0.0, %v797
    %v799 = vpop.f32.mrb[0].mxu0
    %v800 = vpop.f32.mrb[0].mxu0
    %801 = vdwg.mxu0
    %v802 = vadd.f32 %v755, %v796
    %v803 = vadd.f32 %v756, %v798
    %v804 = vxor.u32 %v802, 2147483648
    %v805 = vmul.f32 %v804, 1.442695
    %v806 = vpow.pop %v805
    %v807 = vadd.f32 %v806, 1.0
    %v808 = vrcp.pop %v807
    %v809 = vmul.f32 1.0, %v808
    %v810 = vtanh.pop %v803
    %v811 = vxor.u32 %v803, 2147483648
    %v812 = vmul.f32 %v811, 1.442695
    %v813 = vpow.pop %v812
    %v814 = vadd.f32 %v813, 1.0
    %v815 = vrcp.pop %v814
    %v816 = vmul.f32 1.0, %v815
    %818 = vrot.lane.b32.xlu0 %v753, 64
    %v819 = vpop.permute.xlu0 %818
    %v821 = vmul.f32 %v809, %v819
    %v822 = vmul.f32 %v809, %v810
    %824 = vrot.lane.b32.xlu0 %v822, 64
    %v825 = vpop.permute.xlu0 %824
    %v827 = vadd.f32 %v821, %v825
    %v828 = vtanh.pop %v827
    %v829 = vmul.f32 %v816, %v828
    %s830 = scalar_lea.vmem %s1, 56
    %v831 = vld [vmem:[%s830] sm:$0xff]
    %vm832 = vcmp.gt.f32.partialorder %v831, 0.5
    %834 = vrot.lane.b32.xlu0 %v829, 64
    %v835 = vpop.permute.xlu0 %834
    %v837 = vsel %vm832, %v835, %v752
    %838 = vst.msk [vmem:[#allocation2] sm:$0xff] %vm87, %v837
    %840 = vrot.lane.b32.xlu0 %v827, 64
    %v841 = vpop.permute.xlu0 %840
    %v843 = vsel %vm832, %v841, %v753
    %844 = vst.msk [vmem:[#allocation3] sm:$0xff] %vm87, %v843
    %v845 = vsel %vm832, %v835, 0.0
    %s846 = scalar_lea.vmem %s5, 56
    %847 = vst.msk [vmem:[%s846] sm:$0xff] %vm87, %v845
    // Predicated region
    $region26: #{bicond_lstm_forward.3} parent=1 // pred_check
      %p848 = pneg %p25
    $region27: #{bicond_lstm_forward.3} parent=1 // pred_check_branch
      %850 = sbr.rel (%p848) target = $region29
    $region28: #{bicond_lstm_forward.3} parent=1 // pred_region
      %v851 = vld [vmem:[#allocation2] sm:$0xff]
      %852 = vst.msk [vmem:[%s6] sm:$0xff] %vm87, %v851
      %v853 = vld [vmem:[#allocation3] sm:$0xff]
      %854 = vst.msk [vmem:[#allocation4] sm:$0xff] %vm87, %v853
    $region29: #{bicond_lstm_forward.3} parent=1 // pred_fallthru
      _
    // Predicated region
    $region30: #{bicond_lstm_forward.3} parent=1 // pred_check
      _
    $region31: #{bicond_lstm_forward.3} parent=1 // pred_check_branch
      %856 = sbr.rel (0) target = $region33
    $region32: #{bicond_lstm_forward.3} parent=1 // pred_region
      _
    $region33: #{bicond_lstm_forward.3} parent=1 // pred_fallthru
      _
    // Predicated region
    $region34: #{bicond_lstm_forward.3} parent=1 // pred_check
      _
    $region35: #{bicond_lstm_forward.3} parent=1 // pred_check_branch
      %858 = sbr.rel (0) target = $region37
    $region36: #{bicond_lstm_forward.3} parent=1 // pred_region
      _
    $region37: #{bicond_lstm_forward.3} parent=1 // pred_fallthru
      _
    // Predicated region
    $region38: #{bicond_lstm_forward.3} parent=1 // pred_check
      _
    $region39: #{bicond_lstm_forward.3} parent=1 // pred_check_branch
      %860 = sbr.rel (0) target = $region41
    $region40: #{bicond_lstm_forward.3} parent=1 // pred_region
      %s862 = ssub.s32 128, 128
      %863 = vsyncadd [#allocation5], %s862
      %s865 = sshll.u32 [#allocation4], 4
      %s866 = int_to_ptr.vmem [resolvable:$true] %s865
      %868 = dma.vmem_to_hbm [thread:$0]  %s866, 128, %s7, [#allocation5]
    $region41: #{bicond_lstm_forward.3} parent=1 // pred_fallthru
      _
    // Predicated region
    $region42: #{bicond_lstm_forward.3} parent=1 // pred_check
      _
    $region43: #{bicond_lstm_forward.3} parent=1 // pred_check_branch
      %870 = sbr.rel (0) target = $region45
    $region44: #{bicond_lstm_forward.3} parent=1 // pred_region
      _
    $region45: #{bicond_lstm_forward.3} parent=1 // pred_fallthru
      _
    // Predicated region
    $region46: #{bicond_lstm_forward.3} parent=1 // pred_check
      _
    $region47: #{bicond_lstm_forward.3} parent=1 // pred_check_branch
      %872 = sbr.rel (0) target = $region49
    $region48: #{bicond_lstm_forward.3} parent=1 // pred_region
      _
    $region49: #{bicond_lstm_forward.3} parent=1 // pred_fallthru
      _
    // Predicated region
    $region50: #{bicond_lstm_forward.3} parent=1 // pred_check
      _
    $region51: #{bicond_lstm_forward.3} parent=1 // pred_check_branch
      %874 = sbr.rel (0) target = $region53
    $region52: #{bicond_lstm_forward.3} parent=1 // pred_region
      %875 = dma.done [#allocation5], 128
    $region53: #{bicond_lstm_forward.3} parent=1 // pred_fallthru
      _
    %876 = vsyncpa [#allocation5], 1

</llo_original>
